<compile_context>
chip_gen: v6e
topology: v6e:2x2x1
jax: 0.10.0
libtpu: 0.0.40
codegen_flags: <defaults>
</compile_context>

<pallas_src>
import functools

import jax
import jax.numpy as jnp
import numpy as np
from jax.experimental import pallas as pl
from jax.experimental.pallas import tpu as pltpu

EPS = 1e-5


# ---------------------------------------------------------------------------
# Kernel 1: front end  ->  x = relu(bn2(fc(relu(bn1(conv(bn0(stack)))))))  (B, D) bf16
# ---------------------------------------------------------------------------
def front_kernel(
    bn0_g_ref, bn0_b_ref,          # SMEM (2,)            bn0 affine params
    convw_ref, convb_ref,          # SMEM (C*2*3,), (C,)  conv1 weight (flat) / bias
    bn1_g_ref, bn1_b_ref,          # SMEM (C,), (C,)      bn1 affine params
    e1_ref, rel_ref,               # VMEM (B, D)          raw head rows (pre-tanh) / relation rows
    fcw_ref, fcb_ref,              # VMEM (C*D, D), (1,D) fc weight (transposed) / bias
    bn2_g_ref, bn2_b_ref,          # VMEM (1, D), (1, D)  bn2 affine params
    x_ref,                         # VMEM (B, D) bf16     output features
    h_ref,                         # VMEM scratch (B, C*D) f32  flattened conv features
):
    B, D = e1_ref.shape
    C = convb_ref.shape[0]
    f32 = jnp.float32

    e1 = jnp.tanh(e1_ref[...])                 # tanh(embedding)[heads], exact f32
    rel = rel_ref[...]

    # Training-mode batch-norm over a whole (B, D) channel slab; mean-centered (two-pass)
    # variance to avoid the E[y^2] - E[y]^2 cancellation issue.
    def bn_scalar(y, g, b):
        m = jnp.mean(y)
        d = y - m
        v = jnp.mean(d * d)
        return d * jax.lax.rsqrt(v + EPS) * g + b

    y0 = bn_scalar(e1, bn0_g_ref[0], bn0_b_ref[0])
    y1 = bn_scalar(rel, bn0_g_ref[1], bn0_b_ref[1])

    # Width-3 "same" conv taps: one-lane shifts with zero padding realized as tiny banded
    # (D, D) matmuls.  The MXU has full slack here (only the fc GEMM uses it otherwise).
    r_i = jax.lax.broadcasted_iota(jnp.int32, (D, D), 0)
    c_i = jax.lax.broadcasted_iota(jnp.int32, (D, D), 1)
    s_prev = (r_i == c_i - 1).astype(f32)      # y @ s_prev -> y[d-1], 0 at d = 0
    s_next = (r_i == c_i + 1).astype(f32)      # y @ s_next -> y[d+1], 0 at d = D-1

    def taps(y):
        left = jnp.dot(y, s_prev, preferred_element_type=f32)
        right = jnp.dot(y, s_next, preferred_element_type=f32)
        return (left, y, right)                # taps k = 0, 1, 2

    shifted = (taps(y0), taps(y1))

    # conv1 + bn1 + relu per output channel, written straight into the (B, C*D) scratch
    # (flat index c*D + d matches PyTorch's x.view(B, -1) flattening order).
    for c in range(C):
        h = jnp.zeros((B, D), f32) + convb_ref[c]
        for i in range(2):
            for k in range(3):
                h = h + convw_ref[c * 6 + i * 3 + k] * shifted[i][k]
        m = jnp.mean(h)
        d = h - m
        v = jnp.mean(d * d)
        h = d * jax.lax.rsqrt(v + EPS) * bn1_g_ref[c] + bn1_b_ref[c]
        h_ref[:, c * D:(c + 1) * D] = jnp.maximum(h, 0.0)

    # Single fused fc GEMM straight from the VMEM scratch: (B, C*D) @ (C*D, D)
    x = jnp.dot(h_ref[...], fcw_ref[...], preferred_element_type=f32) + fcb_ref[...]

    # bn2 (batch_size > 1 path): per-feature batch statistics, then relu; emit bf16 so the
    # scores GEMM runs bf16 x bf16 -> f32 on the MXU without a per-tile up-cast.
    m2 = jnp.mean(x, axis=0, keepdims=True)
    d2 = x - m2
    v2 = jnp.mean(d2 * d2, axis=0, keepdims=True)
    x = d2 * jax.lax.rsqrt(v2 + EPS) * bn2_g_ref[...] + bn2_b_ref[...]
    x_ref[...] = jnp.maximum(x, 0.0).astype(x_ref.dtype)


# ---------------------------------------------------------------------------
# Kernel 2: scores = x @ tanh(embedding).T   (tiled / streamed over entity axis N)
# ---------------------------------------------------------------------------
def scores_kernel(x_ref, emb_ref, out_ref, *, apply_tanh):
    e = emb_ref[...]
    if apply_tanh:
        # raw f32 embedding streamed from HBM; tanh on the EUP is free while HBM-bound
        e = jnp.tanh(e.astype(jnp.float32))
    e = e.astype(jnp.bfloat16)                 # bf16 x bf16 -> f32 accumulate on the MXU
    s = jax.lax.dot_general(x_ref[...], e, (((1,), (1,)), ((), ())),
                            preferred_element_type=jnp.float32)
    out_ref[...] = s.astype(out_ref.dtype)


def _choose_tile_n(n, requested):
    """Lane-dense (multiple-of-128) tile that keeps >= 4 grid steps when N allows,
    so the 'parallel' axis can shard across both v7x TensorCores."""
    t = max(128, min(requested, n))
    t = (t // 128) * 128
    while t > 128 and pl.cdiv(n, t) < 4:
        t = max(128, ((t // 2) // 128) * 128)
    return t


# ---------------------------------------------------------------------------
# Wrapper
# ---------------------------------------------------------------------------
def convtranse_forward(embedding, emb_rel, triplets, params, *,
                       tile_n=2048, emb_tanh_bf16=None, scores_dtype=jnp.float32):
    B = triplets.shape[0]
    N, D = embedding.shape
    conv_w = params["conv_w"]                                # (C, 2, 3)
    C = conv_w.shape[0]

    assert B > 1, "kernel implements the batch_size > 1 (bn2) branch"
    assert B % 8 == 0 and D % 128 == 0, "B must be a multiple of 8 and D a multiple of 128"

    # Row gathers (glue). e1 rows are gathered raw; tanh is applied in-kernel in f32
    # (tanh commutes with the row gather).
    e1_raw = jnp.take(embedding, triplets[:, 0], axis=0)     # (B, D)
    rel = jnp.take(emb_rel, triplets[:, 1], axis=0)          # (B, D)

    # fc weight transposed so fc_out = h_all @ fc_wT, with h_all flat index = c*D + d.
    fc_wT = params["fc_w"].T                                  # (C*D, D)

    smem = pl.BlockSpec(memory_space=pltpu.MemorySpace.SMEM)
    vmem = pl.BlockSpec(memory_space=pltpu.MemorySpace.VMEM)

    # ---- front end: tiny, grid-less ----
    # TODO(synk): tile over B (parallel grid axis, cross-tile batch-norm) if B/C grow to
    # production sizes; at demo sizes the resident footprint is tiny even on v7x's 64 MiB.
    x = pl.pallas_call(
        front_kernel,
        out_shape=jax.ShapeDtypeStruct((B, D), jnp.bfloat16),
        in_specs=[smem, smem, smem, smem, smem, smem,
                  vmem, vmem, vmem, vmem, vmem, vmem],
        out_specs=vmem,
        scratch_shapes=[pltpu.VMEM((B, C * D), jnp.float32)],
    )(
        params["bn0_g"], params["bn0_b"],
        conv_w.reshape(-1), params["conv_b"],
        params["bn1_g"], params["bn1_b"],
        e1_raw, rel, fc_wT,
        params["fc_b"].reshape(1, D),
        params["bn2_g"].reshape(1, D), params["bn2_b"].reshape(1, D),
    )

    # ---- scores: stream the entity table tile-by-tile over N (HBM-bound phase) ----
    # No wrapper-side tanh/cast/pad pass: the raw f32 table is streamed and tanh'd in-kernel.
    # TODO(synk): in a real KG training loop, pass emb_tanh_bf16=tanh(embedding).astype(bf16)
    # (precomputed once per step) to halve the per-call stream to 2 bytes/elem.
    if emb_tanh_bf16 is not None:
        emb_src, apply_tanh = emb_tanh_bf16, False
    else:
        emb_src, apply_tanh = embedding, True

    tn = _choose_tile_n(N, tile_n)
    grid = (pl.cdiv(N, tn),)                   # ragged last tile is clipped by the pipeline

    scores = pl.pallas_call(
        functools.partial(scores_kernel, apply_tanh=apply_tanh),
        out_shape=jax.ShapeDtypeStruct((B, N), scores_dtype),
        grid_spec=pltpu.PrefetchScalarGridSpec(
            num_scalar_prefetch=0,
            grid=grid,
            in_specs=[pl.BlockSpec((B, D), lambda n: (0, 0)),
                      # default double-buffering; deepen with pipeline_mode=pl.Buffered(3)
                      # only if xprof shows the emb DMA exposed after raising tile_n.
                      pl.BlockSpec((tn, D), lambda n: (n, 0))],
            out_specs=pl.BlockSpec((B, tn), lambda n: (0, n)),
        ),
        compiler_params=pltpu.CompilerParams(
            dimension_semantics=("parallel",),
        ),
    )(x, emb_src)

    return scores


# ---------------------------------------------------------------------------
# Pure-JAX reference mirroring the PyTorch forward (training-mode BN, p=0 dropout)
# ---------------------------------------------------------------------------
def convtranse_reference(embedding, emb_rel, triplets, params):
    e_all = jnp.tanh(embedding)
    e1 = e_all[triplets[:, 0]][:, None, :]
    rel = emb_rel[triplets[:, 1]][:, None, :]
    x = jnp.concatenate([e1, rel], axis=1)                   # (B, 2, D)

    def bn_c(x, g, b):                                       # channel axis = 1
        m = jnp.mean(x, axis=(0, 2), keepdims=True)
        v = jnp.mean((x - m) ** 2, axis=(0, 2), keepdims=True)
        return (x - m) * jax.lax.rsqrt(v + EPS) * g[None, :, None] + b[None, :, None]

    x = bn_c(x, params["bn0_g"], params["bn0_b"])
    x = jax.lax.conv_general_dilated(
        x, params["conv_w"], window_strides=(1,), padding=((1, 1),),
        dimension_numbers=("NCH", "OIH", "NCH"))
    x = x + params["conv_b"][None, :, None]
    x = bn_c(x, params["bn1_g"], params["bn1_b"])
    x = jnp.maximum(x, 0.0)
    B = x.shape[0]
    x = x.reshape(B, -1)
    x = x @ params["fc_w"].T + params["fc_b"]
    m = jnp.mean(x, axis=0, keepdims=True)
    v = jnp.mean((x - m) ** 2, axis=0, keepdims=True)
    x = (x - m) * jax.lax.rsqrt(v + EPS) * params["bn2_g"] + params["bn2_b"]
    x = jnp.maximum(x, 0.0)
    return x @ e_all.T


if __name__ == "__main__":
    N_ENT, N_REL, D, C, B = 2048, 16, 128, 8, 32
    key = jax.random.PRNGKey(0)
    ks = jax.random.split(key, 8)

    embedding = jax.random.normal(ks[0], (N_ENT, D), jnp.float32) * 0.5
    emb_rel = jax.random.normal(ks[1], (N_REL, D), jnp.float32) * 0.5
    params = {
        "conv_w": jax.random.normal(ks[2], (C, 2, 3), jnp.float32) * 0.3,
        "conv_b": jax.random.normal(ks[3], (C,), jnp.float32) * 0.1,
        "fc_w": jax.random.normal(ks[4], (D, C * D), jnp.float32) * 0.05,
        "fc_b": jax.random.normal(ks[5], (D,), jnp.float32) * 0.1,
        "bn0_g": jnp.ones((2,), jnp.float32), "bn0_b": jnp.zeros((2,), jnp.float32),
        "bn1_g": jnp.ones((C,), jnp.float32), "bn1_b": jnp.zeros((C,), jnp.float32),
        "bn2_g": jnp.ones((D,), jnp.float32), "bn2_b": jnp.zeros((D,), jnp.float32),
    }

    heads = jax.random.randint(ks[6], (B,), 0, N_ENT)
    rels = jax.random.randint(ks[7], (B,), 0, N_REL)
    tails = jnp.zeros((B,), jnp.int32)                      # unused by forward()
    triplets = jnp.stack([heads, rels, tails], axis=1).astype(jnp.int32)

    out = jax.block_until_ready(convtranse_forward(embedding, emb_rel, triplets, params))
    ref = jax.block_until_ready(convtranse_reference(embedding, emb_rel, triplets, params))
    np.testing.assert_allclose(np.asarray(out), np.asarray(ref), rtol=5e-2, atol=5e-2)
    print("KERNEL_OK")
</pallas_src>

<mosaic_0001>
module attributes {stable_mosaic.version = 11 : i64} {
  func.func @front_kernel(%arg0: memref<2xf32, #tpu.memory_space<smem>>, %arg1: memref<2xf32, #tpu.memory_space<smem>>, %arg2: memref<48xf32, #tpu.memory_space<smem>>, %arg3: memref<8xf32, #tpu.memory_space<smem>>, %arg4: memref<8xf32, #tpu.memory_space<smem>>, %arg5: memref<8xf32, #tpu.memory_space<smem>>, %arg6: memref<32x128xf32, #tpu.memory_space<vmem>>, %arg7: memref<32x128xf32, #tpu.memory_space<vmem>>, %arg8: memref<1024x128xf32, #tpu.memory_space<vmem>>, %arg9: memref<1x128xf32, #tpu.memory_space<vmem>>, %arg10: memref<1x128xf32, #tpu.memory_space<vmem>>, %arg11: memref<1x128xf32, #tpu.memory_space<vmem>>, %arg12: memref<32x128xbf16, #tpu.memory_space<vmem>>, %arg13: memref<32x1024xf32, #tpu.memory_space<vmem>>) attributes {dimension_semantics = [], scalar_prefetch = 0 : i64, scratch_operands = 1 : i64, tpu.core_type = #tpu.core_type<tc>} {
    %c0 = arith.constant 0 : index
    %c0_0 = arith.constant 0 : index
    %0 = vector.load %arg6[%c0, %c0_0] : memref<32x128xf32, #tpu.memory_space<vmem>>, vector<32x128xf32>
    %1 = math.tanh %0 : vector<32x128xf32>
    %c0_1 = arith.constant 0 : index
    %c0_2 = arith.constant 0 : index
    %2 = vector.load %arg7[%c0_1, %c0_2] : memref<32x128xf32, #tpu.memory_space<vmem>>, vector<32x128xf32>
    %c0_3 = arith.constant 0 : index
    %3 = memref.load %arg0[%c0_3] : memref<2xf32, #tpu.memory_space<smem>>
    %c0_4 = arith.constant 0 : index
    %4 = memref.load %arg1[%c0_4] : memref<2xf32, #tpu.memory_space<smem>>
    %5 = vector.shape_cast %1 : vector<32x128xf32> to vector<1x32x128xf32>
    %cst = arith.constant dense<0.000000e+00> : vector<1xf32>
    %6 = vector.multi_reduction <add>, %5, %cst [1, 2] : vector<1x32x128xf32> to vector<1xf32>
    %7 = vector.shape_cast %6 : vector<1xf32> to vector<1x1x1xf32>
    %8 = vector.extract %7[0, 0, 0] : f32 from vector<1x1x1xf32>
    %cst_5 = arith.constant 4.096000e+03 : f32
    %9 = arith.divf %8, %cst_5 : f32
    %10 = vector.broadcast %9 : f32 to vector<32x128xf32>
    %11 = arith.subf %1, %10 : vector<32x128xf32>
    %12 = arith.mulf %11, %11 : vector<32x128xf32>
    %13 = vector.shape_cast %12 : vector<32x128xf32> to vector<1x32x128xf32>
    %cst_6 = arith.constant dense<0.000000e+00> : vector<1xf32>
    %14 = vector.multi_reduction <add>, %13, %cst_6 [1, 2] : vector<1x32x128xf32> to vector<1xf32>
    %15 = vector.shape_cast %14 : vector<1xf32> to vector<1x1x1xf32>
    %16 = vector.extract %15[0, 0, 0] : f32 from vector<1x1x1xf32>
    %cst_7 = arith.constant 4.096000e+03 : f32
    %17 = arith.divf %16, %cst_7 : f32
    %cst_8 = arith.constant 9.99999974E-6 : f32
    %18 = arith.addf %17, %cst_8 : f32
    %19 = math.rsqrt %18 : f32
    %20 = vector.broadcast %19 : f32 to vector<32x128xf32>
    %21 = arith.mulf %11, %20 : vector<32x128xf32>
    %22 = vector.broadcast %3 : f32 to vector<32x128xf32>
    %23 = arith.mulf %21, %22 : vector<32x128xf32>
    %24 = vector.broadcast %4 : f32 to vector<32x128xf32>
    %25 = arith.addf %23, %24 : vector<32x128xf32>
    %c1 = arith.constant 1 : index
    %26 = memref.load %arg0[%c1] : memref<2xf32, #tpu.memory_space<smem>>
    %c1_9 = arith.constant 1 : index
    %27 = memref.load %arg1[%c1_9] : memref<2xf32, #tpu.memory_space<smem>>
    %28 = vector.shape_cast %2 : vector<32x128xf32> to vector<1x32x128xf32>
    %cst_10 = arith.constant dense<0.000000e+00> : vector<1xf32>
    %29 = vector.multi_reduction <add>, %28, %cst_10 [1, 2] : vector<1x32x128xf32> to vector<1xf32>
    %30 = vector.shape_cast %29 : vector<1xf32> to vector<1x1x1xf32>
    %31 = vector.extract %30[0, 0, 0] : f32 from vector<1x1x1xf32>
    %cst_11 = arith.constant 4.096000e+03 : f32
    %32 = arith.divf %31, %cst_11 : f32
    %33 = vector.broadcast %32 : f32 to vector<32x128xf32>
    %34 = arith.subf %2, %33 : vector<32x128xf32>
    %35 = arith.mulf %34, %34 : vector<32x128xf32>
    %36 = vector.shape_cast %35 : vector<32x128xf32> to vector<1x32x128xf32>
    %cst_12 = arith.constant dense<0.000000e+00> : vector<1xf32>
    %37 = vector.multi_reduction <add>, %36, %cst_12 [1, 2] : vector<1x32x128xf32> to vector<1xf32>
    %38 = vector.shape_cast %37 : vector<1xf32> to vector<1x1x1xf32>
    %39 = vector.extract %38[0, 0, 0] : f32 from vector<1x1x1xf32>
    %cst_13 = arith.constant 4.096000e+03 : f32
    %40 = arith.divf %39, %cst_13 : f32
    %cst_14 = arith.constant 9.99999974E-6 : f32
    %41 = arith.addf %40, %cst_14 : f32
    %42 = math.rsqrt %41 : f32
    %43 = vector.broadcast %42 : f32 to vector<32x128xf32>
    %44 = arith.mulf %34, %43 : vector<32x128xf32>
    %45 = vector.broadcast %26 : f32 to vector<32x128xf32>
    %46 = arith.mulf %44, %45 : vector<32x128xf32>
    %47 = vector.broadcast %27 : f32 to vector<32x128xf32>
    %48 = arith.addf %46, %47 : vector<32x128xf32>
    %49 = tpu.iota {dimensions = array<i32: 0>} : vector<128x128xi32>
    %50 = tpu.iota {dimensions = array<i32: 1>} : vector<128x128xi32>
    %c1_i32 = arith.constant 1 : i32
    %51 = vector.broadcast %c1_i32 : i32 to vector<128x128xi32>
    %52 = arith.subi %50, %51 : vector<128x128xi32>
    %53 = arith.cmpi eq, %49, %52 : vector<128x128xi32>
    %54 = arith.extui %53 : vector<128x128xi1> to vector<128x128xi32>
    %55 = arith.sitofp %54 : vector<128x128xi32> to vector<128x128xf32>
    %c1_i32_15 = arith.constant 1 : i32
    %56 = vector.broadcast %c1_i32_15 : i32 to vector<128x128xi32>
    %57 = arith.addi %50, %56 : vector<128x128xi32>
    %58 = arith.cmpi eq, %49, %57 : vector<128x128xi32>
    %59 = arith.extui %58 : vector<128x128xi1> to vector<128x128xi32>
    %60 = arith.sitofp %59 : vector<128x128xi32> to vector<128x128xf32>
    %cst_16 = arith.constant dense<0.000000e+00> : vector<32x128xf32>
    %61 = tpu.matmul %25, %55, %cst_16 {dimension_numbers = #tpu.dot_dimension_numbers<[1], [0], [0], [1], [0, 0, 1, 1], [], []>} : vector<32x128xf32>, vector<128x128xf32>, vector<32x128xf32> -> vector<32x128xf32>
    %cst_17 = arith.constant dense<0.000000e+00> : vector<32x128xf32>
    %62 = tpu.matmul %25, %60, %cst_17 {dimension_numbers = #tpu.dot_dimension_numbers<[1], [0], [0], [1], [0, 0, 1, 1], [], []>} : vector<32x128xf32>, vector<128x128xf32>, vector<32x128xf32> -> vector<32x128xf32>
    %cst_18 = arith.constant dense<0.000000e+00> : vector<32x128xf32>
    %63 = tpu.matmul %48, %55, %cst_18 {dimension_numbers = #tpu.dot_dimension_numbers<[1], [0], [0], [1], [0, 0, 1, 1], [], []>} : vector<32x128xf32>, vector<128x128xf32>, vector<32x128xf32> -> vector<32x128xf32>
    %cst_19 = arith.constant dense<0.000000e+00> : vector<32x128xf32>
    %64 = tpu.matmul %48, %60, %cst_19 {dimension_numbers = #tpu.dot_dimension_numbers<[1], [0], [0], [1], [0, 0, 1, 1], [], []>} : vector<32x128xf32>, vector<128x128xf32>, vector<32x128xf32> -> vector<32x128xf32>
    %cst_20 = arith.constant 0.000000e+00 : f32
    %65 = vector.broadcast %cst_20 : f32 to vector<32x128xf32>
    %c0_21 = arith.constant 0 : index
    %66 = memref.load %arg3[%c0_21] : memref<8xf32, #tpu.memory_space<smem>>
    %67 = vector.broadcast %66 : f32 to vector<32x128xf32>
    %68 = arith.addf %65, %67 : vector<32x128xf32>
    %c0_22 = arith.constant 0 : index
    %69 = memref.load %arg2[%c0_22] : memref<48xf32, #tpu.memory_space<smem>>
    %70 = vector.broadcast %69 : f32 to vector<32x128xf32>
    %71 = arith.mulf %70, %61 : vector<32x128xf32>
    %72 = arith.addf %68, %71 : vector<32x128xf32>
    %c1_23 = arith.constant 1 : index
    %73 = memref.load %arg2[%c1_23] : memref<48xf32, #tpu.memory_space<smem>>
    %74 = vector.broadcast %73 : f32 to vector<32x128xf32>
    %75 = arith.mulf %74, %25 : vector<32x128xf32>
    %76 = arith.addf %72, %75 : vector<32x128xf32>
    %c2 = arith.constant 2 : index
    %77 = memref.load %arg2[%c2] : memref<48xf32, #tpu.memory_space<smem>>
    %78 = vector.broadcast %77 : f32 to vector<32x128xf32>
    %79 = arith.mulf %78, %62 : vector<32x128xf32>
    %80 = arith.addf %76, %79 : vector<32x128xf32>
    %c3 = arith.constant 3 : index
    %81 = memref.load %arg2[%c3] : memref<48xf32, #tpu.memory_space<smem>>
    %82 = vector.broadcast %81 : f32 to vector<32x128xf32>
    %83 = arith.mulf %82, %63 : vector<32x128xf32>
    %84 = arith.addf %80, %83 : vector<32x128xf32>
    %c4 = arith.constant 4 : index
    %85 = memref.load %arg2[%c4] : memref<48xf32, #tpu.memory_space<smem>>
    %86 = vector.broadcast %85 : f32 to vector<32x128xf32>
    %87 = arith.mulf %86, %48 : vector<32x128xf32>
    %88 = arith.addf %84, %87 : vector<32x128xf32>
    %c5 = arith.constant 5 : index
    %89 = memref.load %arg2[%c5] : memref<48xf32, #tpu.memory_space<smem>>
    %90 = vector.broadcast %89 : f32 to vector<32x128xf32>
    %91 = arith.mulf %90, %64 : vector<32x128xf32>
    %92 = arith.addf %88, %91 : vector<32x128xf32>
    %93 = vector.shape_cast %92 : vector<32x128xf32> to vector<1x32x128xf32>
    %cst_24 = arith.constant dense<0.000000e+00> : vector<1xf32>
    %94 = vector.multi_reduction <add>, %93, %cst_24 [1, 2] : vector<1x32x128xf32> to vector<1xf32>
    %95 = vector.shape_cast %94 : vector<1xf32> to vector<1x1x1xf32>
    %96 = vector.extract %95[0, 0, 0] : f32 from vector<1x1x1xf32>
    %cst_25 = arith.constant 4.096000e+03 : f32
    %97 = arith.divf %96, %cst_25 : f32
    %98 = vector.broadcast %97 : f32 to vector<32x128xf32>
    %99 = arith.subf %92, %98 : vector<32x128xf32>
    %100 = arith.mulf %99, %99 : vector<32x128xf32>
    %101 = vector.shape_cast %100 : vector<32x128xf32> to vector<1x32x128xf32>
    %cst_26 = arith.constant dense<0.000000e+00> : vector<1xf32>
    %102 = vector.multi_reduction <add>, %101, %cst_26 [1, 2] : vector<1x32x128xf32> to vector<1xf32>
    %103 = vector.shape_cast %102 : vector<1xf32> to vector<1x1x1xf32>
    %104 = vector.extract %103[0, 0, 0] : f32 from vector<1x1x1xf32>
    %cst_27 = arith.constant 4.096000e+03 : f32
    %105 = arith.divf %104, %cst_27 : f32
    %cst_28 = arith.constant 9.99999974E-6 : f32
    %106 = arith.addf %105, %cst_28 : f32
    %107 = math.rsqrt %106 : f32
    %108 = vector.broadcast %107 : f32 to vector<32x128xf32>
    %109 = arith.mulf %99, %108 : vector<32x128xf32>
    %c0_29 = arith.constant 0 : index
    %110 = memref.load %arg4[%c0_29] : memref<8xf32, #tpu.memory_space<smem>>
    %111 = vector.broadcast %110 : f32 to vector<32x128xf32>
    %112 = arith.mulf %109, %111 : vector<32x128xf32>
    %c0_30 = arith.constant 0 : index
    %113 = memref.load %arg5[%c0_30] : memref<8xf32, #tpu.memory_space<smem>>
    %114 = vector.broadcast %113 : f32 to vector<32x128xf32>
    %115 = arith.addf %112, %114 : vector<32x128xf32>
    %cst_31 = arith.constant 0.000000e+00 : f32
    %116 = vector.broadcast %cst_31 : f32 to vector<32x128xf32>
    %117 = arith.maximumf %115, %116 : vector<32x128xf32>
    %c0_32 = arith.constant 0 : index
    %c0_33 = arith.constant 0 : index
    %118 = vector.load %arg13[%c0_32, %c0_33] : memref<32x1024xf32, #tpu.memory_space<vmem>>, vector<32x128xf32>
    tpu.vector_store %arg13[%c0_32, %c0_33], %117 {strides = array<i32>} : memref<32x1024xf32, #tpu.memory_space<vmem>>, vector<32x128xf32>,
    %cst_34 = arith.constant 0.000000e+00 : f32
    %119 = vector.broadcast %cst_34 : f32 to vector<32x128xf32>
    %c1_35 = arith.constant 1 : index
    %120 = memref.load %arg3[%c1_35] : memref<8xf32, #tpu.memory_space<smem>>
    %121 = vector.broadcast %120 : f32 to vector<32x128xf32>
    %122 = arith.addf %119, %121 : vector<32x128xf32>
    %c6 = arith.constant 6 : index
    %123 = memref.load %arg2[%c6] : memref<48xf32, #tpu.memory_space<smem>>
    %124 = vector.broadcast %123 : f32 to vector<32x128xf32>
    %125 = arith.mulf %124, %61 : vector<32x128xf32>
    %126 = arith.addf %122, %125 : vector<32x128xf32>
    %c7 = arith.constant 7 : index
    %127 = memref.load %arg2[%c7] : memref<48xf32, #tpu.memory_space<smem>>
    %128 = vector.broadcast %127 : f32 to vector<32x128xf32>
    %129 = arith.mulf %128, %25 : vector<32x128xf32>
    %130 = arith.addf %126, %129 : vector<32x128xf32>
    %c8 = arith.constant 8 : index
    %131 = memref.load %arg2[%c8] : memref<48xf32, #tpu.memory_space<smem>>
    %132 = vector.broadcast %131 : f32 to vector<32x128xf32>
    %133 = arith.mulf %132, %62 : vector<32x128xf32>
    %134 = arith.addf %130, %133 : vector<32x128xf32>
    %c9 = arith.constant 9 : index
    %135 = memref.load %arg2[%c9] : memref<48xf32, #tpu.memory_space<smem>>
    %136 = vector.broadcast %135 : f32 to vector<32x128xf32>
    %137 = arith.mulf %136, %63 : vector<32x128xf32>
    %138 = arith.addf %134, %137 : vector<32x128xf32>
    %c10 = arith.constant 10 : index
    %139 = memref.load %arg2[%c10] : memref<48xf32, #tpu.memory_space<smem>>
    %140 = vector.broadcast %139 : f32 to vector<32x128xf32>
    %141 = arith.mulf %140, %48 : vector<32x128xf32>
    %142 = arith.addf %138, %141 : vector<32x128xf32>
    %c11 = arith.constant 11 : index
    %143 = memref.load %arg2[%c11] : memref<48xf32, #tpu.memory_space<smem>>
    %144 = vector.broadcast %143 : f32 to vector<32x128xf32>
    %145 = arith.mulf %144, %64 : vector<32x128xf32>
    %146 = arith.addf %142, %145 : vector<32x128xf32>
    %147 = vector.shape_cast %146 : vector<32x128xf32> to vector<1x32x128xf32>
    %cst_36 = arith.constant dense<0.000000e+00> : vector<1xf32>
    %148 = vector.multi_reduction <add>, %147, %cst_36 [1, 2] : vector<1x32x128xf32> to vector<1xf32>
    %149 = vector.shape_cast %148 : vector<1xf32> to vector<1x1x1xf32>
    %150 = vector.extract %149[0, 0, 0] : f32 from vector<1x1x1xf32>
    %cst_37 = arith.constant 4.096000e+03 : f32
    %151 = arith.divf %150, %cst_37 : f32
    %152 = vector.broadcast %151 : f32 to vector<32x128xf32>
    %153 = arith.subf %146, %152 : vector<32x128xf32>
    %154 = arith.mulf %153, %153 : vector<32x128xf32>
    %155 = vector.shape_cast %154 : vector<32x128xf32> to vector<1x32x128xf32>
    %cst_38 = arith.constant dense<0.000000e+00> : vector<1xf32>
    %156 = vector.multi_reduction <add>, %155, %cst_38 [1, 2] : vector<1x32x128xf32> to vector<1xf32>
    %157 = vector.shape_cast %156 : vector<1xf32> to vector<1x1x1xf32>
    %158 = vector.extract %157[0, 0, 0] : f32 from vector<1x1x1xf32>
    %cst_39 = arith.constant 4.096000e+03 : f32
    %159 = arith.divf %158, %cst_39 : f32
    %cst_40 = arith.constant 9.99999974E-6 : f32
    %160 = arith.addf %159, %cst_40 : f32
    %161 = math.rsqrt %160 : f32
    %162 = vector.broadcast %161 : f32 to vector<32x128xf32>
    %163 = arith.mulf %153, %162 : vector<32x128xf32>
    %c1_41 = arith.constant 1 : index
    %164 = memref.load %arg4[%c1_41] : memref<8xf32, #tpu.memory_space<smem>>
    %165 = vector.broadcast %164 : f32 to vector<32x128xf32>
    %166 = arith.mulf %163, %165 : vector<32x128xf32>
    %c1_42 = arith.constant 1 : index
    %167 = memref.load %arg5[%c1_42] : memref<8xf32, #tpu.memory_space<smem>>
    %168 = vector.broadcast %167 : f32 to vector<32x128xf32>
    %169 = arith.addf %166, %168 : vector<32x128xf32>
    %cst_43 = arith.constant 0.000000e+00 : f32
    %170 = vector.broadcast %cst_43 : f32 to vector<32x128xf32>
    %171 = arith.maximumf %169, %170 : vector<32x128xf32>
    %c0_44 = arith.constant 0 : index
    %c128 = arith.constant 128 : index
    %172 = vector.load %arg13[%c0_44, %c128] : memref<32x1024xf32, #tpu.memory_space<vmem>>, vector<32x128xf32>
    tpu.vector_store %arg13[%c0_44, %c128], %171 {strides = array<i32>} : memref<32x1024xf32, #tpu.memory_space<vmem>>, vector<32x128xf32>,
    %cst_45 = arith.constant 0.000000e+00 : f32
    %173 = vector.broadcast %cst_45 : f32 to vector<32x128xf32>
    %c2_46 = arith.constant 2 : index
    %174 = memref.load %arg3[%c2_46] : memref<8xf32, #tpu.memory_space<smem>>
    %175 = vector.broadcast %174 : f32 to vector<32x128xf32>
    %176 = arith.addf %173, %175 : vector<32x128xf32>
    %c12 = arith.constant 12 : index
    %177 = memref.load %arg2[%c12] : memref<48xf32, #tpu.memory_space<smem>>
    %178 = vector.broadcast %177 : f32 to vector<32x128xf32>
    %179 = arith.mulf %178, %61 : vector<32x128xf32>
    %180 = arith.addf %176, %179 : vector<32x128xf32>
    %c13 = arith.constant 13 : index
    %181 = memref.load %arg2[%c13] : memref<48xf32, #tpu.memory_space<smem>>
    %182 = vector.broadcast %181 : f32 to vector<32x128xf32>
    %183 = arith.mulf %182, %25 : vector<32x128xf32>
    %184 = arith.addf %180, %183 : vector<32x128xf32>
    %c14 = arith.constant 14 : index
    %185 = memref.load %arg2[%c14] : memref<48xf32, #tpu.memory_space<smem>>
    %186 = vector.broadcast %185 : f32 to vector<32x128xf32>
    %187 = arith.mulf %186, %62 : vector<32x128xf32>
    %188 = arith.addf %184, %187 : vector<32x128xf32>
    %c15 = arith.constant 15 : index
    %189 = memref.load %arg2[%c15] : memref<48xf32, #tpu.memory_space<smem>>
    %190 = vector.broadcast %189 : f32 to vector<32x128xf32>
    %191 = arith.mulf %190, %63 : vector<32x128xf32>
    %192 = arith.addf %188, %191 : vector<32x128xf32>
    %c16 = arith.constant 16 : index
    %193 = memref.load %arg2[%c16] : memref<48xf32, #tpu.memory_space<smem>>
    %194 = vector.broadcast %193 : f32 to vector<32x128xf32>
    %195 = arith.mulf %194, %48 : vector<32x128xf32>
    %196 = arith.addf %192, %195 : vector<32x128xf32>
    %c17 = arith.constant 17 : index
    %197 = memref.load %arg2[%c17] : memref<48xf32, #tpu.memory_space<smem>>
    %198 = vector.broadcast %197 : f32 to vector<32x128xf32>
    %199 = arith.mulf %198, %64 : vector<32x128xf32>
    %200 = arith.addf %196, %199 : vector<32x128xf32>
    %201 = vector.shape_cast %200 : vector<32x128xf32> to vector<1x32x128xf32>
    %cst_47 = arith.constant dense<0.000000e+00> : vector<1xf32>
    %202 = vector.multi_reduction <add>, %201, %cst_47 [1, 2] : vector<1x32x128xf32> to vector<1xf32>
    %203 = vector.shape_cast %202 : vector<1xf32> to vector<1x1x1xf32>
    %204 = vector.extract %203[0, 0, 0] : f32 from vector<1x1x1xf32>
    %cst_48 = arith.constant 4.096000e+03 : f32
    %205 = arith.divf %204, %cst_48 : f32
    %206 = vector.broadcast %205 : f32 to vector<32x128xf32>
    %207 = arith.subf %200, %206 : vector<32x128xf32>
    %208 = arith.mulf %207, %207 : vector<32x128xf32>
    %209 = vector.shape_cast %208 : vector<32x128xf32> to vector<1x32x128xf32>
    %cst_49 = arith.constant dense<0.000000e+00> : vector<1xf32>
    %210 = vector.multi_reduction <add>, %209, %cst_49 [1, 2] : vector<1x32x128xf32> to vector<1xf32>
    %211 = vector.shape_cast %210 : vector<1xf32> to vector<1x1x1xf32>
    %212 = vector.extract %211[0, 0, 0] : f32 from vector<1x1x1xf32>
    %cst_50 = arith.constant 4.096000e+03 : f32
    %213 = arith.divf %212, %cst_50 : f32
    %cst_51 = arith.constant 9.99999974E-6 : f32
    %214 = arith.addf %213, %cst_51 : f32
    %215 = math.rsqrt %214 : f32
    %216 = vector.broadcast %215 : f32 to vector<32x128xf32>
    %217 = arith.mulf %207, %216 : vector<32x128xf32>
    %c2_52 = arith.constant 2 : index
    %218 = memref.load %arg4[%c2_52] : memref<8xf32, #tpu.memory_space<smem>>
    %219 = vector.broadcast %218 : f32 to vector<32x128xf32>
    %220 = arith.mulf %217, %219 : vector<32x128xf32>
    %c2_53 = arith.constant 2 : index
    %221 = memref.load %arg5[%c2_53] : memref<8xf32, #tpu.memory_space<smem>>
    %222 = vector.broadcast %221 : f32 to vector<32x128xf32>
    %223 = arith.addf %220, %222 : vector<32x128xf32>
    %cst_54 = arith.constant 0.000000e+00 : f32
    %224 = vector.broadcast %cst_54 : f32 to vector<32x128xf32>
    %225 = arith.maximumf %223, %224 : vector<32x128xf32>
    %c0_55 = arith.constant 0 : index
    %c256 = arith.constant 256 : index
    %226 = vector.load %arg13[%c0_55, %c256] : memref<32x1024xf32, #tpu.memory_space<vmem>>, vector<32x128xf32>
    tpu.vector_store %arg13[%c0_55, %c256], %225 {strides = array<i32>} : memref<32x1024xf32, #tpu.memory_space<vmem>>, vector<32x128xf32>,
    %cst_56 = arith.constant 0.000000e+00 : f32
    %227 = vector.broadcast %cst_56 : f32 to vector<32x128xf32>
    %c3_57 = arith.constant 3 : index
    %228 = memref.load %arg3[%c3_57] : memref<8xf32, #tpu.memory_space<smem>>
    %229 = vector.broadcast %228 : f32 to vector<32x128xf32>
    %230 = arith.addf %227, %229 : vector<32x128xf32>
    %c18 = arith.constant 18 : index
    %231 = memref.load %arg2[%c18] : memref<48xf32, #tpu.memory_space<smem>>
    %232 = vector.broadcast %231 : f32 to vector<32x128xf32>
    %233 = arith.mulf %232, %61 : vector<32x128xf32>
    %234 = arith.addf %230, %233 : vector<32x128xf32>
    %c19 = arith.constant 19 : index
    %235 = memref.load %arg2[%c19] : memref<48xf32, #tpu.memory_space<smem>>
    %236 = vector.broadcast %235 : f32 to vector<32x128xf32>
    %237 = arith.mulf %236, %25 : vector<32x128xf32>
    %238 = arith.addf %234, %237 : vector<32x128xf32>
    %c20 = arith.constant 20 : index
    %239 = memref.load %arg2[%c20] : memref<48xf32, #tpu.memory_space<smem>>
    %240 = vector.broadcast %239 : f32 to vector<32x128xf32>
    %241 = arith.mulf %240, %62 : vector<32x128xf32>
    %242 = arith.addf %238, %241 : vector<32x128xf32>
    %c21 = arith.constant 21 : index
    %243 = memref.load %arg2[%c21] : memref<48xf32, #tpu.memory_space<smem>>
    %244 = vector.broadcast %243 : f32 to vector<32x128xf32>
    %245 = arith.mulf %244, %63 : vector<32x128xf32>
    %246 = arith.addf %242, %245 : vector<32x128xf32>
    %c22 = arith.constant 22 : index
    %247 = memref.load %arg2[%c22] : memref<48xf32, #tpu.memory_space<smem>>
    %248 = vector.broadcast %247 : f32 to vector<32x128xf32>
    %249 = arith.mulf %248, %48 : vector<32x128xf32>
    %250 = arith.addf %246, %249 : vector<32x128xf32>
    %c23 = arith.constant 23 : index
    %251 = memref.load %arg2[%c23] : memref<48xf32, #tpu.memory_space<smem>>
    %252 = vector.broadcast %251 : f32 to vector<32x128xf32>
    %253 = arith.mulf %252, %64 : vector<32x128xf32>
    %254 = arith.addf %250, %253 : vector<32x128xf32>
    %255 = vector.shape_cast %254 : vector<32x128xf32> to vector<1x32x128xf32>
    %cst_58 = arith.constant dense<0.000000e+00> : vector<1xf32>
    %256 = vector.multi_reduction <add>, %255, %cst_58 [1, 2] : vector<1x32x128xf32> to vector<1xf32>
    %257 = vector.shape_cast %256 : vector<1xf32> to vector<1x1x1xf32>
    %258 = vector.extract %257[0, 0, 0] : f32 from vector<1x1x1xf32>
    %cst_59 = arith.constant 4.096000e+03 : f32
    %259 = arith.divf %258, %cst_59 : f32
    %260 = vector.broadcast %259 : f32 to vector<32x128xf32>
    %261 = arith.subf %254, %260 : vector<32x128xf32>
    %262 = arith.mulf %261, %261 : vector<32x128xf32>
    %263 = vector.shape_cast %262 : vector<32x128xf32> to vector<1x32x128xf32>
    %cst_60 = arith.constant dense<0.000000e+00> : vector<1xf32>
    %264 = vector.multi_reduction <add>, %263, %cst_60 [1, 2] : vector<1x32x128xf32> to vector<1xf32>
    %265 = vector.shape_cast %264 : vector<1xf32> to vector<1x1x1xf32>
    %266 = vector.extract %265[0, 0, 0] : f32 from vector<1x1x1xf32>
    %cst_61 = arith.constant 4.096000e+03 : f32
    %267 = arith.divf %266, %cst_61 : f32
    %cst_62 = arith.constant 9.99999974E-6 : f32
    %268 = arith.addf %267, %cst_62 : f32
    %269 = math.rsqrt %268 : f32
    %270 = vector.broadcast %269 : f32 to vector<32x128xf32>
    %271 = arith.mulf %261, %270 : vector<32x128xf32>
    %c3_63 = arith.constant 3 : index
    %272 = memref.load %arg4[%c3_63] : memref<8xf32, #tpu.memory_space<smem>>
    %273 = vector.broadcast %272 : f32 to vector<32x128xf32>
    %274 = arith.mulf %271, %273 : vector<32x128xf32>
    %c3_64 = arith.constant 3 : index
    %275 = memref.load %arg5[%c3_64] : memref<8xf32, #tpu.memory_space<smem>>
    %276 = vector.broadcast %275 : f32 to vector<32x128xf32>
    %277 = arith.addf %274, %276 : vector<32x128xf32>
    %cst_65 = arith.constant 0.000000e+00 : f32
    %278 = vector.broadcast %cst_65 : f32 to vector<32x128xf32>
    %279 = arith.maximumf %277, %278 : vector<32x128xf32>
    %c0_66 = arith.constant 0 : index
    %c384 = arith.constant 384 : index
    %280 = vector.load %arg13[%c0_66, %c384] : memref<32x1024xf32, #tpu.memory_space<vmem>>, vector<32x128xf32>
    tpu.vector_store %arg13[%c0_66, %c384], %279 {strides = array<i32>} : memref<32x1024xf32, #tpu.memory_space<vmem>>, vector<32x128xf32>,
    %cst_67 = arith.constant 0.000000e+00 : f32
    %281 = vector.broadcast %cst_67 : f32 to vector<32x128xf32>
    %c4_68 = arith.constant 4 : index
    %282 = memref.load %arg3[%c4_68] : memref<8xf32, #tpu.memory_space<smem>>
    %283 = vector.broadcast %282 : f32 to vector<32x128xf32>
    %284 = arith.addf %281, %283 : vector<32x128xf32>
    %c24 = arith.constant 24 : index
    %285 = memref.load %arg2[%c24] : memref<48xf32, #tpu.memory_space<smem>>
    %286 = vector.broadcast %285 : f32 to vector<32x128xf32>
    %287 = arith.mulf %286, %61 : vector<32x128xf32>
    %288 = arith.addf %284, %287 : vector<32x128xf32>
    %c25 = arith.constant 25 : index
    %289 = memref.load %arg2[%c25] : memref<48xf32, #tpu.memory_space<smem>>
    %290 = vector.broadcast %289 : f32 to vector<32x128xf32>
    %291 = arith.mulf %290, %25 : vector<32x128xf32>
    %292 = arith.addf %288, %291 : vector<32x128xf32>
    %c26 = arith.constant 26 : index
    %293 = memref.load %arg2[%c26] : memref<48xf32, #tpu.memory_space<smem>>
    %294 = vector.broadcast %293 : f32 to vector<32x128xf32>
    %295 = arith.mulf %294, %62 : vector<32x128xf32>
    %296 = arith.addf %292, %295 : vector<32x128xf32>
    %c27 = arith.constant 27 : index
    %297 = memref.load %arg2[%c27] : memref<48xf32, #tpu.memory_space<smem>>
    %298 = vector.broadcast %297 : f32 to vector<32x128xf32>
    %299 = arith.mulf %298, %63 : vector<32x128xf32>
    %300 = arith.addf %296, %299 : vector<32x128xf32>
    %c28 = arith.constant 28 : index
    %301 = memref.load %arg2[%c28] : memref<48xf32, #tpu.memory_space<smem>>
    %302 = vector.broadcast %301 : f32 to vector<32x128xf32>
    %303 = arith.mulf %302, %48 : vector<32x128xf32>
    %304 = arith.addf %300, %303 : vector<32x128xf32>
    %c29 = arith.constant 29 : index
    %305 = memref.load %arg2[%c29] : memref<48xf32, #tpu.memory_space<smem>>
    %306 = vector.broadcast %305 : f32 to vector<32x128xf32>
    %307 = arith.mulf %306, %64 : vector<32x128xf32>
    %308 = arith.addf %304, %307 : vector<32x128xf32>
    %309 = vector.shape_cast %308 : vector<32x128xf32> to vector<1x32x128xf32>
    %cst_69 = arith.constant dense<0.000000e+00> : vector<1xf32>
    %310 = vector.multi_reduction <add>, %309, %cst_69 [1, 2] : vector<1x32x128xf32> to vector<1xf32>
    %311 = vector.shape_cast %310 : vector<1xf32> to vector<1x1x1xf32>
    %312 = vector.extract %311[0, 0, 0] : f32 from vector<1x1x1xf32>
    %cst_70 = arith.constant 4.096000e+03 : f32
    %313 = arith.divf %312, %cst_70 : f32
    %314 = vector.broadcast %313 : f32 to vector<32x128xf32>
    %315 = arith.subf %308, %314 : vector<32x128xf32>
    %316 = arith.mulf %315, %315 : vector<32x128xf32>
    %317 = vector.shape_cast %316 : vector<32x128xf32> to vector<1x32x128xf32>
    %cst_71 = arith.constant dense<0.000000e+00> : vector<1xf32>
    %318 = vector.multi_reduction <add>, %317, %cst_71 [1, 2] : vector<1x32x128xf32> to vector<1xf32>
    %319 = vector.shape_cast %318 : vector<1xf32> to vector<1x1x1xf32>
    %320 = vector.extract %319[0, 0, 0] : f32 from vector<1x1x1xf32>
    %cst_72 = arith.constant 4.096000e+03 : f32
    %321 = arith.divf %320, %cst_72 : f32
    %cst_73 = arith.constant 9.99999974E-6 : f32
    %322 = arith.addf %321, %cst_73 : f32
    %323 = math.rsqrt %322 : f32
    %324 = vector.broadcast %323 : f32 to vector<32x128xf32>
    %325 = arith.mulf %315, %324 : vector<32x128xf32>
    %c4_74 = arith.constant 4 : index
    %326 = memref.load %arg4[%c4_74] : memref<8xf32, #tpu.memory_space<smem>>
    %327 = vector.broadcast %326 : f32 to vector<32x128xf32>
    %328 = arith.mulf %325, %327 : vector<32x128xf32>
    %c4_75 = arith.constant 4 : index
    %329 = memref.load %arg5[%c4_75] : memref<8xf32, #tpu.memory_space<smem>>
    %330 = vector.broadcast %329 : f32 to vector<32x128xf32>
    %331 = arith.addf %328, %330 : vector<32x128xf32>
    %cst_76 = arith.constant 0.000000e+00 : f32
    %332 = vector.broadcast %cst_76 : f32 to vector<32x128xf32>
    %333 = arith.maximumf %331, %332 : vector<32x128xf32>
    %c0_77 = arith.constant 0 : index
    %c512 = arith.constant 512 : index
    %334 = vector.load %arg13[%c0_77, %c512] : memref<32x1024xf32, #tpu.memory_space<vmem>>, vector<32x128xf32>
    tpu.vector_store %arg13[%c0_77, %c512], %333 {strides = array<i32>} : memref<32x1024xf32, #tpu.memory_space<vmem>>, vector<32x128xf32>,
    %cst_78 = arith.constant 0.000000e+00 : f32
    %335 = vector.broadcast %cst_78 : f32 to vector<32x128xf32>
    %c5_79 = arith.constant 5 : index
    %336 = memref.load %arg3[%c5_79] : memref<8xf32, #tpu.memory_space<smem>>
    %337 = vector.broadcast %336 : f32 to vector<32x128xf32>
    %338 = arith.addf %335, %337 : vector<32x128xf32>
    %c30 = arith.constant 30 : index
    %339 = memref.load %arg2[%c30] : memref<48xf32, #tpu.memory_space<smem>>
    %340 = vector.broadcast %339 : f32 to vector<32x128xf32>
    %341 = arith.mulf %340, %61 : vector<32x128xf32>
    %342 = arith.addf %338, %341 : vector<32x128xf32>
    %c31 = arith.constant 31 : index
    %343 = memref.load %arg2[%c31] : memref<48xf32, #tpu.memory_space<smem>>
    %344 = vector.broadcast %343 : f32 to vector<32x128xf32>
    %345 = arith.mulf %344, %25 : vector<32x128xf32>
    %346 = arith.addf %342, %345 : vector<32x128xf32>
    %c32 = arith.constant 32 : index
    %347 = memref.load %arg2[%c32] : memref<48xf32, #tpu.memory_space<smem>>
    %348 = vector.broadcast %347 : f32 to vector<32x128xf32>
    %349 = arith.mulf %348, %62 : vector<32x128xf32>
    %350 = arith.addf %346, %349 : vector<32x128xf32>
    %c33 = arith.constant 33 : index
    %351 = memref.load %arg2[%c33] : memref<48xf32, #tpu.memory_space<smem>>
    %352 = vector.broadcast %351 : f32 to vector<32x128xf32>
    %353 = arith.mulf %352, %63 : vector<32x128xf32>
    %354 = arith.addf %350, %353 : vector<32x128xf32>
    %c34 = arith.constant 34 : index
    %355 = memref.load %arg2[%c34] : memref<48xf32, #tpu.memory_space<smem>>
    %356 = vector.broadcast %355 : f32 to vector<32x128xf32>
    %357 = arith.mulf %356, %48 : vector<32x128xf32>
    %358 = arith.addf %354, %357 : vector<32x128xf32>
    %c35 = arith.constant 35 : index
    %359 = memref.load %arg2[%c35] : memref<48xf32, #tpu.memory_space<smem>>
    %360 = vector.broadcast %359 : f32 to vector<32x128xf32>
    %361 = arith.mulf %360, %64 : vector<32x128xf32>
    %362 = arith.addf %358, %361 : vector<32x128xf32>
    %363 = vector.shape_cast %362 : vector<32x128xf32> to vector<1x32x128xf32>
    %cst_80 = arith.constant dense<0.000000e+00> : vector<1xf32>
    %364 = vector.multi_reduction <add>, %363, %cst_80 [1, 2] : vector<1x32x128xf32> to vector<1xf32>
    %365 = vector.shape_cast %364 : vector<1xf32> to vector<1x1x1xf32>
    %366 = vector.extract %365[0, 0, 0] : f32 from vector<1x1x1xf32>
    %cst_81 = arith.constant 4.096000e+03 : f32
    %367 = arith.divf %366, %cst_81 : f32
    %368 = vector.broadcast %367 : f32 to vector<32x128xf32>
    %369 = arith.subf %362, %368 : vector<32x128xf32>
    %370 = arith.mulf %369, %369 : vector<32x128xf32>
    %371 = vector.shape_cast %370 : vector<32x128xf32> to vector<1x32x128xf32>
    %cst_82 = arith.constant dense<0.000000e+00> : vector<1xf32>
    %372 = vector.multi_reduction <add>, %371, %cst_82 [1, 2] : vector<1x32x128xf32> to vector<1xf32>
    %373 = vector.shape_cast %372 : vector<1xf32> to vector<1x1x1xf32>
    %374 = vector.extract %373[0, 0, 0] : f32 from vector<1x1x1xf32>
    %cst_83 = arith.constant 4.096000e+03 : f32
    %375 = arith.divf %374, %cst_83 : f32
    %cst_84 = arith.constant 9.99999974E-6 : f32
    %376 = arith.addf %375, %cst_84 : f32
    %377 = math.rsqrt %376 : f32
    %378 = vector.broadcast %377 : f32 to vector<32x128xf32>
    %379 = arith.mulf %369, %378 : vector<32x128xf32>
    %c5_85 = arith.constant 5 : index
    %380 = memref.load %arg4[%c5_85] : memref<8xf32, #tpu.memory_space<smem>>
    %381 = vector.broadcast %380 : f32 to vector<32x128xf32>
    %382 = arith.mulf %379, %381 : vector<32x128xf32>
    %c5_86 = arith.constant 5 : index
    %383 = memref.load %arg5[%c5_86] : memref<8xf32, #tpu.memory_space<smem>>
    %384 = vector.broadcast %383 : f32 to vector<32x128xf32>
    %385 = arith.addf %382, %384 : vector<32x128xf32>
    %cst_87 = arith.constant 0.000000e+00 : f32
    %386 = vector.broadcast %cst_87 : f32 to vector<32x128xf32>
    %387 = arith.maximumf %385, %386 : vector<32x128xf32>
    %c0_88 = arith.constant 0 : index
    %c640 = arith.constant 640 : index
    %388 = vector.load %arg13[%c0_88, %c640] : memref<32x1024xf32, #tpu.memory_space<vmem>>, vector<32x128xf32>
    tpu.vector_store %arg13[%c0_88, %c640], %387 {strides = array<i32>} : memref<32x1024xf32, #tpu.memory_space<vmem>>, vector<32x128xf32>,
    %cst_89 = arith.constant 0.000000e+00 : f32
    %389 = vector.broadcast %cst_89 : f32 to vector<32x128xf32>
    %c6_90 = arith.constant 6 : index
    %390 = memref.load %arg3[%c6_90] : memref<8xf32, #tpu.memory_space<smem>>
    %391 = vector.broadcast %390 : f32 to vector<32x128xf32>
    %392 = arith.addf %389, %391 : vector<32x128xf32>
    %c36 = arith.constant 36 : index
    %393 = memref.load %arg2[%c36] : memref<48xf32, #tpu.memory_space<smem>>
    %394 = vector.broadcast %393 : f32 to vector<32x128xf32>
    %395 = arith.mulf %394, %61 : vector<32x128xf32>
    %396 = arith.addf %392, %395 : vector<32x128xf32>
    %c37 = arith.constant 37 : index
    %397 = memref.load %arg2[%c37] : memref<48xf32, #tpu.memory_space<smem>>
    %398 = vector.broadcast %397 : f32 to vector<32x128xf32>
    %399 = arith.mulf %398, %25 : vector<32x128xf32>
    %400 = arith.addf %396, %399 : vector<32x128xf32>
    %c38 = arith.constant 38 : index
    %401 = memref.load %arg2[%c38] : memref<48xf32, #tpu.memory_space<smem>>
    %402 = vector.broadcast %401 : f32 to vector<32x128xf32>
    %403 = arith.mulf %402, %62 : vector<32x128xf32>
    %404 = arith.addf %400, %403 : vector<32x128xf32>
    %c39 = arith.constant 39 : index
    %405 = memref.load %arg2[%c39] : memref<48xf32, #tpu.memory_space<smem>>
    %406 = vector.broadcast %405 : f32 to vector<32x128xf32>
    %407 = arith.mulf %406, %63 : vector<32x128xf32>
    %408 = arith.addf %404, %407 : vector<32x128xf32>
    %c40 = arith.constant 40 : index
    %409 = memref.load %arg2[%c40] : memref<48xf32, #tpu.memory_space<smem>>
    %410 = vector.broadcast %409 : f32 to vector<32x128xf32>
    %411 = arith.mulf %410, %48 : vector<32x128xf32>
    %412 = arith.addf %408, %411 : vector<32x128xf32>
    %c41 = arith.constant 41 : index
    %413 = memref.load %arg2[%c41] : memref<48xf32, #tpu.memory_space<smem>>
    %414 = vector.broadcast %413 : f32 to vector<32x128xf32>
    %415 = arith.mulf %414, %64 : vector<32x128xf32>
    %416 = arith.addf %412, %415 : vector<32x128xf32>
    %417 = vector.shape_cast %416 : vector<32x128xf32> to vector<1x32x128xf32>
    %cst_91 = arith.constant dense<0.000000e+00> : vector<1xf32>
    %418 = vector.multi_reduction <add>, %417, %cst_91 [1, 2] : vector<1x32x128xf32> to vector<1xf32>
    %419 = vector.shape_cast %418 : vector<1xf32> to vector<1x1x1xf32>
    %420 = vector.extract %419[0, 0, 0] : f32 from vector<1x1x1xf32>
    %cst_92 = arith.constant 4.096000e+03 : f32
    %421 = arith.divf %420, %cst_92 : f32
    %422 = vector.broadcast %421 : f32 to vector<32x128xf32>
    %423 = arith.subf %416, %422 : vector<32x128xf32>
    %424 = arith.mulf %423, %423 : vector<32x128xf32>
    %425 = vector.shape_cast %424 : vector<32x128xf32> to vector<1x32x128xf32>
    %cst_93 = arith.constant dense<0.000000e+00> : vector<1xf32>
    %426 = vector.multi_reduction <add>, %425, %cst_93 [1, 2] : vector<1x32x128xf32> to vector<1xf32>
    %427 = vector.shape_cast %426 : vector<1xf32> to vector<1x1x1xf32>
    %428 = vector.extract %427[0, 0, 0] : f32 from vector<1x1x1xf32>
    %cst_94 = arith.constant 4.096000e+03 : f32
    %429 = arith.divf %428, %cst_94 : f32
    %cst_95 = arith.constant 9.99999974E-6 : f32
    %430 = arith.addf %429, %cst_95 : f32
    %431 = math.rsqrt %430 : f32
    %432 = vector.broadcast %431 : f32 to vector<32x128xf32>
    %433 = arith.mulf %423, %432 : vector<32x128xf32>
    %c6_96 = arith.constant 6 : index
    %434 = memref.load %arg4[%c6_96] : memref<8xf32, #tpu.memory_space<smem>>
    %435 = vector.broadcast %434 : f32 to vector<32x128xf32>
    %436 = arith.mulf %433, %435 : vector<32x128xf32>
    %c6_97 = arith.constant 6 : index
    %437 = memref.load %arg5[%c6_97] : memref<8xf32, #tpu.memory_space<smem>>
    %438 = vector.broadcast %437 : f32 to vector<32x128xf32>
    %439 = arith.addf %436, %438 : vector<32x128xf32>
    %cst_98 = arith.constant 0.000000e+00 : f32
    %440 = vector.broadcast %cst_98 : f32 to vector<32x128xf32>
    %441 = arith.maximumf %439, %440 : vector<32x128xf32>
    %c0_99 = arith.constant 0 : index
    %c768 = arith.constant 768 : index
    %442 = vector.load %arg13[%c0_99, %c768] : memref<32x1024xf32, #tpu.memory_space<vmem>>, vector<32x128xf32>
    tpu.vector_store %arg13[%c0_99, %c768], %441 {strides = array<i32>} : memref<32x1024xf32, #tpu.memory_space<vmem>>, vector<32x128xf32>,
    %cst_100 = arith.constant 0.000000e+00 : f32
    %443 = vector.broadcast %cst_100 : f32 to vector<32x128xf32>
    %c7_101 = arith.constant 7 : index
    %444 = memref.load %arg3[%c7_101] : memref<8xf32, #tpu.memory_space<smem>>
    %445 = vector.broadcast %444 : f32 to vector<32x128xf32>
    %446 = arith.addf %443, %445 : vector<32x128xf32>
    %c42 = arith.constant 42 : index
    %447 = memref.load %arg2[%c42] : memref<48xf32, #tpu.memory_space<smem>>
    %448 = vector.broadcast %447 : f32 to vector<32x128xf32>
    %449 = arith.mulf %448, %61 : vector<32x128xf32>
    %450 = arith.addf %446, %449 : vector<32x128xf32>
    %c43 = arith.constant 43 : index
    %451 = memref.load %arg2[%c43] : memref<48xf32, #tpu.memory_space<smem>>
    %452 = vector.broadcast %451 : f32 to vector<32x128xf32>
    %453 = arith.mulf %452, %25 : vector<32x128xf32>
    %454 = arith.addf %450, %453 : vector<32x128xf32>
    %c44 = arith.constant 44 : index
    %455 = memref.load %arg2[%c44] : memref<48xf32, #tpu.memory_space<smem>>
    %456 = vector.broadcast %455 : f32 to vector<32x128xf32>
    %457 = arith.mulf %456, %62 : vector<32x128xf32>
    %458 = arith.addf %454, %457 : vector<32x128xf32>
    %c45 = arith.constant 45 : index
    %459 = memref.load %arg2[%c45] : memref<48xf32, #tpu.memory_space<smem>>
    %460 = vector.broadcast %459 : f32 to vector<32x128xf32>
    %461 = arith.mulf %460, %63 : vector<32x128xf32>
    %462 = arith.addf %458, %461 : vector<32x128xf32>
    %c46 = arith.constant 46 : index
    %463 = memref.load %arg2[%c46] : memref<48xf32, #tpu.memory_space<smem>>
    %464 = vector.broadcast %463 : f32 to vector<32x128xf32>
    %465 = arith.mulf %464, %48 : vector<32x128xf32>
    %466 = arith.addf %462, %465 : vector<32x128xf32>
    %c47 = arith.constant 47 : index
    %467 = memref.load %arg2[%c47] : memref<48xf32, #tpu.memory_space<smem>>
    %468 = vector.broadcast %467 : f32 to vector<32x128xf32>
    %469 = arith.mulf %468, %64 : vector<32x128xf32>
    %470 = arith.addf %466, %469 : vector<32x128xf32>
    %471 = vector.shape_cast %470 : vector<32x128xf32> to vector<1x32x128xf32>
    %cst_102 = arith.constant dense<0.000000e+00> : vector<1xf32>
    %472 = vector.multi_reduction <add>, %471, %cst_102 [1, 2] : vector<1x32x128xf32> to vector<1xf32>
    %473 = vector.shape_cast %472 : vector<1xf32> to vector<1x1x1xf32>
    %474 = vector.extract %473[0, 0, 0] : f32 from vector<1x1x1xf32>
    %cst_103 = arith.constant 4.096000e+03 : f32
    %475 = arith.divf %474, %cst_103 : f32
    %476 = vector.broadcast %475 : f32 to vector<32x128xf32>
    %477 = arith.subf %470, %476 : vector<32x128xf32>
    %478 = arith.mulf %477, %477 : vector<32x128xf32>
    %479 = vector.shape_cast %478 : vector<32x128xf32> to vector<1x32x128xf32>
    %cst_104 = arith.constant dense<0.000000e+00> : vector<1xf32>
    %480 = vector.multi_reduction <add>, %479, %cst_104 [1, 2] : vector<1x32x128xf32> to vector<1xf32>
    %481 = vector.shape_cast %480 : vector<1xf32> to vector<1x1x1xf32>
    %482 = vector.extract %481[0, 0, 0] : f32 from vector<1x1x1xf32>
    %cst_105 = arith.constant 4.096000e+03 : f32
    %483 = arith.divf %482, %cst_105 : f32
    %cst_106 = arith.constant 9.99999974E-6 : f32
    %484 = arith.addf %483, %cst_106 : f32
    %485 = math.rsqrt %484 : f32
    %486 = vector.broadcast %485 : f32 to vector<32x128xf32>
    %487 = arith.mulf %477, %486 : vector<32x128xf32>
    %c7_107 = arith.constant 7 : index
    %488 = memref.load %arg4[%c7_107] : memref<8xf32, #tpu.memory_space<smem>>
    %489 = vector.broadcast %488 : f32 to vector<32x128xf32>
    %490 = arith.mulf %487, %489 : vector<32x128xf32>
    %c7_108 = arith.constant 7 : index
    %491 = memref.load %arg5[%c7_108] : memref<8xf32, #tpu.memory_space<smem>>
    %492 = vector.broadcast %491 : f32 to vector<32x128xf32>
    %493 = arith.addf %490, %492 : vector<32x128xf32>
    %cst_109 = arith.constant 0.000000e+00 : f32
    %494 = vector.broadcast %cst_109 : f32 to vector<32x128xf32>
    %495 = arith.maximumf %493, %494 : vector<32x128xf32>
    %c0_110 = arith.constant 0 : index
    %c896 = arith.constant 896 : index
    %496 = vector.load %arg13[%c0_110, %c896] : memref<32x1024xf32, #tpu.memory_space<vmem>>, vector<32x128xf32>
    tpu.vector_store %arg13[%c0_110, %c896], %495 {strides = array<i32>} : memref<32x1024xf32, #tpu.memory_space<vmem>>, vector<32x128xf32>,
    %c0_111 = arith.constant 0 : index
    %c0_112 = arith.constant 0 : index
    %497 = vector.load %arg13[%c0_111, %c0_112] : memref<32x1024xf32, #tpu.memory_space<vmem>>, vector<32x1024xf32>
    %c0_113 = arith.constant 0 : index
    %c0_114 = arith.constant 0 : index
    %498 = vector.load %arg8[%c0_113, %c0_114] : memref<1024x128xf32, #tpu.memory_space<vmem>>, vector<1024x128xf32>
    %cst_115 = arith.constant dense<0.000000e+00> : vector<32x128xf32>
    %499 = tpu.matmul %497, %498, %cst_115 {dimension_numbers = #tpu.dot_dimension_numbers<[1], [0], [0], [1], [0, 0, 1, 1], [], []>} : vector<32x1024xf32>, vector<1024x128xf32>, vector<32x128xf32> -> vector<32x128xf32>
    %c0_116 = arith.constant 0 : index
    %c0_117 = arith.constant 0 : index
    %500 = vector.load %arg9[%c0_116, %c0_117] : memref<1x128xf32, #tpu.memory_space<vmem>>, vector<1x128xf32>
    %501 = vector.broadcast %500 : vector<1x128xf32> to vector<32x128xf32>
    %502 = arith.addf %499, %501 : vector<32x128xf32>
    %cst_118 = arith.constant dense<0.000000e+00> : vector<128xf32>
    %503 = vector.multi_reduction <add>, %502, %cst_118 [0] : vector<32x128xf32> to vector<128xf32>
    %504 = vector.shape_cast %503 : vector<128xf32> to vector<1x128xf32>
    %cst_119 = arith.constant 3.200000e+01 : f32
    %505 = vector.broadcast %cst_119 : f32 to vector<1x128xf32>
    %506 = arith.divf %504, %505 : vector<1x128xf32>
    %507 = vector.broadcast %506 : vector<1x128xf32> to vector<32x128xf32>
    %508 = arith.subf %502, %507 : vector<32x128xf32>
    %509 = arith.mulf %508, %508 : vector<32x128xf32>
    %cst_120 = arith.constant dense<0.000000e+00> : vector<128xf32>
    %510 = vector.multi_reduction <add>, %509, %cst_120 [0] : vector<32x128xf32> to vector<128xf32>
    %511 = vector.shape_cast %510 : vector<128xf32> to vector<1x128xf32>
    %cst_121 = arith.constant 3.200000e+01 : f32
    %512 = vector.broadcast %cst_121 : f32 to vector<1x128xf32>
    %513 = arith.divf %511, %512 : vector<1x128xf32>
    %cst_122 = arith.constant 9.99999974E-6 : f32
    %514 = vector.broadcast %cst_122 : f32 to vector<1x128xf32>
    %515 = arith.addf %513, %514 : vector<1x128xf32>
    %516 = math.rsqrt %515 : vector<1x128xf32>
    %517 = vector.broadcast %516 : vector<1x128xf32> to vector<32x128xf32>
    %518 = arith.mulf %508, %517 : vector<32x128xf32>
    %c0_123 = arith.constant 0 : index
    %c0_124 = arith.constant 0 : index
    %519 = vector.load %arg10[%c0_123, %c0_124] : memref<1x128xf32, #tpu.memory_space<vmem>>, vector<1x128xf32>
    %520 = vector.broadcast %519 : vector<1x128xf32> to vector<32x128xf32>
    %521 = arith.mulf %518, %520 : vector<32x128xf32>
    %c0_125 = arith.constant 0 : index
    %c0_126 = arith.constant 0 : index
    %522 = vector.load %arg11[%c0_125, %c0_126] : memref<1x128xf32, #tpu.memory_space<vmem>>, vector<1x128xf32>
    %523 = vector.broadcast %522 : vector<1x128xf32> to vector<32x128xf32>
    %524 = arith.addf %521, %523 : vector<32x128xf32>
    %cst_127 = arith.constant 0.000000e+00 : f32
    %525 = vector.broadcast %cst_127 : f32 to vector<32x128xf32>
    %526 = arith.maximumf %524, %525 : vector<32x128xf32>
    %527 = arith.truncf %526 : vector<32x128xf32> to vector<32x128xbf16>
    %c0_128 = arith.constant 0 : index
    %c0_129 = arith.constant 0 : index
    %528 = vector.load %arg12[%c0_128, %c0_129] : memref<32x128xbf16, #tpu.memory_space<vmem>>, vector<32x128xbf16>
    tpu.vector_store %arg12[%c0_128, %c0_129], %527 {strides = array<i32>} : memref<32x128xbf16, #tpu.memory_space<vmem>>, vector<32x128xbf16>,
    return
  }
}

</mosaic_0001>

<llo_original>
// kernel: tpu_custom_call.1
$region0: #{tpu_custom_call.1}
  #allocation0 [shape = 'u32[]', space=smem, size = 0x4, offset = 0x4, fixed_abs, tag = 'smem constant byte address 0x4 - core index']
  #allocation1 [shape = 'u32[144,128]{1,0:T(1,128)}', space=vmem, size = 0x12000, scoped, tag = 'internal scratch']
  #allocation2 [shape = 'f32[32,1024]{1,0:T(8,128)}', space=vmem, size = 0x20000, scoped, tag = 'scratch operand']
  %s0 = inlined_call_operand.hbm [shape: f32[2], index: 0, kind: input, shape index: {}]
  %s1 = inlined_call_operand.vmem [shape: f32[2], index: 1, kind: input, shape index: {}]
  %s2 = inlined_call_operand.vmem [shape: f32[48], index: 2, kind: input, shape index: {}]
  %s3 = inlined_call_operand.vmem [shape: f32[8], index: 3, kind: input, shape index: {}]
  %s4 = inlined_call_operand.vmem [shape: f32[8], index: 4, kind: input, shape index: {}]
  %s5 = inlined_call_operand.vmem [shape: f32[8], index: 5, kind: input, shape index: {}]
  %s6 = inlined_call_operand.hbm [shape: f32[32,128], index: 6, kind: input, shape index: {}]
  %s7 = inlined_call_operand.hbm [shape: f32[32,128], index: 7, kind: input, shape index: {}]
  %s8 = inlined_call_operand.hbm [shape: f32[1024,128], index: 8, kind: input, shape index: {}]
  %s9 = inlined_call_operand.vmem [shape: f32[1,128], index: 9, kind: input, shape index: {}]
  %s10 = inlined_call_operand.vmem [shape: f32[1,128], index: 10, kind: input, shape index: {}]
  %s11 = inlined_call_operand.vmem [shape: f32[1,128], index: 11, kind: input, shape index: {}]
  %s12 = inlined_call_operand.hbm [shape: bf16[32,128], index: 12, kind: output, shape index: {}]
  %s13 = sld [smem:[#allocation0]]
  $region94: #{tpu_custom_call.1} parent=0
    _
  %s15 = ssub.s32 1, %s13
  %s16 = scalar_select 0, %s15, %s13
  $region1: #{tpu_custom_call.1} parent=0
    #allocation3 [shape = 'u8[512]{0}', space=smem, size = 0x200, scoped, tag = 'input window, operand 0, single buffered']
    #allocation4 [shape = 's32[1]{0}', space=sflag, size = 0x4, scoped, tag = 'scoped memory for tpu_custom_call.1']
    #allocation5 [shape = 's32[1]{0}', space=sflag, size = 0x4, scoped, tag = 'scoped memory for tpu_custom_call.1']
    #allocation6 [shape = 's32[1]{0}', space=sflag, size = 0x4, scoped, tag = 'scoped memory for tpu_custom_call.1']
    #allocation7 [shape = 's32[1]{0}', space=sflag, size = 0x4, scoped, tag = 'scoped memory for tpu_custom_call.1']
    #allocation8 [shape = 'u8[512]{0}', space=smem, size = 0x200, scoped, tag = 'input window, operand 1, single buffered']
    #allocation9 [shape = 'u8[512]{0}', space=smem, size = 0x200, scoped, tag = 'input window, operand 2, single buffered']
    #allocation10 [shape = 's32[1]{0}', space=sflag, size = 0x4, scoped, tag = 'scoped memory for tpu_custom_call.1']
    #allocation11 [shape = 'u8[512]{0}', space=smem, size = 0x200, scoped, tag = 'input window, operand 3, single buffered']
    #allocation12 [shape = 'u8[512]{0}', space=smem, size = 0x200, scoped, tag = 'input window, operand 4, single buffered']
    #allocation13 [shape = 's32[1]{0}', space=sflag, size = 0x4, scoped, tag = 'scoped memory for tpu_custom_call.1']
    #allocation14 [shape = 'u8[512]{0}', space=smem, size = 0x200, scoped, tag = 'input window, operand 5, single buffered']
    #allocation15 [shape = 'u8[16384]{0}', space=vmem, size = 0x4000, scoped, tag = 'input window, operand 6, single buffered']
    #allocation16 [shape = 'u8[16384]{0}', space=vmem, size = 0x4000, scoped, tag = 'input window, operand 7, single buffered']
    #allocation17 [shape = 's32[1]{0}', space=sflag, size = 0x4, scoped, tag = 'scoped memory for tpu_custom_call.1']
    #allocation18 [shape = 'u8[524288]{0}', space=vmem, size = 0x80000, scoped, tag = 'input window, operand 8, single buffered']
    #allocation19 [shape = 'u8[8192]{0}', space=vmem, size = 0x2000, scoped, tag = 'output window, operand 0, single buffered']
    %17 = vsyncpa [#allocation6], 0
    %18 = vsyncpa [#allocation7], 0
    %19 = vsyncpa [#allocation10], 0
    %20 = vsyncpa [#allocation13], 0
    %21 = vsyncpa [#allocation4], 0
    %22 = vsyncpa [#allocation17], 0
    %23 = vsyncpa [#allocation5], 0
    // Predicated region
    $region2: #{tpu_custom_call.1} parent=1 // pred_check
      _
    $region3: #{tpu_custom_call.1} parent=1 // pred_check_branch
      %25 = sbr.rel (0) target = $region5
    $region4: #{tpu_custom_call.1} parent=1 // pred_region
      %s27 = ssub.s32 16, 16
      %28 = vsyncadd [#allocation6], %s27
      %31 = dma.hbm_to_smem %s0, 16, [#allocation3], [#allocation6]
    $region5: #{tpu_custom_call.1} parent=1 // pred_fallthru
      _
    // Predicated region
    $region6: #{tpu_custom_call.1} parent=1 // pred_check
      _
    $region7: #{tpu_custom_call.1} parent=1 // pred_check_branch
      %33 = sbr.rel (0) target = $region9
    $region8: #{tpu_custom_call.1} parent=1 // pred_region
      %s35 = ssub.s32 16, 16
      %36 = vsyncadd [#allocation7], %s35
      %s38 = sshll.u32 %s1, 4
      %s39 = int_to_ptr.vmem [resolvable:$true] %s38
      %41 = dma.vmem_to_smem %s39, 16, [#allocation8], [#allocation7]
    $region9: #{tpu_custom_call.1} parent=1 // pred_fallthru
      _
    // Predicated region
    $region10: #{tpu_custom_call.1} parent=1 // pred_check
      _
    $region11: #{tpu_custom_call.1} parent=1 // pred_check_branch
      %43 = sbr.rel (0) target = $region13
    $region12: #{tpu_custom_call.1} parent=1 // pred_region
      %s45 = ssub.s32 16, 16
      %46 = vsyncadd [#allocation10], %s45
      %s48 = sshll.u32 %s2, 4
      %s49 = int_to_ptr.vmem [resolvable:$true] %s48
      %51 = dma.vmem_to_smem %s49, 16, [#allocation9], [#allocation10]
    $region13: #{tpu_custom_call.1} parent=1 // pred_fallthru
      _
    // Predicated region
    $region14: #{tpu_custom_call.1} parent=1 // pred_check
      _
    $region15: #{tpu_custom_call.1} parent=1 // pred_check_branch
      %53 = sbr.rel (0) target = $region17
    $region16: #{tpu_custom_call.1} parent=1 // pred_region
      %s55 = ssub.s32 16, 16
      %56 = vsyncadd [#allocation10], %s55
      %s58 = sshll.u32 %s3, 4
      %s59 = int_to_ptr.vmem [resolvable:$true] %s58
      %61 = dma.vmem_to_smem %s59, 16, [#allocation11], [#allocation10]
    $region17: #{tpu_custom_call.1} parent=1 // pred_fallthru
      _
    // Predicated region
    $region18: #{tpu_custom_call.1} parent=1 // pred_check
      _
    $region19: #{tpu_custom_call.1} parent=1 // pred_check_branch
      %63 = sbr.rel (0) target = $region21
    $region20: #{tpu_custom_call.1} parent=1 // pred_region
      %s65 = ssub.s32 16, 16
      %66 = vsyncadd [#allocation13], %s65
      %s68 = sshll.u32 %s4, 4
      %s69 = int_to_ptr.vmem [resolvable:$true] %s68
      %71 = dma.vmem_to_smem %s69, 16, [#allocation12], [#allocation13]
    $region21: #{tpu_custom_call.1} parent=1 // pred_fallthru
      _
    // Predicated region
    $region22: #{tpu_custom_call.1} parent=1 // pred_check
      _
    $region23: #{tpu_custom_call.1} parent=1 // pred_check_branch
      %73 = sbr.rel (0) target = $region25
    $region24: #{tpu_custom_call.1} parent=1 // pred_region
      %s75 = ssub.s32 16, 16
      %76 = vsyncadd [#allocation13], %s75
      %s78 = sshll.u32 %s5, 4
      %s79 = int_to_ptr.vmem [resolvable:$true] %s78
      %81 = dma.vmem_to_smem %s79, 16, [#allocation14], [#allocation13]
    $region25: #{tpu_custom_call.1} parent=1 // pred_fallthru
      _
    // Predicated region
    $region26: #{tpu_custom_call.1} parent=1 // pred_check
      _
    $region27: #{tpu_custom_call.1} parent=1 // pred_check_branch
      %83 = sbr.rel (0) target = $region29
    $region28: #{tpu_custom_call.1} parent=1 // pred_region
      %s85 = ssub.s32 512, 512
      %86 = vsyncadd [#allocation4], %s85
      %s87 = sshll.u32 [#allocation15], 4
      %s88 = int_to_ptr.vmem [resolvable:$true] %s87
      %93 = dma.hbm_to_vmem [thread:$0]  %s6, 512, %s88, [#allocation4], 128, 128, 8
    $region29: #{tpu_custom_call.1} parent=1 // pred_fallthru
      _
    // Predicated region
    $region30: #{tpu_custom_call.1} parent=1 // pred_check
      _
    $region31: #{tpu_custom_call.1} parent=1 // pred_check_branch
      %95 = sbr.rel (0) target = $region33
    $region32: #{tpu_custom_call.1} parent=1 // pred_region
      %s97 = ssub.s32 512, 512
      %98 = vsyncadd [#allocation17], %s97
      %s99 = sshll.u32 [#allocation16], 4
      %s100 = int_to_ptr.vmem [resolvable:$true] %s99
      %105 = dma.hbm_to_vmem [thread:$0]  %s7, 512, %s100, [#allocation17], 128, 128, 8
    $region33: #{tpu_custom_call.1} parent=1 // pred_fallthru
      _
    // Predicated region
    $region34: #{tpu_custom_call.1} parent=1 // pred_check
      _
    $region35: #{tpu_custom_call.1} parent=1 // pred_check_branch
      %107 = sbr.rel (0) target = $region37
    $region36: #{tpu_custom_call.1} parent=1 // pred_region
      %s109 = ssub.s32 16384, 16384
      %110 = vsyncadd [#allocation17], %s109
      %s111 = sshll.u32 [#allocation18], 4
      %s112 = int_to_ptr.vmem [resolvable:$true] %s111
      %117 = dma.hbm_to_vmem [thread:$0]  %s8, 16384, %s112, [#allocation17], 128, 128, 8
    $region37: #{tpu_custom_call.1} parent=1 // pred_fallthru
      _
    // Predicated region
    $region38: #{tpu_custom_call.1} parent=1 // pred_check
      _
    $region39: #{tpu_custom_call.1} parent=1 // pred_check_branch
      %119 = sbr.rel (0) target = $region41
    $region40: #{tpu_custom_call.1} parent=1 // pred_region
      _
    $region41: #{tpu_custom_call.1} parent=1 // pred_fallthru
      _
    // Predicated region
    $region42: #{tpu_custom_call.1} parent=1 // pred_check
      _
    $region43: #{tpu_custom_call.1} parent=1 // pred_check_branch
      %121 = sbr.rel (0) target = $region45
    $region44: #{tpu_custom_call.1} parent=1 // pred_region
      _
    $region45: #{tpu_custom_call.1} parent=1 // pred_fallthru
      _
    // Predicated region
    $region46: #{tpu_custom_call.1} parent=1 // pred_check
      _
    $region47: #{tpu_custom_call.1} parent=1 // pred_check_branch
      %123 = sbr.rel (0) target = $region49
    $region48: #{tpu_custom_call.1} parent=1 // pred_region
      _
    $region49: #{tpu_custom_call.1} parent=1 // pred_fallthru
      _
    // Predicated region
    $region50: #{tpu_custom_call.1} parent=1 // pred_check
      _
    $region51: #{tpu_custom_call.1} parent=1 // pred_check_branch
      %125 = sbr.rel (0) target = $region53
    $region52: #{tpu_custom_call.1} parent=1 // pred_region
      %126 = dma.done [#allocation6], 16
    $region53: #{tpu_custom_call.1} parent=1 // pred_fallthru
      _
    // Predicated region
    $region54: #{tpu_custom_call.1} parent=1 // pred_check
      _
    $region55: #{tpu_custom_call.1} parent=1 // pred_check_branch
      %128 = sbr.rel (0) target = $region57
    $region56: #{tpu_custom_call.1} parent=1 // pred_region
      %129 = dma.done [#allocation7], 16
    $region57: #{tpu_custom_call.1} parent=1 // pred_fallthru
      _
    // Predicated region
    $region58: #{tpu_custom_call.1} parent=1 // pred_check
      _
    $region59: #{tpu_custom_call.1} parent=1 // pred_check_branch
      %131 = sbr.rel (0) target = $region61
    $region60: #{tpu_custom_call.1} parent=1 // pred_region
      %132 = dma.done [#allocation10], 16
    $region61: #{tpu_custom_call.1} parent=1 // pred_fallthru
      _
    // Predicated region
    $region62: #{tpu_custom_call.1} parent=1 // pred_check
      _
    $region63: #{tpu_custom_call.1} parent=1 // pred_check_branch
      %134 = sbr.rel (0) target = $region65
    $region64: #{tpu_custom_call.1} parent=1 // pred_region
      %135 = dma.done [#allocation10], 16
    $region65: #{tpu_custom_call.1} parent=1 // pred_fallthru
      _
    // Predicated region
    $region66: #{tpu_custom_call.1} parent=1 // pred_check
      _
    $region67: #{tpu_custom_call.1} parent=1 // pred_check_branch
      %137 = sbr.rel (0) target = $region69
    $region68: #{tpu_custom_call.1} parent=1 // pred_region
      %138 = dma.done [#allocation13], 16
    $region69: #{tpu_custom_call.1} parent=1 // pred_fallthru
      _
    // Predicated region
    $region70: #{tpu_custom_call.1} parent=1 // pred_check
      _
    $region71: #{tpu_custom_call.1} parent=1 // pred_check_branch
      %140 = sbr.rel (0) target = $region73
    $region72: #{tpu_custom_call.1} parent=1 // pred_region
      %141 = dma.done [#allocation13], 16
    $region73: #{tpu_custom_call.1} parent=1 // pred_fallthru
      _
    // Predicated region
    $region74: #{tpu_custom_call.1} parent=1 // pred_check
      _
    $region75: #{tpu_custom_call.1} parent=1 // pred_check_branch
      %143 = sbr.rel (0) target = $region77
    $region76: #{tpu_custom_call.1} parent=1 // pred_region
      %144 = dma.done [#allocation4], 512
    $region77: #{tpu_custom_call.1} parent=1 // pred_fallthru
      _
    // Predicated region
    $region78: #{tpu_custom_call.1} parent=1 // pred_check
      _
    $region79: #{tpu_custom_call.1} parent=1 // pred_check_branch
      %146 = sbr.rel (0) target = $region81
    $region80: #{tpu_custom_call.1} parent=1 // pred_region
      %147 = dma.done [#allocation17], 512
    $region81: #{tpu_custom_call.1} parent=1 // pred_fallthru
      _
    // Predicated region
    $region82: #{tpu_custom_call.1} parent=1 // pred_check
      _
    $region83: #{tpu_custom_call.1} parent=1 // pred_check_branch
      %149 = sbr.rel (0) target = $region85
    $region84: #{tpu_custom_call.1} parent=1 // pred_region
      %150 = dma.done [#allocation17], 16384
    $region85: #{tpu_custom_call.1} parent=1 // pred_fallthru
      _
    %151 = sfence
    %v152 = vld [vmem:[#allocation15] sm:$0xff]
    %v153 = vld [vmem:[#allocation15 + $0x8] sm:$0xff]
    %v154 = vld [vmem:[#allocation15 + $0x10] sm:$0xff]
    %v155 = vld [vmem:[#allocation15 + $0x18] sm:$0xff]
    %v156 = vtanh.pop %v152
    %v157 = vtanh.pop %v153
    %v158 = vtanh.pop %v154
    %v159 = vtanh.pop %v155
    %v160 = vld [vmem:[#allocation16] sm:$0xff]
    %v161 = vld [vmem:[#allocation16 + $0x8] sm:$0xff]
    %v162 = vld [vmem:[#allocation16 + $0x10] sm:$0xff]
    %v163 = vld [vmem:[#allocation16 + $0x18] sm:$0xff]
    %s164 = sld [smem:[#allocation3]]
    %s165 = sld [smem:[#allocation8]]
    %v166 = vadd.f32 %v156, %v157
    %v167 = vadd.f32 %v166, %v158
    %v168 = vadd.f32 %v167, %v159
    %169 = vadd.xlane.f32.xlu0 %v168
    %v170 = vpop.xlane.xlu0 %169
    %v171 = vrot.slane %v170, 4
    %v172 = vadd.f32 %v170, %v171
    %v173 = vrot.slane %v172, 2
    %v174 = vadd.f32 %v172, %v173
    %v175 = vrot.slane %v174, 1
    %v176 = vadd.f32 %v174, %v175
    %s177 = vtos %v176
    %v178 = vrcp.pop 4096.0
    %s179 = vtos %v178
    %s180 = smul.f32 %s177, %s179
    %v181 = vstv %s180
    %v182 = vsub.f32 %v156, %v181
    %v183 = vsub.f32 %v157, %v181
    %v184 = vsub.f32 %v158, %v181
    %v185 = vsub.f32 %v159, %v181
    %v186 = vmul.f32 %v182, %v182
    %v187 = vmul.f32 %v183, %v183
    %v188 = vmul.f32 %v184, %v184
    %v189 = vmul.f32 %v185, %v185
    %v190 = vadd.f32 %v186, %v187
    %v191 = vadd.f32 %v190, %v188
    %v192 = vadd.f32 %v191, %v189
    %193 = vadd.xlane.f32.xlu0 %v192
    %v194 = vpop.xlane.xlu0 %193
    %v195 = vrot.slane %v194, 4
    %v196 = vadd.f32 %v194, %v195
    %v197 = vrot.slane %v196, 2
    %v198 = vadd.f32 %v196, %v197
    %v199 = vrot.slane %v198, 1
    %v200 = vadd.f32 %v198, %v199
    %s201 = vtos %v200
    %v202 = vrcp.pop 4096.0
    %s203 = vtos %v202
    %s204 = smul.f32 %s201, %s203
    %s205 = sadd.f32 %s204, 1e-05
    %v206 = vstv %s205
    %v207 = vrsqrt.pop %v206
    %s208 = vtos %v207
    %v209 = vstv %s208
    %v210 = vmul.f32 %v182, %v209
    %v211 = vmul.f32 %v183, %v209
    %v212 = vmul.f32 %v184, %v209
    %v213 = vmul.f32 %v185, %v209
    %v214 = vstv %s164
    %v215 = vmul.f32 %v210, %v214
    %v216 = vmul.f32 %v211, %v214
    %v217 = vmul.f32 %v212, %v214
    %v218 = vmul.f32 %v213, %v214
    %v219 = vstv %s165
    %v220 = vadd.f32 %v215, %v219
    %v221 = vadd.f32 %v216, %v219
    %v222 = vadd.f32 %v217, %v219
    %v223 = vadd.f32 %v218, %v219
    %s224 = sld [smem:[#allocation3 + $0x1]]
    %s225 = sld [smem:[#allocation8 + $0x1]]
    %v226 = vadd.f32 %v160, %v161
    %v227 = vadd.f32 %v226, %v162
    %v228 = vadd.f32 %v227, %v163
    %229 = vadd.xlane.f32.xlu0 %v228
    %v230 = vpop.xlane.xlu0 %229
    %v231 = vrot.slane %v230, 4
    %v232 = vadd.f32 %v230, %v231
    %v233 = vrot.slane %v232, 2
    %v234 = vadd.f32 %v232, %v233
    %v235 = vrot.slane %v234, 1
    %v236 = vadd.f32 %v234, %v235
    %s237 = vtos %v236
    %v238 = vrcp.pop 4096.0
    %s239 = vtos %v238
    %s240 = smul.f32 %s237, %s239
    %v241 = vstv %s240
    %v242 = vsub.f32 %v160, %v241
    %v243 = vsub.f32 %v161, %v241
    %v244 = vsub.f32 %v162, %v241
    %v245 = vsub.f32 %v163, %v241
    %v246 = vmul.f32 %v242, %v242
    %v247 = vmul.f32 %v243, %v243
    %v248 = vmul.f32 %v244, %v244
    %v249 = vmul.f32 %v245, %v245
    %v250 = vadd.f32 %v246, %v247
    %v251 = vadd.f32 %v250, %v248
    %v252 = vadd.f32 %v251, %v249
    %253 = vadd.xlane.f32.xlu0 %v252
    %v254 = vpop.xlane.xlu0 %253
    %v255 = vrot.slane %v254, 4
    %v256 = vadd.f32 %v254, %v255
    %v257 = vrot.slane %v256, 2
    %v258 = vadd.f32 %v256, %v257
    %v259 = vrot.slane %v258, 1
    %v260 = vadd.f32 %v258, %v259
    %s261 = vtos %v260
    %v262 = vrcp.pop 4096.0
    %s263 = vtos %v262
    %s264 = smul.f32 %s261, %s263
    %s265 = sadd.f32 %s264, 1e-05
    %v266 = vstv %s265
    %v267 = vrsqrt.pop %v266
    %s268 = vtos %v267
    %v269 = vstv %s268
    %v270 = vmul.f32 %v242, %v269
    %v271 = vmul.f32 %v243, %v269
    %v272 = vmul.f32 %v244, %v269
    %v273 = vmul.f32 %v245, %v269
    %v274 = vstv %s224
    %v275 = vmul.f32 %v270, %v274
    %v276 = vmul.f32 %v271, %v274
    %v277 = vmul.f32 %v272, %v274
    %v278 = vmul.f32 %v273, %v274
    %v279 = vstv %s225
    %v280 = vadd.f32 %v275, %v279
    %v281 = vadd.f32 %v276, %v279
    %v282 = vadd.f32 %v277, %v279
    %v283 = vadd.f32 %v278, %v279
    %v284 = vlaneseq
    %v285 = vshrl.u32 %v284, 7
    %v286 = vadd.s32 %v285, 8
    %v287 = vadd.s32 %v285, 16
    %v288 = vadd.s32 %v285, 24
    %v289 = vadd.s32 %v285, 32
    %v290 = vadd.s32 %v285, 40
    %v291 = vadd.s32 %v285, 48
    %v292 = vadd.s32 %v285, 56
    %v293 = vadd.s32 %v285, 64
    %v294 = vadd.s32 %v285, 72
    %v295 = vadd.s32 %v285, 80
    %v296 = vadd.s32 %v285, 88
    %v297 = vadd.s32 %v285, 96
    %v298 = vadd.s32 %v285, 104
    %v299 = vadd.s32 %v285, 112
    %v300 = vadd.s32 %v285, 120
    %v301 = vlaneseq
    %v302 = vand.u32 %v301, 127
    %v303 = vsub.s32 %v302, 1
    %vm304 = vcmp.eq.s32.totalorder %v285, %v303
    %vm305 = vcmp.eq.s32.totalorder %v286, %v303
    %vm306 = vcmp.eq.s32.totalorder %v287, %v303
    %vm307 = vcmp.eq.s32.totalorder %v288, %v303
    %vm308 = vcmp.eq.s32.totalorder %v289, %v303
    %vm309 = vcmp.eq.s32.totalorder %v290, %v303
    %vm310 = vcmp.eq.s32.totalorder %v291, %v303
    %vm311 = vcmp.eq.s32.totalorder %v292, %v303
    %vm312 = vcmp.eq.s32.totalorder %v293, %v303
    %vm313 = vcmp.eq.s32.totalorder %v294, %v303
    %vm314 = vcmp.eq.s32.totalorder %v295, %v303
    %vm315 = vcmp.eq.s32.totalorder %v296, %v303
    %vm316 = vcmp.eq.s32.totalorder %v297, %v303
    %vm317 = vcmp.eq.s32.totalorder %v298, %v303
    %vm318 = vcmp.eq.s32.totalorder %v299, %v303
    %vm319 = vcmp.eq.s32.totalorder %v300, %v303
    %v320 = vsel %vm304, 1, 0
    %v321 = vsel %vm305, 1, 0
    %v322 = vsel %vm306, 1, 0
    %v323 = vsel %vm307, 1, 0
    %v324 = vsel %vm308, 1, 0
    %v325 = vsel %vm309, 1, 0
    %v326 = vsel %vm310, 1, 0
    %v327 = vsel %vm311, 1, 0
    %v328 = vsel %vm312, 1, 0
    %v329 = vsel %vm313, 1, 0
    %v330 = vsel %vm314, 1, 0
    %v331 = vsel %vm315, 1, 0
    %v332 = vsel %vm316, 1, 0
    %v333 = vsel %vm317, 1, 0
    %v334 = vsel %vm318, 1, 0
    %v335 = vsel %vm319, 1, 0
    %v336 = vcvt.s32.f32 %v320
    %v337 = vcvt.s32.f32 %v321
    %v338 = vcvt.s32.f32 %v322
    %v339 = vcvt.s32.f32 %v323
    %v340 = vcvt.s32.f32 %v324
    %v341 = vcvt.s32.f32 %v325
    %v342 = vcvt.s32.f32 %v326
    %v343 = vcvt.s32.f32 %v327
    %v344 = vcvt.s32.f32 %v328
    %v345 = vcvt.s32.f32 %v329
    %v346 = vcvt.s32.f32 %v330
    %v347 = vcvt.s32.f32 %v331
    %v348 = vcvt.s32.f32 %v332
    %v349 = vcvt.s32.f32 %v333
    %v350 = vcvt.s32.f32 %v334
    %v351 = vcvt.s32.f32 %v335
    %v352 = vadd.s32 %v302, 1
    %vm353 = vcmp.eq.s32.totalorder %v285, %v352
    %vm354 = vcmp.eq.s32.totalorder %v286, %v352
    %vm355 = vcmp.eq.s32.totalorder %v287, %v352
    %vm356 = vcmp.eq.s32.totalorder %v288, %v352
    %vm357 = vcmp.eq.s32.totalorder %v289, %v352
    %vm358 = vcmp.eq.s32.totalorder %v290, %v352
    %vm359 = vcmp.eq.s32.totalorder %v291, %v352
    %vm360 = vcmp.eq.s32.totalorder %v292, %v352
    %vm361 = vcmp.eq.s32.totalorder %v293, %v352
    %vm362 = vcmp.eq.s32.totalorder %v294, %v352
    %vm363 = vcmp.eq.s32.totalorder %v295, %v352
    %vm364 = vcmp.eq.s32.totalorder %v296, %v352
    %vm365 = vcmp.eq.s32.totalorder %v297, %v352
    %vm366 = vcmp.eq.s32.totalorder %v298, %v352
    %vm367 = vcmp.eq.s32.totalorder %v299, %v352
    %vm368 = vcmp.eq.s32.totalorder %v300, %v352
    %v369 = vsel %vm353, 1, 0
    %v370 = vsel %vm354, 1, 0
    %v371 = vsel %vm355, 1, 0
    %v372 = vsel %vm356, 1, 0
    %v373 = vsel %vm357, 1, 0
    %v374 = vsel %vm358, 1, 0
    %v375 = vsel %vm359, 1, 0
    %v376 = vsel %vm360, 1, 0
    %v377 = vsel %vm361, 1, 0
    %v378 = vsel %vm362, 1, 0
    %v379 = vsel %vm363, 1, 0
    %v380 = vsel %vm364, 1, 0
    %v381 = vsel %vm365, 1, 0
    %v382 = vsel %vm366, 1, 0
    %v383 = vsel %vm367, 1, 0
    %v384 = vsel %vm368, 1, 0
    %v385 = vcvt.s32.f32 %v369
    %v386 = vcvt.s32.f32 %v370
    %v387 = vcvt.s32.f32 %v371
    %v388 = vcvt.s32.f32 %v372
    %v389 = vcvt.s32.f32 %v373
    %v390 = vcvt.s32.f32 %v374
    %v391 = vcvt.s32.f32 %v375
    %v392 = vcvt.s32.f32 %v376
    %v393 = vcvt.s32.f32 %v377
    %v394 = vcvt.s32.f32 %v378
    %v395 = vcvt.s32.f32 %v379
    %v396 = vcvt.s32.f32 %v380
    %v397 = vcvt.s32.f32 %v381
    %v398 = vcvt.s32.f32 %v382
    %v399 = vcvt.s32.f32 %v383
    %v400 = vcvt.s32.f32 %v384
    %401 = vmatprep.subr.mxu0 0.0
    %402 = vmatpush1.msra.mxu0 %v351
    %403 = vmatprep.subr.mxu0 0.0
    %404 = vmatpush1.msra.mxu0 %v350
    %405 = vmatprep.subr.mxu0 0.0
    %406 = vmatpush1.msra.mxu0 %v349
    %407 = vmatprep.subr.mxu0 0.0
    %408 = vmatpush1.msra.mxu0 %v348
    %409 = vmatprep.subr.mxu0 0.0
    %410 = vmatpush1.msra.mxu0 %v347
    %411 = vmatprep.subr.mxu0 0.0
    %412 = vmatpush1.msra.mxu0 %v346
    %413 = vmatprep.subr.mxu0 0.0
    %414 = vmatpush1.msra.mxu0 %v345
    %415 = vmatprep.subr.mxu0 0.0
    %416 = vmatpush1.msra.mxu0 %v344
    %417 = vmatprep.subr.mxu0 0.0
    %418 = vmatpush1.msra.mxu0 %v343
    %419 = vmatprep.subr.mxu0 0.0
    %420 = vmatpush1.msra.mxu0 %v342
    %421 = vmatprep.subr.mxu0 0.0
    %422 = vmatpush1.msra.mxu0 %v341
    %423 = vmatprep.subr.mxu0 0.0
    %424 = vmatpush1.msra.mxu0 %v340
    %425 = vmatprep.subr.mxu0 0.0
    %426 = vmatpush1.msra.mxu0 %v339
    %427 = vmatprep.subr.mxu0 0.0
    %428 = vmatpush1.msra.mxu0 %v338
    %429 = vmatprep.subr.mxu0 0.0
    %430 = vmatpush1.msra.mxu0 %v337
    %431 = vmatprep.subr.mxu0 0.0
    %432 = vmatpush1.msra.mxu0 %v336
    %433 = vmatprep.subr.mxu0 0.0
    %434 = vmatpush2.msra.mxu0 0.0
    %435 = vmatprep.subr.mxu0 0.0
    %436 = vmatpush2.msra.mxu0 0.0
    %437 = vmatprep.subr.mxu0 0.0
    %438 = vmatpush2.msra.mxu0 0.0
    %439 = vmatprep.subr.mxu0 0.0
    %440 = vmatpush2.msra.mxu0 0.0
    %441 = vmatprep.subr.mxu0 0.0
    %442 = vmatpush2.msra.mxu0 0.0
    %443 = vmatprep.subr.mxu0 0.0
    %444 = vmatpush2.msra.mxu0 0.0
    %445 = vmatprep.subr.mxu0 0.0
    %446 = vmatpush2.msra.mxu0 0.0
    %447 = vmatprep.subr.mxu0 0.0
    %448 = vmatpush2.msra.mxu0 0.0
    %449 = vmatprep.subr.mxu0 0.0
    %450 = vmatpush2.msra.mxu0 0.0
    %451 = vmatprep.subr.mxu0 0.0
    %452 = vmatpush2.msra.mxu0 0.0
    %453 = vmatprep.subr.mxu0 0.0
    %454 = vmatpush2.msra.mxu0 0.0
    %455 = vmatprep.subr.mxu0 0.0
    %456 = vmatpush2.msra.mxu0 0.0
    %457 = vmatprep.subr.mxu0 0.0
    %458 = vmatpush2.msra.mxu0 0.0
    %459 = vmatprep.subr.mxu0 0.0
    %460 = vmatpush2.msra.mxu0 0.0
    %461 = vmatprep.subr.mxu0 0.0
    %462 = vmatpush2.msra.mxu0 0.0
    %463 = vmatprep.subr.mxu0 0.0
    %464 = vmatpush2.msra.mxu0 0.0
    %465 = vmatprep.mubr.f32.mxu0 0.0
    %466 = vmatmul.mubr.f32.gmra.mxu0 %v220
    %v467 = vpop.f32.mrf.mxu0
    %v468 = vadd.f32 0.0, %v467
    %v469 = vpop.f32.mrf.mxu0
    %470 = vmatprep.mubr.f32.mxu0 0.0
    %471 = vmatmul.mubr.f32.gmra.mxu0 %v221
    %v472 = vpop.f32.mrf.mxu0
    %v473 = vadd.f32 0.0, %v472
    %v474 = vpop.f32.mrf.mxu0
    %475 = vmatprep.mubr.f32.mxu0 0.0
    %476 = vmatmul.mubr.f32.gmra.mxu0 %v222
    %v477 = vpop.f32.mrf.mxu0
    %v478 = vadd.f32 0.0, %v477
    %v479 = vpop.f32.mrf.mxu0
    %480 = vmatprep.mubr.f32.mxu0 0.0
    %481 = vmatmul.mubr.f32.gmra.mxu0 %v223
    %v482 = vpop.f32.mrf.mxu0
    %v483 = vadd.f32 0.0, %v482
    %v484 = vpop.f32.mrf.mxu0
    %485 = vdwg.mxu0
    %486 = vmatprep.subr.mxu0 0.0
    %487 = vmatpush1.msra.mxu0 %v400
    %488 = vmatprep.subr.mxu0 0.0
    %489 = vmatpush1.msra.mxu0 %v399
    %490 = vmatprep.subr.mxu0 0.0
    %491 = vmatpush1.msra.mxu0 %v398
    %492 = vmatprep.subr.mxu0 0.0
    %493 = vmatpush1.msra.mxu0 %v397
    %494 = vmatprep.subr.mxu0 0.0
    %495 = vmatpush1.msra.mxu0 %v396
    %496 = vmatprep.subr.mxu0 0.0
    %497 = vmatpush1.msra.mxu0 %v395
    %498 = vmatprep.subr.mxu0 0.0
    %499 = vmatpush1.msra.mxu0 %v394
    %500 = vmatprep.subr.mxu0 0.0
    %501 = vmatpush1.msra.mxu0 %v393
    %502 = vmatprep.subr.mxu0 0.0
    %503 = vmatpush1.msra.mxu0 %v392
    %504 = vmatprep.subr.mxu0 0.0
    %505 = vmatpush1.msra.mxu0 %v391
    %506 = vmatprep.subr.mxu0 0.0
    %507 = vmatpush1.msra.mxu0 %v390
    %508 = vmatprep.subr.mxu0 0.0
    %509 = vmatpush1.msra.mxu0 %v389
    %510 = vmatprep.subr.mxu0 0.0
    %511 = vmatpush1.msra.mxu0 %v388
    %512 = vmatprep.subr.mxu0 0.0
    %513 = vmatpush1.msra.mxu0 %v387
    %514 = vmatprep.subr.mxu0 0.0
    %515 = vmatpush1.msra.mxu0 %v386
    %516 = vmatprep.subr.mxu0 0.0
    %517 = vmatpush1.msra.mxu0 %v385
    %518 = vmatprep.subr.mxu0 0.0
    %519 = vmatpush2.msra.mxu0 0.0
    %520 = vmatprep.subr.mxu0 0.0
    %521 = vmatpush2.msra.mxu0 0.0
    %522 = vmatprep.subr.mxu0 0.0
    %523 = vmatpush2.msra.mxu0 0.0
    %524 = vmatprep.subr.mxu0 0.0
    %525 = vmatpush2.msra.mxu0 0.0
    %526 = vmatprep.subr.mxu0 0.0
    %527 = vmatpush2.msra.mxu0 0.0
    %528 = vmatprep.subr.mxu0 0.0
    %529 = vmatpush2.msra.mxu0 0.0
    %530 = vmatprep.subr.mxu0 0.0
    %531 = vmatpush2.msra.mxu0 0.0
    %532 = vmatprep.subr.mxu0 0.0
    %533 = vmatpush2.msra.mxu0 0.0
    %534 = vmatprep.subr.mxu0 0.0
    %535 = vmatpush2.msra.mxu0 0.0
    %536 = vmatprep.subr.mxu0 0.0
    %537 = vmatpush2.msra.mxu0 0.0
    %538 = vmatprep.subr.mxu0 0.0
    %539 = vmatpush2.msra.mxu0 0.0
    %540 = vmatprep.subr.mxu0 0.0
    %541 = vmatpush2.msra.mxu0 0.0
    %542 = vmatprep.subr.mxu0 0.0
    %543 = vmatpush2.msra.mxu0 0.0
    %544 = vmatprep.subr.mxu0 0.0
    %545 = vmatpush2.msra.mxu0 0.0
    %546 = vmatprep.subr.mxu0 0.0
    %547 = vmatpush2.msra.mxu0 0.0
    %548 = vmatprep.subr.mxu0 0.0
    %549 = vmatpush2.msra.mxu0 0.0
    %550 = vmatprep.mubr.f32.mxu0 0.0
    %551 = vmatmul.mubr.f32.gmra.mxu0 %v220
    %v552 = vpop.f32.mrf.mxu0
    %v553 = vadd.f32 0.0, %v552
    %v554 = vpop.f32.mrf.mxu0
    %555 = vmatprep.mubr.f32.mxu0 0.0
    %556 = vmatmul.mubr.f32.gmra.mxu0 %v221
    %v557 = vpop.f32.mrf.mxu0
    %v558 = vadd.f32 0.0, %v557
    %v559 = vpop.f32.mrf.mxu0
    %560 = vmatprep.mubr.f32.mxu0 0.0
    %561 = vmatmul.mubr.f32.gmra.mxu0 %v222
    %v562 = vpop.f32.mrf.mxu0
    %v563 = vadd.f32 0.0, %v562
    %v564 = vpop.f32.mrf.mxu0
    %565 = vmatprep.mubr.f32.mxu0 0.0
    %566 = vmatmul.mubr.f32.gmra.mxu0 %v223
    %v567 = vpop.f32.mrf.mxu0
    %v568 = vadd.f32 0.0, %v567
    %v569 = vpop.f32.mrf.mxu0
    %570 = vdwg.mxu0
    %571 = vmatprep.subr.mxu0 0.0
    %572 = vmatpush1.msra.mxu0 %v351
    %573 = vmatprep.subr.mxu0 0.0
    %574 = vmatpush1.msra.mxu0 %v350
    %575 = vmatprep.subr.mxu0 0.0
    %576 = vmatpush1.msra.mxu0 %v349
    %577 = vmatprep.subr.mxu0 0.0
    %578 = vmatpush1.msra.mxu0 %v348
    %579 = vmatprep.subr.mxu0 0.0
    %580 = vmatpush1.msra.mxu0 %v347
    %581 = vmatprep.subr.mxu0 0.0
    %582 = vmatpush1.msra.mxu0 %v346
    %583 = vmatprep.subr.mxu0 0.0
    %584 = vmatpush1.msra.mxu0 %v345
    %585 = vmatprep.subr.mxu0 0.0
    %586 = vmatpush1.msra.mxu0 %v344
    %587 = vmatprep.subr.mxu0 0.0
    %588 = vmatpush1.msra.mxu0 %v343
    %589 = vmatprep.subr.mxu0 0.0
    %590 = vmatpush1.msra.mxu0 %v342
    %591 = vmatprep.subr.mxu0 0.0
    %592 = vmatpush1.msra.mxu0 %v341
    %593 = vmatprep.subr.mxu0 0.0
    %594 = vmatpush1.msra.mxu0 %v340
    %595 = vmatprep.subr.mxu0 0.0
    %596 = vmatpush1.msra.mxu0 %v339
    %597 = vmatprep.subr.mxu0 0.0
    %598 = vmatpush1.msra.mxu0 %v338
    %599 = vmatprep.subr.mxu0 0.0
    %600 = vmatpush1.msra.mxu0 %v337
    %601 = vmatprep.subr.mxu0 0.0
    %602 = vmatpush1.msra.mxu0 %v336
    %603 = vmatprep.subr.mxu0 0.0
    %604 = vmatpush2.msra.mxu0 0.0
    %605 = vmatprep.subr.mxu0 0.0
    %606 = vmatpush2.msra.mxu0 0.0
    %607 = vmatprep.subr.mxu0 0.0
    %608 = vmatpush2.msra.mxu0 0.0
    %609 = vmatprep.subr.mxu0 0.0
    %610 = vmatpush2.msra.mxu0 0.0
    %611 = vmatprep.subr.mxu0 0.0
    %612 = vmatpush2.msra.mxu0 0.0
    %613 = vmatprep.subr.mxu0 0.0
    %614 = vmatpush2.msra.mxu0 0.0
    %615 = vmatprep.subr.mxu0 0.0
    %616 = vmatpush2.msra.mxu0 0.0
    %617 = vmatprep.subr.mxu0 0.0
    %618 = vmatpush2.msra.mxu0 0.0
    %619 = vmatprep.subr.mxu0 0.0
    %620 = vmatpush2.msra.mxu0 0.0
    %621 = vmatprep.subr.mxu0 0.0
    %622 = vmatpush2.msra.mxu0 0.0
    %623 = vmatprep.subr.mxu0 0.0
    %624 = vmatpush2.msra.mxu0 0.0
    %625 = vmatprep.subr.mxu0 0.0
    %626 = vmatpush2.msra.mxu0 0.0
    %627 = vmatprep.subr.mxu0 0.0
    %628 = vmatpush2.msra.mxu0 0.0
    %629 = vmatprep.subr.mxu0 0.0
    %630 = vmatpush2.msra.mxu0 0.0
    %631 = vmatprep.subr.mxu0 0.0
    %632 = vmatpush2.msra.mxu0 0.0
    %633 = vmatprep.subr.mxu0 0.0
    %634 = vmatpush2.msra.mxu0 0.0
    %635 = vmatprep.mubr.f32.mxu0 0.0
    %636 = vmatmul.mubr.f32.gmra.mxu0 %v280
    %v637 = vpop.f32.mrf.mxu0
    %v638 = vadd.f32 0.0, %v637
    %v639 = vpop.f32.mrf.mxu0
    %640 = vmatprep.mubr.f32.mxu0 0.0
    %641 = vmatmul.mubr.f32.gmra.mxu0 %v281
    %v642 = vpop.f32.mrf.mxu0
    %v643 = vadd.f32 0.0, %v642
    %v644 = vpop.f32.mrf.mxu0
    %645 = vmatprep.mubr.f32.mxu0 0.0
    %646 = vmatmul.mubr.f32.gmra.mxu0 %v282
    %v647 = vpop.f32.mrf.mxu0
    %v648 = vadd.f32 0.0, %v647
    %v649 = vpop.f32.mrf.mxu0
    %650 = vmatprep.mubr.f32.mxu0 0.0
    %651 = vmatmul.mubr.f32.gmra.mxu0 %v283
    %v652 = vpop.f32.mrf.mxu0
    %v653 = vadd.f32 0.0, %v652
    %v654 = vpop.f32.mrf.mxu0
    %655 = vdwg.mxu0
    %656 = vmatprep.subr.mxu0 0.0
    %657 = vmatpush1.msra.mxu0 %v400
    %658 = vmatprep.subr.mxu0 0.0
    %659 = vmatpush1.msra.mxu0 %v399
    %660 = vmatprep.subr.mxu0 0.0
    %661 = vmatpush1.msra.mxu0 %v398
    %662 = vmatprep.subr.mxu0 0.0
    %663 = vmatpush1.msra.mxu0 %v397
    %664 = vmatprep.subr.mxu0 0.0
    %665 = vmatpush1.msra.mxu0 %v396
    %666 = vmatprep.subr.mxu0 0.0
    %667 = vmatpush1.msra.mxu0 %v395
    %668 = vmatprep.subr.mxu0 0.0
    %669 = vmatpush1.msra.mxu0 %v394
    %670 = vmatprep.subr.mxu0 0.0
    %671 = vmatpush1.msra.mxu0 %v393
    %672 = vmatprep.subr.mxu0 0.0
    %673 = vmatpush1.msra.mxu0 %v392
    %674 = vmatprep.subr.mxu0 0.0
    %675 = vmatpush1.msra.mxu0 %v391
    %676 = vmatprep.subr.mxu0 0.0
    %677 = vmatpush1.msra.mxu0 %v390
    %678 = vmatprep.subr.mxu0 0.0
    %679 = vmatpush1.msra.mxu0 %v389
    %680 = vmatprep.subr.mxu0 0.0
    %681 = vmatpush1.msra.mxu0 %v388
    %682 = vmatprep.subr.mxu0 0.0
    %683 = vmatpush1.msra.mxu0 %v387
    %684 = vmatprep.subr.mxu0 0.0
    %685 = vmatpush1.msra.mxu0 %v386
    %686 = vmatprep.subr.mxu0 0.0
    %687 = vmatpush1.msra.mxu0 %v385
    %688 = vmatprep.subr.mxu0 0.0
    %689 = vmatpush2.msra.mxu0 0.0
    %690 = vmatprep.subr.mxu0 0.0
    %691 = vmatpush2.msra.mxu0 0.0
    %692 = vmatprep.subr.mxu0 0.0
    %693 = vmatpush2.msra.mxu0 0.0
    %694 = vmatprep.subr.mxu0 0.0
    %695 = vmatpush2.msra.mxu0 0.0
    %696 = vmatprep.subr.mxu0 0.0
    %697 = vmatpush2.msra.mxu0 0.0
    %698 = vmatprep.subr.mxu0 0.0
    %699 = vmatpush2.msra.mxu0 0.0
    %700 = vmatprep.subr.mxu0 0.0
    %701 = vmatpush2.msra.mxu0 0.0
    %702 = vmatprep.subr.mxu0 0.0
    %703 = vmatpush2.msra.mxu0 0.0
    %704 = vmatprep.subr.mxu0 0.0
    %705 = vmatpush2.msra.mxu0 0.0
    %706 = vmatprep.subr.mxu0 0.0
    %707 = vmatpush2.msra.mxu0 0.0
    %708 = vmatprep.subr.mxu0 0.0
    %709 = vmatpush2.msra.mxu0 0.0
    %710 = vmatprep.subr.mxu0 0.0
    %711 = vmatpush2.msra.mxu0 0.0
    %712 = vmatprep.subr.mxu0 0.0
    %713 = vmatpush2.msra.mxu0 0.0
    %714 = vmatprep.subr.mxu0 0.0
    %715 = vmatpush2.msra.mxu0 0.0
    %716 = vmatprep.subr.mxu0 0.0
    %717 = vmatpush2.msra.mxu0 0.0
    %718 = vmatprep.subr.mxu0 0.0
    %719 = vmatpush2.msra.mxu0 0.0
    %720 = vmatprep.mubr.f32.mxu0 0.0
    %721 = vmatmul.mubr.f32.gmra.mxu0 %v280
    %v722 = vpop.f32.mrf.mxu0
    %v723 = vadd.f32 0.0, %v722
    %v724 = vpop.f32.mrf.mxu0
    %725 = vmatprep.mubr.f32.mxu0 0.0
    %726 = vmatmul.mubr.f32.gmra.mxu0 %v281
    %v727 = vpop.f32.mrf.mxu0
    %v728 = vadd.f32 0.0, %v727
    %v729 = vpop.f32.mrf.mxu0
    %730 = vmatprep.mubr.f32.mxu0 0.0
    %731 = vmatmul.mubr.f32.gmra.mxu0 %v282
    %v732 = vpop.f32.mrf.mxu0
    %v733 = vadd.f32 0.0, %v732
    %v734 = vpop.f32.mrf.mxu0
    %735 = vmatprep.mubr.f32.mxu0 0.0
    %736 = vmatmul.mubr.f32.gmra.mxu0 %v283
    %v737 = vpop.f32.mrf.mxu0
    %v738 = vadd.f32 0.0, %v737
    %v739 = vpop.f32.mrf.mxu0
    %740 = vdwg.mxu0
    %s741 = sld [smem:[#allocation11]]
    %v742 = vstv %s741
    %v743 = vadd.f32 %v742, 0.0
    %s744 = sld [smem:[#allocation9]]
    %v745 = vstv %s744
    %v746 = vmul.f32 %v745, %v468
    %v747 = vmul.f32 %v745, %v473
    %v748 = vmul.f32 %v745, %v478
    %v749 = vmul.f32 %v745, %v483
    %v750 = vadd.f32 %v743, %v746
    %v751 = vadd.f32 %v743, %v747
    %v752 = vadd.f32 %v743, %v748
    %v753 = vadd.f32 %v743, %v749
    %s754 = sld [smem:[#allocation9 + $0x1]]
    %v755 = vstv %s754
    %v756 = vmul.f32 %v755, %v220
    %v757 = vmul.f32 %v755, %v221
    %v758 = vmul.f32 %v755, %v222
    %v759 = vmul.f32 %v755, %v223
    %v760 = vadd.f32 %v750, %v756
    %v761 = vadd.f32 %v751, %v757
    %v762 = vadd.f32 %v752, %v758
    %v763 = vadd.f32 %v753, %v759
    %s764 = sld [smem:[#allocation9 + $0x2]]
    %v765 = vstv %s764
    %v766 = vmul.f32 %v765, %v553
    %v767 = vmul.f32 %v765, %v558
    %v768 = vmul.f32 %v765, %v563
    %v769 = vmul.f32 %v765, %v568
    %v770 = vadd.f32 %v760, %v766
    %v771 = vadd.f32 %v761, %v767
    %v772 = vadd.f32 %v762, %v768
    %v773 = vadd.f32 %v763, %v769
    %s774 = sld [smem:[#allocation9 + $0x3]]
    %v775 = vstv %s774
    %v776 = vmul.f32 %v775, %v638
    %v777 = vmul.f32 %v775, %v643
    %v778 = vmul.f32 %v775, %v648
    %v779 = vmul.f32 %v775, %v653
    %v780 = vadd.f32 %v770, %v776
    %v781 = vadd.f32 %v771, %v777
    %v782 = vadd.f32 %v772, %v778
    %v783 = vadd.f32 %v773, %v779
    %s784 = sld [smem:[#allocation9 + $0x4]]
    %v785 = vstv %s784
    %v786 = vmul.f32 %v785, %v280
    %v787 = vmul.f32 %v785, %v281
    %v788 = vmul.f32 %v785, %v282
    %v789 = vmul.f32 %v785, %v283
    %v790 = vadd.f32 %v780, %v786
    %v791 = vadd.f32 %v781, %v787
    %v792 = vadd.f32 %v782, %v788
    %v793 = vadd.f32 %v783, %v789
    %s794 = sld [smem:[#allocation9 + $0x5]]
    %v795 = vstv %s794
    %v796 = vmul.f32 %v795, %v723
    %v797 = vmul.f32 %v795, %v728
    %v798 = vmul.f32 %v795, %v733
    %v799 = vmul.f32 %v795, %v738
    %v800 = vadd.f32 %v790, %v796
    %v801 = vadd.f32 %v791, %v797
    %v802 = vadd.f32 %v792, %v798
    %v803 = vadd.f32 %v793, %v799
    %v804 = vadd.f32 %v800, %v801
    %v805 = vadd.f32 %v804, %v802
    %v806 = vadd.f32 %v805, %v803
    %807 = vadd.xlane.f32.xlu0 %v806
    %v808 = vpop.xlane.xlu0 %807
    %v809 = vrot.slane %v808, 4
    %v810 = vadd.f32 %v808, %v809
    %v811 = vrot.slane %v810, 2
    %v812 = vadd.f32 %v810, %v811
    %v813 = vrot.slane %v812, 1
    %v814 = vadd.f32 %v812, %v813
    %s815 = vtos %v814
    %v816 = vrcp.pop 4096.0
    %s817 = vtos %v816
    %s818 = smul.f32 %s815, %s817
    %v819 = vstv %s818
    %v820 = vsub.f32 %v800, %v819
    %v821 = vsub.f32 %v801, %v819
    %v822 = vsub.f32 %v802, %v819
    %v823 = vsub.f32 %v803, %v819
    %v824 = vmul.f32 %v820, %v820
    %v825 = vmul.f32 %v821, %v821
    %v826 = vmul.f32 %v822, %v822
    %v827 = vmul.f32 %v823, %v823
    %v828 = vadd.f32 %v824, %v825
    %v829 = vadd.f32 %v828, %v826
    %v830 = vadd.f32 %v829, %v827
    %831 = vadd.xlane.f32.xlu0 %v830
    %v832 = vpop.xlane.xlu0 %831
    %v833 = vrot.slane %v832, 4
    %v834 = vadd.f32 %v832, %v833
    %v835 = vrot.slane %v834, 2
    %v836 = vadd.f32 %v834, %v835
    %v837 = vrot.slane %v836, 1
    %v838 = vadd.f32 %v836, %v837
    %s839 = vtos %v838
    %v840 = vrcp.pop 4096.0
    %s841 = vtos %v840
    %s842 = smul.f32 %s839, %s841
    %s843 = sadd.f32 %s842, 1e-05
    %v844 = vstv %s843
    %v845 = vrsqrt.pop %v844
    %s846 = vtos %v845
    %v847 = vstv %s846
    %v848 = vmul.f32 %v820, %v847
    %v849 = vmul.f32 %v821, %v847
    %v850 = vmul.f32 %v822, %v847
    %v851 = vmul.f32 %v823, %v847
    %s852 = sld [smem:[#allocation12]]
    %v853 = vstv %s852
    %v854 = vmul.f32 %v848, %v853
    %v855 = vmul.f32 %v849, %v853
    %v856 = vmul.f32 %v850, %v853
    %v857 = vmul.f32 %v851, %v853
    %s858 = sld [smem:[#allocation14]]
    %v859 = vstv %s858
    %v860 = vadd.f32 %v854, %v859
    %v861 = vadd.f32 %v855, %v859
    %v862 = vadd.f32 %v856, %v859
    %v863 = vadd.f32 %v857, %v859
    %v864 = vmax.f32 %v860, 0.0
    %v865 = vmax.f32 %v861, 0.0
    %v866 = vmax.f32 %v862, 0.0
    %v867 = vmax.f32 %v863, 0.0
    %868 = vst [vmem:[#allocation2] sm:$0xff] %v864
    %869 = vst [vmem:[#allocation2 + $0x40] sm:$0xff] %v865
    %870 = vst [vmem:[#allocation2 + $0x80] sm:$0xff] %v866
    %871 = vst [vmem:[#allocation2 + $0xc0] sm:$0xff] %v867
    %s872 = sld [smem:[#allocation11 + $0x1]]
    %v873 = vstv %s872
    %v874 = vadd.f32 %v873, 0.0
    %s875 = sld [smem:[#allocation9 + $0x6]]
    %v876 = vstv %s875
    %v877 = vmul.f32 %v876, %v468
    %v878 = vmul.f32 %v876, %v473
    %v879 = vmul.f32 %v876, %v478
    %v880 = vmul.f32 %v876, %v483
    %v881 = vadd.f32 %v874, %v877
    %v882 = vadd.f32 %v874, %v878
    %v883 = vadd.f32 %v874, %v879
    %v884 = vadd.f32 %v874, %v880
    %s885 = sld [smem:[#allocation9 + $0x7]]
    %v886 = vstv %s885
    %v887 = vmul.f32 %v886, %v220
    %v888 = vmul.f32 %v886, %v221
    %v889 = vmul.f32 %v886, %v222
    %v890 = vmul.f32 %v886, %v223
    %v891 = vadd.f32 %v881, %v887
    %v892 = vadd.f32 %v882, %v888
    %v893 = vadd.f32 %v883, %v889
    %v894 = vadd.f32 %v884, %v890
    %s895 = sld [smem:[#allocation9 + $0x8]]
    %v896 = vstv %s895
    %v897 = vmul.f32 %v896, %v553
    %v898 = vmul.f32 %v896, %v558
    %v899 = vmul.f32 %v896, %v563
    %v900 = vmul.f32 %v896, %v568
    %v901 = vadd.f32 %v891, %v897
    %v902 = vadd.f32 %v892, %v898
    %v903 = vadd.f32 %v893, %v899
    %v904 = vadd.f32 %v894, %v900
    %s905 = sld [smem:[#allocation9 + $0x9]]
    %v906 = vstv %s905
    %v907 = vmul.f32 %v906, %v638
    %v908 = vmul.f32 %v906, %v643
    %v909 = vmul.f32 %v906, %v648
    %v910 = vmul.f32 %v906, %v653
    %v911 = vadd.f32 %v901, %v907
    %v912 = vadd.f32 %v902, %v908
    %v913 = vadd.f32 %v903, %v909
    %v914 = vadd.f32 %v904, %v910
    %s915 = sld [smem:[#allocation9 + $0xa]]
    %v916 = vstv %s915
    %v917 = vmul.f32 %v916, %v280
    %v918 = vmul.f32 %v916, %v281
    %v919 = vmul.f32 %v916, %v282
    %v920 = vmul.f32 %v916, %v283
    %v921 = vadd.f32 %v911, %v917
    %v922 = vadd.f32 %v912, %v918
    %v923 = vadd.f32 %v913, %v919
    %v924 = vadd.f32 %v914, %v920
    %s925 = sld [smem:[#allocation9 + $0xb]]
    %v926 = vstv %s925
    %v927 = vmul.f32 %v926, %v723
    %v928 = vmul.f32 %v926, %v728
    %v929 = vmul.f32 %v926, %v733
    %v930 = vmul.f32 %v926, %v738
    %v931 = vadd.f32 %v921, %v927
    %v932 = vadd.f32 %v922, %v928
    %v933 = vadd.f32 %v923, %v929
    %v934 = vadd.f32 %v924, %v930
    %v935 = vadd.f32 %v931, %v932
    %v936 = vadd.f32 %v935, %v933
    %v937 = vadd.f32 %v936, %v934
    %938 = vadd.xlane.f32.xlu0 %v937
    %v939 = vpop.xlane.xlu0 %938
    %v940 = vrot.slane %v939, 4
    %v941 = vadd.f32 %v939, %v940
    %v942 = vrot.slane %v941, 2
    %v943 = vadd.f32 %v941, %v942
    %v944 = vrot.slane %v943, 1
    %v945 = vadd.f32 %v943, %v944
    %s946 = vtos %v945
    %v947 = vrcp.pop 4096.0
    %s948 = vtos %v947
    %s949 = smul.f32 %s946, %s948
    %v950 = vstv %s949
    %v951 = vsub.f32 %v931, %v950
    %v952 = vsub.f32 %v932, %v950
    %v953 = vsub.f32 %v933, %v950
    %v954 = vsub.f32 %v934, %v950
    %v955 = vmul.f32 %v951, %v951
    %v956 = vmul.f32 %v952, %v952
    %v957 = vmul.f32 %v953, %v953
    %v958 = vmul.f32 %v954, %v954
    %v959 = vadd.f32 %v955, %v956
    %v960 = vadd.f32 %v959, %v957
    %v961 = vadd.f32 %v960, %v958
    %962 = vadd.xlane.f32.xlu0 %v961
    %v963 = vpop.xlane.xlu0 %962
    %v964 = vrot.slane %v963, 4
    %v965 = vadd.f32 %v963, %v964
    %v966 = vrot.slane %v965, 2
    %v967 = vadd.f32 %v965, %v966
    %v968 = vrot.slane %v967, 1
    %v969 = vadd.f32 %v967, %v968
    %s970 = vtos %v969
    %v971 = vrcp.pop 4096.0
    %s972 = vtos %v971
    %s973 = smul.f32 %s970, %s972
    %s974 = sadd.f32 %s973, 1e-05
    %v975 = vstv %s974
    %v976 = vrsqrt.pop %v975
    %s977 = vtos %v976
    %v978 = vstv %s977
    %v979 = vmul.f32 %v951, %v978
    %v980 = vmul.f32 %v952, %v978
    %v981 = vmul.f32 %v953, %v978
    %v982 = vmul.f32 %v954, %v978
    %s983 = sld [smem:[#allocation12 + $0x1]]
    %v984 = vstv %s983
    %v985 = vmul.f32 %v979, %v984
    %v986 = vmul.f32 %v980, %v984
    %v987 = vmul.f32 %v981, %v984
    %v988 = vmul.f32 %v982, %v984
    %s989 = sld [smem:[#allocation14 + $0x1]]
    %v990 = vstv %s989
    %v991 = vadd.f32 %v985, %v990
    %v992 = vadd.f32 %v986, %v990
    %v993 = vadd.f32 %v987, %v990
    %v994 = vadd.f32 %v988, %v990
    %v995 = vmax.f32 %v991, 0.0
    %v996 = vmax.f32 %v992, 0.0
    %v997 = vmax.f32 %v993, 0.0
    %v998 = vmax.f32 %v994, 0.0
    %999 = vst [vmem:[#allocation2 + $0x8] sm:$0xff] %v995
    %1000 = vst [vmem:[#allocation2 + $0x48] sm:$0xff] %v996
    %1001 = vst [vmem:[#allocation2 + $0x88] sm:$0xff] %v997
    %1002 = vst [vmem:[#allocation2 + $0xc8] sm:$0xff] %v998
    %s1003 = sld [smem:[#allocation11 + $0x2]]
    %v1004 = vstv %s1003
    %v1005 = vadd.f32 %v1004, 0.0
    %s1006 = sld [smem:[#allocation9 + $0xc]]
    %v1007 = vstv %s1006
    %v1008 = vmul.f32 %v1007, %v468
    %v1009 = vmul.f32 %v1007, %v473
    %v1010 = vmul.f32 %v1007, %v478
    %v1011 = vmul.f32 %v1007, %v483
    %v1012 = vadd.f32 %v1005, %v1008
    %v1013 = vadd.f32 %v1005, %v1009
    %v1014 = vadd.f32 %v1005, %v1010
    %v1015 = vadd.f32 %v1005, %v1011
    %s1016 = sld [smem:[#allocation9 + $0xd]]
    %v1017 = vstv %s1016
    %v1018 = vmul.f32 %v1017, %v220
    %v1019 = vmul.f32 %v1017, %v221
    %v1020 = vmul.f32 %v1017, %v222
    %v1021 = vmul.f32 %v1017, %v223
    %v1022 = vadd.f32 %v1012, %v1018
    %v1023 = vadd.f32 %v1013, %v1019
    %v1024 = vadd.f32 %v1014, %v1020
    %v1025 = vadd.f32 %v1015, %v1021
    %s1026 = sld [smem:[#allocation9 + $0xe]]
    %v1027 = vstv %s1026
    %v1028 = vmul.f32 %v1027, %v553
    %v1029 = vmul.f32 %v1027, %v558
    %v1030 = vmul.f32 %v1027, %v563
    %v1031 = vmul.f32 %v1027, %v568
    %v1032 = vadd.f32 %v1022, %v1028
    %v1033 = vadd.f32 %v1023, %v1029
    %v1034 = vadd.f32 %v1024, %v1030
    %v1035 = vadd.f32 %v1025, %v1031
    %s1036 = sld [smem:[#allocation9 + $0xf]]
    %v1037 = vstv %s1036
    %v1038 = vmul.f32 %v1037, %v638
    %v1039 = vmul.f32 %v1037, %v643
    %v1040 = vmul.f32 %v1037, %v648
    %v1041 = vmul.f32 %v1037, %v653
    %v1042 = vadd.f32 %v1032, %v1038
    %v1043 = vadd.f32 %v1033, %v1039
    %v1044 = vadd.f32 %v1034, %v1040
    %v1045 = vadd.f32 %v1035, %v1041
    %s1046 = sld [smem:[#allocation9 + $0x10]]
    %v1047 = vstv %s1046
    %v1048 = vmul.f32 %v1047, %v280
    %v1049 = vmul.f32 %v1047, %v281
    %v1050 = vmul.f32 %v1047, %v282
    %v1051 = vmul.f32 %v1047, %v283
    %v1052 = vadd.f32 %v1042, %v1048
    %v1053 = vadd.f32 %v1043, %v1049
    %v1054 = vadd.f32 %v1044, %v1050
    %v1055 = vadd.f32 %v1045, %v1051
    %s1056 = sld [smem:[#allocation9 + $0x11]]
    %v1057 = vstv %s1056
    %v1058 = vmul.f32 %v1057, %v723
    %v1059 = vmul.f32 %v1057, %v728
    %v1060 = vmul.f32 %v1057, %v733
    %v1061 = vmul.f32 %v1057, %v738
    %v1062 = vadd.f32 %v1052, %v1058
    %v1063 = vadd.f32 %v1053, %v1059
    %v1064 = vadd.f32 %v1054, %v1060
    %v1065 = vadd.f32 %v1055, %v1061
    %v1066 = vadd.f32 %v1062, %v1063
    %v1067 = vadd.f32 %v1066, %v1064
    %v1068 = vadd.f32 %v1067, %v1065
    %1069 = vadd.xlane.f32.xlu0 %v1068
    %v1070 = vpop.xlane.xlu0 %1069
    %v1071 = vrot.slane %v1070, 4
    %v1072 = vadd.f32 %v1070, %v1071
    %v1073 = vrot.slane %v1072, 2
    %v1074 = vadd.f32 %v1072, %v1073
    %v1075 = vrot.slane %v1074, 1
    %v1076 = vadd.f32 %v1074, %v1075
    %s1077 = vtos %v1076
    %v1078 = vrcp.pop 4096.0
    %s1079 = vtos %v1078
    %s1080 = smul.f32 %s1077, %s1079
    %v1081 = vstv %s1080
    %v1082 = vsub.f32 %v1062, %v1081
    %v1083 = vsub.f32 %v1063, %v1081
    %v1084 = vsub.f32 %v1064, %v1081
    %v1085 = vsub.f32 %v1065, %v1081
    %v1086 = vmul.f32 %v1082, %v1082
    %v1087 = vmul.f32 %v1083, %v1083
    %v1088 = vmul.f32 %v1084, %v1084
    %v1089 = vmul.f32 %v1085, %v1085
    %v1090 = vadd.f32 %v1086, %v1087
    %v1091 = vadd.f32 %v1090, %v1088
    %v1092 = vadd.f32 %v1091, %v1089
    %1093 = vadd.xlane.f32.xlu0 %v1092
    %v1094 = vpop.xlane.xlu0 %1093
    %v1095 = vrot.slane %v1094, 4
    %v1096 = vadd.f32 %v1094, %v1095
    %v1097 = vrot.slane %v1096, 2
    %v1098 = vadd.f32 %v1096, %v1097
    %v1099 = vrot.slane %v1098, 1
    %v1100 = vadd.f32 %v1098, %v1099
    %s1101 = vtos %v1100
    %v1102 = vrcp.pop 4096.0
    %s1103 = vtos %v1102
    %s1104 = smul.f32 %s1101, %s1103
    %s1105 = sadd.f32 %s1104, 1e-05
    %v1106 = vstv %s1105
    %v1107 = vrsqrt.pop %v1106
    %s1108 = vtos %v1107
    %v1109 = vstv %s1108
    %v1110 = vmul.f32 %v1082, %v1109
    %v1111 = vmul.f32 %v1083, %v1109
    %v1112 = vmul.f32 %v1084, %v1109
    %v1113 = vmul.f32 %v1085, %v1109
    %s1114 = sld [smem:[#allocation12 + $0x2]]
    %v1115 = vstv %s1114
    %v1116 = vmul.f32 %v1110, %v1115
    %v1117 = vmul.f32 %v1111, %v1115
    %v1118 = vmul.f32 %v1112, %v1115
    %v1119 = vmul.f32 %v1113, %v1115
    %s1120 = sld [smem:[#allocation14 + $0x2]]
    %v1121 = vstv %s1120
    %v1122 = vadd.f32 %v1116, %v1121
    %v1123 = vadd.f32 %v1117, %v1121
    %v1124 = vadd.f32 %v1118, %v1121
    %v1125 = vadd.f32 %v1119, %v1121
    %v1126 = vmax.f32 %v1122, 0.0
    %v1127 = vmax.f32 %v1123, 0.0
    %v1128 = vmax.f32 %v1124, 0.0
    %v1129 = vmax.f32 %v1125, 0.0
    %1130 = vst [vmem:[#allocation2 + $0x10] sm:$0xff] %v1126
    %1131 = vst [vmem:[#allocation2 + $0x50] sm:$0xff] %v1127
    %1132 = vst [vmem:[#allocation2 + $0x90] sm:$0xff] %v1128
    %1133 = vst [vmem:[#allocation2 + $0xd0] sm:$0xff] %v1129
    %s1134 = sld [smem:[#allocation11 + $0x3]]
    %v1135 = vstv %s1134
    %v1136 = vadd.f32 %v1135, 0.0
    %s1137 = sld [smem:[#allocation9 + $0x12]]
    %v1138 = vstv %s1137
    %v1139 = vmul.f32 %v1138, %v468
    %v1140 = vmul.f32 %v1138, %v473
    %v1141 = vmul.f32 %v1138, %v478
    %v1142 = vmul.f32 %v1138, %v483
    %v1143 = vadd.f32 %v1136, %v1139
    %v1144 = vadd.f32 %v1136, %v1140
    %v1145 = vadd.f32 %v1136, %v1141
    %v1146 = vadd.f32 %v1136, %v1142
    %s1147 = sld [smem:[#allocation9 + $0x13]]
    %v1148 = vstv %s1147
    %v1149 = vmul.f32 %v1148, %v220
    %v1150 = vmul.f32 %v1148, %v221
    %v1151 = vmul.f32 %v1148, %v222
    %v1152 = vmul.f32 %v1148, %v223
    %v1153 = vadd.f32 %v1143, %v1149
    %v1154 = vadd.f32 %v1144, %v1150
    %v1155 = vadd.f32 %v1145, %v1151
    %v1156 = vadd.f32 %v1146, %v1152
    %s1157 = sld [smem:[#allocation9 + $0x14]]
    %v1158 = vstv %s1157
    %v1159 = vmul.f32 %v1158, %v553
    %v1160 = vmul.f32 %v1158, %v558
    %v1161 = vmul.f32 %v1158, %v563
    %v1162 = vmul.f32 %v1158, %v568
    %v1163 = vadd.f32 %v1153, %v1159
    %v1164 = vadd.f32 %v1154, %v1160
    %v1165 = vadd.f32 %v1155, %v1161
    %v1166 = vadd.f32 %v1156, %v1162
    %s1167 = sld [smem:[#allocation9 + $0x15]]
    %v1168 = vstv %s1167
    %v1169 = vmul.f32 %v1168, %v638
    %v1170 = vmul.f32 %v1168, %v643
    %v1171 = vmul.f32 %v1168, %v648
    %v1172 = vmul.f32 %v1168, %v653
    %v1173 = vadd.f32 %v1163, %v1169
    %v1174 = vadd.f32 %v1164, %v1170
    %v1175 = vadd.f32 %v1165, %v1171
    %v1176 = vadd.f32 %v1166, %v1172
    %s1177 = sld [smem:[#allocation9 + $0x16]]
    %v1178 = vstv %s1177
    %v1179 = vmul.f32 %v1178, %v280
    %v1180 = vmul.f32 %v1178, %v281
    %v1181 = vmul.f32 %v1178, %v282
    %v1182 = vmul.f32 %v1178, %v283
    %v1183 = vadd.f32 %v1173, %v1179
    %v1184 = vadd.f32 %v1174, %v1180
    %v1185 = vadd.f32 %v1175, %v1181
    %v1186 = vadd.f32 %v1176, %v1182
    %s1187 = sld [smem:[#allocation9 + $0x17]]
    %v1188 = vstv %s1187
    %v1189 = vmul.f32 %v1188, %v723
    %v1190 = vmul.f32 %v1188, %v728
    %v1191 = vmul.f32 %v1188, %v733
    %v1192 = vmul.f32 %v1188, %v738
    %v1193 = vadd.f32 %v1183, %v1189
    %v1194 = vadd.f32 %v1184, %v1190
    %v1195 = vadd.f32 %v1185, %v1191
    %v1196 = vadd.f32 %v1186, %v1192
    %v1197 = vadd.f32 %v1193, %v1194
    %v1198 = vadd.f32 %v1197, %v1195
    %v1199 = vadd.f32 %v1198, %v1196
    %1200 = vadd.xlane.f32.xlu0 %v1199
    %v1201 = vpop.xlane.xlu0 %1200
    %v1202 = vrot.slane %v1201, 4
    %v1203 = vadd.f32 %v1201, %v1202
    %v1204 = vrot.slane %v1203, 2
    %v1205 = vadd.f32 %v1203, %v1204
    %v1206 = vrot.slane %v1205, 1
    %v1207 = vadd.f32 %v1205, %v1206
    %s1208 = vtos %v1207
    %v1209 = vrcp.pop 4096.0
    %s1210 = vtos %v1209
    %s1211 = smul.f32 %s1208, %s1210
    %v1212 = vstv %s1211
    %v1213 = vsub.f32 %v1193, %v1212
    %v1214 = vsub.f32 %v1194, %v1212
    %v1215 = vsub.f32 %v1195, %v1212
    %v1216 = vsub.f32 %v1196, %v1212
    %v1217 = vmul.f32 %v1213, %v1213
    %v1218 = vmul.f32 %v1214, %v1214
    %v1219 = vmul.f32 %v1215, %v1215
    %v1220 = vmul.f32 %v1216, %v1216
    %v1221 = vadd.f32 %v1217, %v1218
    %v1222 = vadd.f32 %v1221, %v1219
    %v1223 = vadd.f32 %v1222, %v1220
    %1224 = vadd.xlane.f32.xlu0 %v1223
    %v1225 = vpop.xlane.xlu0 %1224
    %v1226 = vrot.slane %v1225, 4
    %v1227 = vadd.f32 %v1225, %v1226
    %v1228 = vrot.slane %v1227, 2
    %v1229 = vadd.f32 %v1227, %v1228
    %v1230 = vrot.slane %v1229, 1
    %v1231 = vadd.f32 %v1229, %v1230
    %s1232 = vtos %v1231
    %v1233 = vrcp.pop 4096.0
    %s1234 = vtos %v1233
    %s1235 = smul.f32 %s1232, %s1234
    %s1236 = sadd.f32 %s1235, 1e-05
    %v1237 = vstv %s1236
    %v1238 = vrsqrt.pop %v1237
    %s1239 = vtos %v1238
    %v1240 = vstv %s1239
    %v1241 = vmul.f32 %v1213, %v1240
    %v1242 = vmul.f32 %v1214, %v1240
    %v1243 = vmul.f32 %v1215, %v1240
    %v1244 = vmul.f32 %v1216, %v1240
    %s1245 = sld [smem:[#allocation12 + $0x3]]
    %v1246 = vstv %s1245
    %v1247 = vmul.f32 %v1241, %v1246
    %v1248 = vmul.f32 %v1242, %v1246
    %v1249 = vmul.f32 %v1243, %v1246
    %v1250 = vmul.f32 %v1244, %v1246
    %s1251 = sld [smem:[#allocation14 + $0x3]]
    %v1252 = vstv %s1251
    %v1253 = vadd.f32 %v1247, %v1252
    %v1254 = vadd.f32 %v1248, %v1252
    %v1255 = vadd.f32 %v1249, %v1252
    %v1256 = vadd.f32 %v1250, %v1252
    %v1257 = vmax.f32 %v1253, 0.0
    %v1258 = vmax.f32 %v1254, 0.0
    %v1259 = vmax.f32 %v1255, 0.0
    %v1260 = vmax.f32 %v1256, 0.0
    %1261 = vst [vmem:[#allocation2 + $0x18] sm:$0xff] %v1257
    %1262 = vst [vmem:[#allocation2 + $0x58] sm:$0xff] %v1258
    %1263 = vst [vmem:[#allocation2 + $0x98] sm:$0xff] %v1259
    %1264 = vst [vmem:[#allocation2 + $0xd8] sm:$0xff] %v1260
    %s1265 = sld [smem:[#allocation11 + $0x4]]
    %v1266 = vstv %s1265
    %v1267 = vadd.f32 %v1266, 0.0
    %s1268 = sld [smem:[#allocation9 + $0x18]]
    %v1269 = vstv %s1268
    %v1270 = vmul.f32 %v1269, %v468
    %v1271 = vmul.f32 %v1269, %v473
    %v1272 = vmul.f32 %v1269, %v478
    %v1273 = vmul.f32 %v1269, %v483
    %v1274 = vadd.f32 %v1267, %v1270
    %v1275 = vadd.f32 %v1267, %v1271
    %v1276 = vadd.f32 %v1267, %v1272
    %v1277 = vadd.f32 %v1267, %v1273
    %s1278 = sld [smem:[#allocation9 + $0x19]]
    %v1279 = vstv %s1278
    %v1280 = vmul.f32 %v1279, %v220
    %v1281 = vmul.f32 %v1279, %v221
    %v1282 = vmul.f32 %v1279, %v222
    %v1283 = vmul.f32 %v1279, %v223
    %v1284 = vadd.f32 %v1274, %v1280
    %v1285 = vadd.f32 %v1275, %v1281
    %v1286 = vadd.f32 %v1276, %v1282
    %v1287 = vadd.f32 %v1277, %v1283
    %s1288 = sld [smem:[#allocation9 + $0x1a]]
    %v1289 = vstv %s1288
    %v1290 = vmul.f32 %v1289, %v553
    %v1291 = vmul.f32 %v1289, %v558
    %v1292 = vmul.f32 %v1289, %v563
    %v1293 = vmul.f32 %v1289, %v568
    %v1294 = vadd.f32 %v1284, %v1290
    %v1295 = vadd.f32 %v1285, %v1291
    %v1296 = vadd.f32 %v1286, %v1292
    %v1297 = vadd.f32 %v1287, %v1293
    %s1298 = sld [smem:[#allocation9 + $0x1b]]
    %v1299 = vstv %s1298
    %v1300 = vmul.f32 %v1299, %v638
    %v1301 = vmul.f32 %v1299, %v643
    %v1302 = vmul.f32 %v1299, %v648
    %v1303 = vmul.f32 %v1299, %v653
    %v1304 = vadd.f32 %v1294, %v1300
    %v1305 = vadd.f32 %v1295, %v1301
    %v1306 = vadd.f32 %v1296, %v1302
    %v1307 = vadd.f32 %v1297, %v1303
    %s1308 = sld [smem:[#allocation9 + $0x1c]]
    %v1309 = vstv %s1308
    %v1310 = vmul.f32 %v1309, %v280
    %v1311 = vmul.f32 %v1309, %v281
    %v1312 = vmul.f32 %v1309, %v282
    %v1313 = vmul.f32 %v1309, %v283
    %v1314 = vadd.f32 %v1304, %v1310
    %v1315 = vadd.f32 %v1305, %v1311
    %v1316 = vadd.f32 %v1306, %v1312
    %v1317 = vadd.f32 %v1307, %v1313
    %s1318 = sld [smem:[#allocation9 + $0x1d]]
    %v1319 = vstv %s1318
    %v1320 = vmul.f32 %v1319, %v723
    %v1321 = vmul.f32 %v1319, %v728
    %v1322 = vmul.f32 %v1319, %v733
    %v1323 = vmul.f32 %v1319, %v738
    %v1324 = vadd.f32 %v1314, %v1320
    %v1325 = vadd.f32 %v1315, %v1321
    %v1326 = vadd.f32 %v1316, %v1322
    %v1327 = vadd.f32 %v1317, %v1323
    %v1328 = vadd.f32 %v1324, %v1325
    %v1329 = vadd.f32 %v1328, %v1326
    %v1330 = vadd.f32 %v1329, %v1327
    %1331 = vadd.xlane.f32.xlu0 %v1330
    %v1332 = vpop.xlane.xlu0 %1331
    %v1333 = vrot.slane %v1332, 4
    %v1334 = vadd.f32 %v1332, %v1333
    %v1335 = vrot.slane %v1334, 2
    %v1336 = vadd.f32 %v1334, %v1335
    %v1337 = vrot.slane %v1336, 1
    %v1338 = vadd.f32 %v1336, %v1337
    %s1339 = vtos %v1338
    %v1340 = vrcp.pop 4096.0
    %s1341 = vtos %v1340
    %s1342 = smul.f32 %s1339, %s1341
    %v1343 = vstv %s1342
    %v1344 = vsub.f32 %v1324, %v1343
    %v1345 = vsub.f32 %v1325, %v1343
    %v1346 = vsub.f32 %v1326, %v1343
    %v1347 = vsub.f32 %v1327, %v1343
    %v1348 = vmul.f32 %v1344, %v1344
    %v1349 = vmul.f32 %v1345, %v1345
    %v1350 = vmul.f32 %v1346, %v1346
    %v1351 = vmul.f32 %v1347, %v1347
    %v1352 = vadd.f32 %v1348, %v1349
    %v1353 = vadd.f32 %v1352, %v1350
    %v1354 = vadd.f32 %v1353, %v1351
    %1355 = vadd.xlane.f32.xlu0 %v1354
    %v1356 = vpop.xlane.xlu0 %1355
    %v1357 = vrot.slane %v1356, 4
    %v1358 = vadd.f32 %v1356, %v1357
    %v1359 = vrot.slane %v1358, 2
    %v1360 = vadd.f32 %v1358, %v1359
    %v1361 = vrot.slane %v1360, 1
    %v1362 = vadd.f32 %v1360, %v1361
    %s1363 = vtos %v1362
    %v1364 = vrcp.pop 4096.0
    %s1365 = vtos %v1364
    %s1366 = smul.f32 %s1363, %s1365
    %s1367 = sadd.f32 %s1366, 1e-05
    %v1368 = vstv %s1367
    %v1369 = vrsqrt.pop %v1368
    %s1370 = vtos %v1369
    %v1371 = vstv %s1370
    %v1372 = vmul.f32 %v1344, %v1371
    %v1373 = vmul.f32 %v1345, %v1371
    %v1374 = vmul.f32 %v1346, %v1371
    %v1375 = vmul.f32 %v1347, %v1371
    %s1376 = sld [smem:[#allocation12 + $0x4]]
    %v1377 = vstv %s1376
    %v1378 = vmul.f32 %v1372, %v1377
    %v1379 = vmul.f32 %v1373, %v1377
    %v1380 = vmul.f32 %v1374, %v1377
    %v1381 = vmul.f32 %v1375, %v1377
    %s1382 = sld [smem:[#allocation14 + $0x4]]
    %v1383 = vstv %s1382
    %v1384 = vadd.f32 %v1378, %v1383
    %v1385 = vadd.f32 %v1379, %v1383
    %v1386 = vadd.f32 %v1380, %v1383
    %v1387 = vadd.f32 %v1381, %v1383
    %v1388 = vmax.f32 %v1384, 0.0
    %v1389 = vmax.f32 %v1385, 0.0
    %v1390 = vmax.f32 %v1386, 0.0
    %v1391 = vmax.f32 %v1387, 0.0
    %1392 = vst [vmem:[#allocation2 + $0x20] sm:$0xff] %v1388
    %1393 = vst [vmem:[#allocation2 + $0x60] sm:$0xff] %v1389
    %1394 = vst [vmem:[#allocation2 + $0xa0] sm:$0xff] %v1390
    %1395 = vst [vmem:[#allocation2 + $0xe0] sm:$0xff] %v1391
    %s1396 = sld [smem:[#allocation11 + $0x5]]
    %v1397 = vstv %s1396
    %v1398 = vadd.f32 %v1397, 0.0
    %s1399 = sld [smem:[#allocation9 + $0x1e]]
    %v1400 = vstv %s1399
    %v1401 = vmul.f32 %v1400, %v468
    %v1402 = vmul.f32 %v1400, %v473
    %v1403 = vmul.f32 %v1400, %v478
    %v1404 = vmul.f32 %v1400, %v483
    %v1405 = vadd.f32 %v1398, %v1401
    %v1406 = vadd.f32 %v1398, %v1402
    %v1407 = vadd.f32 %v1398, %v1403
    %v1408 = vadd.f32 %v1398, %v1404
    %s1409 = sld [smem:[#allocation9 + $0x1f]]
    %v1410 = vstv %s1409
    %v1411 = vmul.f32 %v1410, %v220
    %v1412 = vmul.f32 %v1410, %v221
    %v1413 = vmul.f32 %v1410, %v222
    %v1414 = vmul.f32 %v1410, %v223
    %v1415 = vadd.f32 %v1405, %v1411
    %v1416 = vadd.f32 %v1406, %v1412
    %v1417 = vadd.f32 %v1407, %v1413
    %v1418 = vadd.f32 %v1408, %v1414
    %s1419 = sld [smem:[#allocation9 + $0x20]]
    %v1420 = vstv %s1419
    %v1421 = vmul.f32 %v1420, %v553
    %v1422 = vmul.f32 %v1420, %v558
    %v1423 = vmul.f32 %v1420, %v563
    %v1424 = vmul.f32 %v1420, %v568
    %v1425 = vadd.f32 %v1415, %v1421
    %v1426 = vadd.f32 %v1416, %v1422
    %v1427 = vadd.f32 %v1417, %v1423
    %v1428 = vadd.f32 %v1418, %v1424
    %s1429 = sld [smem:[#allocation9 + $0x21]]
    %v1430 = vstv %s1429
    %v1431 = vmul.f32 %v1430, %v638
    %v1432 = vmul.f32 %v1430, %v643
    %v1433 = vmul.f32 %v1430, %v648
    %v1434 = vmul.f32 %v1430, %v653
    %v1435 = vadd.f32 %v1425, %v1431
    %v1436 = vadd.f32 %v1426, %v1432
    %v1437 = vadd.f32 %v1427, %v1433
    %v1438 = vadd.f32 %v1428, %v1434
    %s1439 = sld [smem:[#allocation9 + $0x22]]
    %v1440 = vstv %s1439
    %v1441 = vmul.f32 %v1440, %v280
    %v1442 = vmul.f32 %v1440, %v281
    %v1443 = vmul.f32 %v1440, %v282
    %v1444 = vmul.f32 %v1440, %v283
    %v1445 = vadd.f32 %v1435, %v1441
    %v1446 = vadd.f32 %v1436, %v1442
    %v1447 = vadd.f32 %v1437, %v1443
    %v1448 = vadd.f32 %v1438, %v1444
    %s1449 = sld [smem:[#allocation9 + $0x23]]
    %v1450 = vstv %s1449
    %v1451 = vmul.f32 %v1450, %v723
    %v1452 = vmul.f32 %v1450, %v728
    %v1453 = vmul.f32 %v1450, %v733
    %v1454 = vmul.f32 %v1450, %v738
    %v1455 = vadd.f32 %v1445, %v1451
    %v1456 = vadd.f32 %v1446, %v1452
    %v1457 = vadd.f32 %v1447, %v1453
    %v1458 = vadd.f32 %v1448, %v1454
    %v1459 = vadd.f32 %v1455, %v1456
    %v1460 = vadd.f32 %v1459, %v1457
    %v1461 = vadd.f32 %v1460, %v1458
    %1462 = vadd.xlane.f32.xlu0 %v1461
    %v1463 = vpop.xlane.xlu0 %1462
    %v1464 = vrot.slane %v1463, 4
    %v1465 = vadd.f32 %v1463, %v1464
    %v1466 = vrot.slane %v1465, 2
    %v1467 = vadd.f32 %v1465, %v1466
    %v1468 = vrot.slane %v1467, 1
    %v1469 = vadd.f32 %v1467, %v1468
    %s1470 = vtos %v1469
    %v1471 = vrcp.pop 4096.0
    %s1472 = vtos %v1471
    %s1473 = smul.f32 %s1470, %s1472
    %v1474 = vstv %s1473
    %v1475 = vsub.f32 %v1455, %v1474
    %v1476 = vsub.f32 %v1456, %v1474
    %v1477 = vsub.f32 %v1457, %v1474
    %v1478 = vsub.f32 %v1458, %v1474
    %v1479 = vmul.f32 %v1475, %v1475
    %v1480 = vmul.f32 %v1476, %v1476
    %v1481 = vmul.f32 %v1477, %v1477
    %v1482 = vmul.f32 %v1478, %v1478
    %v1483 = vadd.f32 %v1479, %v1480
    %v1484 = vadd.f32 %v1483, %v1481
    %v1485 = vadd.f32 %v1484, %v1482
    %1486 = vadd.xlane.f32.xlu0 %v1485
    %v1487 = vpop.xlane.xlu0 %1486
    %v1488 = vrot.slane %v1487, 4
    %v1489 = vadd.f32 %v1487, %v1488
    %v1490 = vrot.slane %v1489, 2
    %v1491 = vadd.f32 %v1489, %v1490
    %v1492 = vrot.slane %v1491, 1
    %v1493 = vadd.f32 %v1491, %v1492
    %s1494 = vtos %v1493
    %v1495 = vrcp.pop 4096.0
    %s1496 = vtos %v1495
    %s1497 = smul.f32 %s1494, %s1496
    %s1498 = sadd.f32 %s1497, 1e-05
    %v1499 = vstv %s1498
    %v1500 = vrsqrt.pop %v1499
    %s1501 = vtos %v1500
    %v1502 = vstv %s1501
    %v1503 = vmul.f32 %v1475, %v1502
    %v1504 = vmul.f32 %v1476, %v1502
    %v1505 = vmul.f32 %v1477, %v1502
    %v1506 = vmul.f32 %v1478, %v1502
    %s1507 = sld [smem:[#allocation12 + $0x5]]
    %v1508 = vstv %s1507
    %v1509 = vmul.f32 %v1503, %v1508
    %v1510 = vmul.f32 %v1504, %v1508
    %v1511 = vmul.f32 %v1505, %v1508
    %v1512 = vmul.f32 %v1506, %v1508
    %s1513 = sld [smem:[#allocation14 + $0x5]]
    %v1514 = vstv %s1513
    %v1515 = vadd.f32 %v1509, %v1514
    %v1516 = vadd.f32 %v1510, %v1514
    %v1517 = vadd.f32 %v1511, %v1514
    %v1518 = vadd.f32 %v1512, %v1514
    %v1519 = vmax.f32 %v1515, 0.0
    %v1520 = vmax.f32 %v1516, 0.0
    %v1521 = vmax.f32 %v1517, 0.0
    %v1522 = vmax.f32 %v1518, 0.0
    %1523 = vst [vmem:[#allocation2 + $0x28] sm:$0xff] %v1519
    %1524 = vst [vmem:[#allocation2 + $0x68] sm:$0xff] %v1520
    %1525 = vst [vmem:[#allocation2 + $0xa8] sm:$0xff] %v1521
    %1526 = vst [vmem:[#allocation2 + $0xe8] sm:$0xff] %v1522
    %s1527 = sld [smem:[#allocation11 + $0x6]]
    %v1528 = vstv %s1527
    %v1529 = vadd.f32 %v1528, 0.0
    %s1530 = sld [smem:[#allocation9 + $0x24]]
    %v1531 = vstv %s1530
    %v1532 = vmul.f32 %v1531, %v468
    %v1533 = vmul.f32 %v1531, %v473
    %v1534 = vmul.f32 %v1531, %v478
    %v1535 = vmul.f32 %v1531, %v483
    %v1536 = vadd.f32 %v1529, %v1532
    %v1537 = vadd.f32 %v1529, %v1533
    %v1538 = vadd.f32 %v1529, %v1534
    %v1539 = vadd.f32 %v1529, %v1535
    %s1540 = sld [smem:[#allocation9 + $0x25]]
    %v1541 = vstv %s1540
    %v1542 = vmul.f32 %v1541, %v220
    %v1543 = vmul.f32 %v1541, %v221
    %v1544 = vmul.f32 %v1541, %v222
    %v1545 = vmul.f32 %v1541, %v223
    %v1546 = vadd.f32 %v1536, %v1542
    %v1547 = vadd.f32 %v1537, %v1543
    %v1548 = vadd.f32 %v1538, %v1544
    %v1549 = vadd.f32 %v1539, %v1545
    %s1550 = sld [smem:[#allocation9 + $0x26]]
    %v1551 = vstv %s1550
    %v1552 = vmul.f32 %v1551, %v553
    %v1553 = vmul.f32 %v1551, %v558
    %v1554 = vmul.f32 %v1551, %v563
    %v1555 = vmul.f32 %v1551, %v568
    %v1556 = vadd.f32 %v1546, %v1552
    %v1557 = vadd.f32 %v1547, %v1553
    %v1558 = vadd.f32 %v1548, %v1554
    %v1559 = vadd.f32 %v1549, %v1555
    %s1560 = sld [smem:[#allocation9 + $0x27]]
    %v1561 = vstv %s1560
    %v1562 = vmul.f32 %v1561, %v638
    %v1563 = vmul.f32 %v1561, %v643
    %v1564 = vmul.f32 %v1561, %v648
    %v1565 = vmul.f32 %v1561, %v653
    %v1566 = vadd.f32 %v1556, %v1562
    %v1567 = vadd.f32 %v1557, %v1563
    %v1568 = vadd.f32 %v1558, %v1564
    %v1569 = vadd.f32 %v1559, %v1565
    %s1570 = sld [smem:[#allocation9 + $0x28]]
    %v1571 = vstv %s1570
    %v1572 = vmul.f32 %v1571, %v280
    %v1573 = vmul.f32 %v1571, %v281
    %v1574 = vmul.f32 %v1571, %v282
    %v1575 = vmul.f32 %v1571, %v283
    %v1576 = vadd.f32 %v1566, %v1572
    %v1577 = vadd.f32 %v1567, %v1573
    %v1578 = vadd.f32 %v1568, %v1574
    %v1579 = vadd.f32 %v1569, %v1575
    %s1580 = sld [smem:[#allocation9 + $0x29]]
    %v1581 = vstv %s1580
    %v1582 = vmul.f32 %v1581, %v723
    %v1583 = vmul.f32 %v1581, %v728
    %v1584 = vmul.f32 %v1581, %v733
    %v1585 = vmul.f32 %v1581, %v738
    %v1586 = vadd.f32 %v1576, %v1582
    %v1587 = vadd.f32 %v1577, %v1583
    %v1588 = vadd.f32 %v1578, %v1584
    %v1589 = vadd.f32 %v1579, %v1585
    %v1590 = vadd.f32 %v1586, %v1587
    %v1591 = vadd.f32 %v1590, %v1588
    %v1592 = vadd.f32 %v1591, %v1589
    %1593 = vadd.xlane.f32.xlu0 %v1592
    %v1594 = vpop.xlane.xlu0 %1593
    %v1595 = vrot.slane %v1594, 4
    %v1596 = vadd.f32 %v1594, %v1595
    %v1597 = vrot.slane %v1596, 2
    %v1598 = vadd.f32 %v1596, %v1597
    %v1599 = vrot.slane %v1598, 1
    %v1600 = vadd.f32 %v1598, %v1599
    %s1601 = vtos %v1600
    %v1602 = vrcp.pop 4096.0
    %s1603 = vtos %v1602
    %s1604 = smul.f32 %s1601, %s1603
    %v1605 = vstv %s1604
    %v1606 = vsub.f32 %v1586, %v1605
    %v1607 = vsub.f32 %v1587, %v1605
    %v1608 = vsub.f32 %v1588, %v1605
    %v1609 = vsub.f32 %v1589, %v1605
    %v1610 = vmul.f32 %v1606, %v1606
    %v1611 = vmul.f32 %v1607, %v1607
    %v1612 = vmul.f32 %v1608, %v1608
    %v1613 = vmul.f32 %v1609, %v1609
    %v1614 = vadd.f32 %v1610, %v1611
    %v1615 = vadd.f32 %v1614, %v1612
    %v1616 = vadd.f32 %v1615, %v1613
    %1617 = vadd.xlane.f32.xlu0 %v1616
    %v1618 = vpop.xlane.xlu0 %1617
    %v1619 = vrot.slane %v1618, 4
    %v1620 = vadd.f32 %v1618, %v1619
    %v1621 = vrot.slane %v1620, 2
    %v1622 = vadd.f32 %v1620, %v1621
    %v1623 = vrot.slane %v1622, 1
    %v1624 = vadd.f32 %v1622, %v1623
    %s1625 = vtos %v1624
    %v1626 = vrcp.pop 4096.0
    %s1627 = vtos %v1626
    %s1628 = smul.f32 %s1625, %s1627
    %s1629 = sadd.f32 %s1628, 1e-05
    %v1630 = vstv %s1629
    %v1631 = vrsqrt.pop %v1630
    %s1632 = vtos %v1631
    %v1633 = vstv %s1632
    %v1634 = vmul.f32 %v1606, %v1633
    %v1635 = vmul.f32 %v1607, %v1633
    %v1636 = vmul.f32 %v1608, %v1633
    %v1637 = vmul.f32 %v1609, %v1633
    %s1638 = sld [smem:[#allocation12 + $0x6]]
    %v1639 = vstv %s1638
    %v1640 = vmul.f32 %v1634, %v1639
    %v1641 = vmul.f32 %v1635, %v1639
    %v1642 = vmul.f32 %v1636, %v1639
    %v1643 = vmul.f32 %v1637, %v1639
    %s1644 = sld [smem:[#allocation14 + $0x6]]
    %v1645 = vstv %s1644
    %v1646 = vadd.f32 %v1640, %v1645
    %v1647 = vadd.f32 %v1641, %v1645
    %v1648 = vadd.f32 %v1642, %v1645
    %v1649 = vadd.f32 %v1643, %v1645
    %v1650 = vmax.f32 %v1646, 0.0
    %v1651 = vmax.f32 %v1647, 0.0
    %v1652 = vmax.f32 %v1648, 0.0
    %v1653 = vmax.f32 %v1649, 0.0
    %1654 = vst [vmem:[#allocation2 + $0x30] sm:$0xff] %v1650
    %1655 = vst [vmem:[#allocation2 + $0x70] sm:$0xff] %v1651
    %1656 = vst [vmem:[#allocation2 + $0xb0] sm:$0xff] %v1652
    %1657 = vst [vmem:[#allocation2 + $0xf0] sm:$0xff] %v1653
    %s1658 = sld [smem:[#allocation11 + $0x7]]
    %v1659 = vstv %s1658
    %v1660 = vadd.f32 %v1659, 0.0
    %s1661 = sld [smem:[#allocation9 + $0x2a]]
    %v1662 = vstv %s1661
    %v1663 = vmul.f32 %v1662, %v468
    %v1664 = vmul.f32 %v1662, %v473
    %v1665 = vmul.f32 %v1662, %v478
    %v1666 = vmul.f32 %v1662, %v483
    %v1667 = vadd.f32 %v1660, %v1663
    %v1668 = vadd.f32 %v1660, %v1664
    %v1669 = vadd.f32 %v1660, %v1665
    %v1670 = vadd.f32 %v1660, %v1666
    %s1671 = sld [smem:[#allocation9 + $0x2b]]
    %v1672 = vstv %s1671
    %v1673 = vmul.f32 %v1672, %v220
    %v1674 = vmul.f32 %v1672, %v221
    %v1675 = vmul.f32 %v1672, %v222
    %v1676 = vmul.f32 %v1672, %v223
    %v1677 = vadd.f32 %v1667, %v1673
    %v1678 = vadd.f32 %v1668, %v1674
    %v1679 = vadd.f32 %v1669, %v1675
    %v1680 = vadd.f32 %v1670, %v1676
    %s1681 = sld [smem:[#allocation9 + $0x2c]]
    %v1682 = vstv %s1681
    %v1683 = vmul.f32 %v1682, %v553
    %v1684 = vmul.f32 %v1682, %v558
    %v1685 = vmul.f32 %v1682, %v563
    %v1686 = vmul.f32 %v1682, %v568
    %v1687 = vadd.f32 %v1677, %v1683
    %v1688 = vadd.f32 %v1678, %v1684
    %v1689 = vadd.f32 %v1679, %v1685
    %v1690 = vadd.f32 %v1680, %v1686
    %s1691 = sld [smem:[#allocation9 + $0x2d]]
    %v1692 = vstv %s1691
    %v1693 = vmul.f32 %v1692, %v638
    %v1694 = vmul.f32 %v1692, %v643
    %v1695 = vmul.f32 %v1692, %v648
    %v1696 = vmul.f32 %v1692, %v653
    %v1697 = vadd.f32 %v1687, %v1693
    %v1698 = vadd.f32 %v1688, %v1694
    %v1699 = vadd.f32 %v1689, %v1695
    %v1700 = vadd.f32 %v1690, %v1696
    %s1701 = sld [smem:[#allocation9 + $0x2e]]
    %v1702 = vstv %s1701
    %v1703 = vmul.f32 %v1702, %v280
    %v1704 = vmul.f32 %v1702, %v281
    %v1705 = vmul.f32 %v1702, %v282
    %v1706 = vmul.f32 %v1702, %v283
    %v1707 = vadd.f32 %v1697, %v1703
    %v1708 = vadd.f32 %v1698, %v1704
    %v1709 = vadd.f32 %v1699, %v1705
    %v1710 = vadd.f32 %v1700, %v1706
    %s1711 = sld [smem:[#allocation9 + $0x2f]]
    %v1712 = vstv %s1711
    %v1713 = vmul.f32 %v1712, %v723
    %v1714 = vmul.f32 %v1712, %v728
    %v1715 = vmul.f32 %v1712, %v733
    %v1716 = vmul.f32 %v1712, %v738
    %v1717 = vadd.f32 %v1707, %v1713
    %v1718 = vadd.f32 %v1708, %v1714
    %v1719 = vadd.f32 %v1709, %v1715
    %v1720 = vadd.f32 %v1710, %v1716
    %v1721 = vadd.f32 %v1717, %v1718
    %v1722 = vadd.f32 %v1721, %v1719
    %v1723 = vadd.f32 %v1722, %v1720
    %1724 = vadd.xlane.f32.xlu0 %v1723
    %v1725 = vpop.xlane.xlu0 %1724
    %v1726 = vrot.slane %v1725, 4
    %v1727 = vadd.f32 %v1725, %v1726
    %v1728 = vrot.slane %v1727, 2
    %v1729 = vadd.f32 %v1727, %v1728
    %v1730 = vrot.slane %v1729, 1
    %v1731 = vadd.f32 %v1729, %v1730
    %s1732 = vtos %v1731
    %v1733 = vrcp.pop 4096.0
    %s1734 = vtos %v1733
    %s1735 = smul.f32 %s1732, %s1734
    %v1736 = vstv %s1735
    %v1737 = vsub.f32 %v1717, %v1736
    %v1738 = vsub.f32 %v1718, %v1736
    %v1739 = vsub.f32 %v1719, %v1736
    %v1740 = vsub.f32 %v1720, %v1736
    %v1741 = vmul.f32 %v1737, %v1737
    %v1742 = vmul.f32 %v1738, %v1738
    %v1743 = vmul.f32 %v1739, %v1739
    %v1744 = vmul.f32 %v1740, %v1740
    %v1745 = vadd.f32 %v1741, %v1742
    %v1746 = vadd.f32 %v1745, %v1743
    %v1747 = vadd.f32 %v1746, %v1744
    %1748 = vadd.xlane.f32.xlu0 %v1747
    %v1749 = vpop.xlane.xlu0 %1748
    %v1750 = vrot.slane %v1749, 4
    %v1751 = vadd.f32 %v1749, %v1750
    %v1752 = vrot.slane %v1751, 2
    %v1753 = vadd.f32 %v1751, %v1752
    %v1754 = vrot.slane %v1753, 1
    %v1755 = vadd.f32 %v1753, %v1754
    %s1756 = vtos %v1755
    %v1757 = vrcp.pop 4096.0
    %s1758 = vtos %v1757
    %s1759 = smul.f32 %s1756, %s1758
    %s1760 = sadd.f32 %s1759, 1e-05
    %v1761 = vstv %s1760
    %v1762 = vrsqrt.pop %v1761
    %s1763 = vtos %v1762
    %v1764 = vstv %s1763
    %v1765 = vmul.f32 %v1737, %v1764
    %v1766 = vmul.f32 %v1738, %v1764
    %v1767 = vmul.f32 %v1739, %v1764
    %v1768 = vmul.f32 %v1740, %v1764
    %s1769 = sld [smem:[#allocation12 + $0x7]]
    %v1770 = vstv %s1769
    %v1771 = vmul.f32 %v1765, %v1770
    %v1772 = vmul.f32 %v1766, %v1770
    %v1773 = vmul.f32 %v1767, %v1770
    %v1774 = vmul.f32 %v1768, %v1770
    %s1775 = sld [smem:[#allocation14 + $0x7]]
    %v1776 = vstv %s1775
    %v1777 = vadd.f32 %v1771, %v1776
    %v1778 = vadd.f32 %v1772, %v1776
    %v1779 = vadd.f32 %v1773, %v1776
    %v1780 = vadd.f32 %v1774, %v1776
    %v1781 = vmax.f32 %v1777, 0.0
    %v1782 = vmax.f32 %v1778, 0.0
    %v1783 = vmax.f32 %v1779, 0.0
    %v1784 = vmax.f32 %v1780, 0.0
    %1785 = vst [vmem:[#allocation2 + $0x38] sm:$0xff] %v1781
    %1786 = vst [vmem:[#allocation2 + $0x78] sm:$0xff] %v1782
    %1787 = vst [vmem:[#allocation2 + $0xb8] sm:$0xff] %v1783
    %1788 = vst [vmem:[#allocation2 + $0xf8] sm:$0xff] %v1784
    %v1789 = vld [vmem:[#allocation2] sm:$0xff]
    %v1790 = vld [vmem:[#allocation2 + $0x8] sm:$0xff]
    %v1791 = vld [vmem:[#allocation2 + $0x10] sm:$0xff]
    %v1792 = vld [vmem:[#allocation2 + $0x18] sm:$0xff]
    %v1793 = vld [vmem:[#allocation2 + $0x20] sm:$0xff]
    %v1794 = vld [vmem:[#allocation2 + $0x28] sm:$0xff]
    %v1795 = vld [vmem:[#allocation2 + $0x30] sm:$0xff]
    %v1796 = vld [vmem:[#allocation2 + $0x38] sm:$0xff]
    %v1797 = vld [vmem:[#allocation2 + $0x40] sm:$0xff]
    %v1798 = vld [vmem:[#allocation2 + $0x48] sm:$0xff]
    %v1799 = vld [vmem:[#allocation2 + $0x50] sm:$0xff]
    %v1800 = vld [vmem:[#allocation2 + $0x58] sm:$0xff]
    %v1801 = vld [vmem:[#allocation2 + $0x60] sm:$0xff]
    %v1802 = vld [vmem:[#allocation2 + $0x68] sm:$0xff]
    %v1803 = vld [vmem:[#allocation2 + $0x70] sm:$0xff]
    %v1804 = vld [vmem:[#allocation2 + $0x78] sm:$0xff]
    %v1805 = vld [vmem:[#allocation2 + $0x80] sm:$0xff]
    %v1806 = vld [vmem:[#allocation2 + $0x88] sm:$0xff]
    %v1807 = vld [vmem:[#allocation2 + $0x90] sm:$0xff]
    %v1808 = vld [vmem:[#allocation2 + $0x98] sm:$0xff]
    %v1809 = vld [vmem:[#allocation2 + $0xa0] sm:$0xff]
    %v1810 = vld [vmem:[#allocation2 + $0xa8] sm:$0xff]
    %v1811 = vld [vmem:[#allocation2 + $0xb0] sm:$0xff]
    %v1812 = vld [vmem:[#allocation2 + $0xb8] sm:$0xff]
    %v1813 = vld [vmem:[#allocation2 + $0xc0] sm:$0xff]
    %v1814 = vld [vmem:[#allocation2 + $0xc8] sm:$0xff]
    %v1815 = vld [vmem:[#allocation2 + $0xd0] sm:$0xff]
    %v1816 = vld [vmem:[#allocation2 + $0xd8] sm:$0xff]
    %v1817 = vld [vmem:[#allocation2 + $0xe0] sm:$0xff]
    %v1818 = vld [vmem:[#allocation2 + $0xe8] sm:$0xff]
    %v1819 = vld [vmem:[#allocation2 + $0xf0] sm:$0xff]
    %v1820 = vld [vmem:[#allocation2 + $0xf8] sm:$0xff]
    %v1821 = vld [vmem:[#allocation18] sm:$0xff]
    %v1822 = vld [vmem:[#allocation18 + $0x8] sm:$0xff]
    %v1823 = vld [vmem:[#allocation18 + $0x10] sm:$0xff]
    %v1824 = vld [vmem:[#allocation18 + $0x18] sm:$0xff]
    %v1825 = vld [vmem:[#allocation18 + $0x20] sm:$0xff]
    %v1826 = vld [vmem:[#allocation18 + $0x28] sm:$0xff]
    %v1827 = vld [vmem:[#allocation18 + $0x30] sm:$0xff]
    %v1828 = vld [vmem:[#allocation18 + $0x38] sm:$0xff]
    %v1829 = vld [vmem:[#allocation18 + $0x40] sm:$0xff]
    %v1830 = vld [vmem:[#allocation18 + $0x48] sm:$0xff]
    %v1831 = vld [vmem:[#allocation18 + $0x50] sm:$0xff]
    %v1832 = vld [vmem:[#allocation18 + $0x58] sm:$0xff]
    %v1833 = vld [vmem:[#allocation18 + $0x60] sm:$0xff]
    %v1834 = vld [vmem:[#allocation18 + $0x68] sm:$0xff]
    %v1835 = vld [vmem:[#allocation18 + $0x70] sm:$0xff]
    %v1836 = vld [vmem:[#allocation18 + $0x78] sm:$0xff]
    %v1837 = vld [vmem:[#allocation18 + $0x80] sm:$0xff]
    %v1838 = vld [vmem:[#allocation18 + $0x88] sm:$0xff]
    %v1839 = vld [vmem:[#allocation18 + $0x90] sm:$0xff]
    %v1840 = vld [vmem:[#allocation18 + $0x98] sm:$0xff]
    %v1841 = vld [vmem:[#allocation18 + $0xa0] sm:$0xff]
    %v1842 = vld [vmem:[#allocation18 + $0xa8] sm:$0xff]
    %v1843 = vld [vmem:[#allocation18 + $0xb0] sm:$0xff]
    %v1844 = vld [vmem:[#allocation18 + $0xb8] sm:$0xff]
    %v1845 = vld [vmem:[#allocation18 + $0xc0] sm:$0xff]
    %v1846 = vld [vmem:[#allocation18 + $0xc8] sm:$0xff]
    %v1847 = vld [vmem:[#allocation18 + $0xd0] sm:$0xff]
    %v1848 = vld [vmem:[#allocation18 + $0xd8] sm:$0xff]
    %v1849 = vld [vmem:[#allocation18 + $0xe0] sm:$0xff]
    %v1850 = vld [vmem:[#allocation18 + $0xe8] sm:$0xff]
    %v1851 = vld [vmem:[#allocation18 + $0xf0] sm:$0xff]
    %v1852 = vld [vmem:[#allocation18 + $0xf8] sm:$0xff]
    %v1853 = vld [vmem:[#allocation18 + $0x100] sm:$0xff]
    %v1854 = vld [vmem:[#allocation18 + $0x108] sm:$0xff]
    %v1855 = vld [vmem:[#allocation18 + $0x110] sm:$0xff]
    %v1856 = vld [vmem:[#allocation18 + $0x118] sm:$0xff]
    %v1857 = vld [vmem:[#allocation18 + $0x120] sm:$0xff]
    %v1858 = vld [vmem:[#allocation18 + $0x128] sm:$0xff]
    %v1859 = vld [vmem:[#allocation18 + $0x130] sm:$0xff]
    %v1860 = vld [vmem:[#allocation18 + $0x138] sm:$0xff]
    %v1861 = vld [vmem:[#allocation18 + $0x140] sm:$0xff]
    %v1862 = vld [vmem:[#allocation18 + $0x148] sm:$0xff]
    %v1863 = vld [vmem:[#allocation18 + $0x150] sm:$0xff]
    %v1864 = vld [vmem:[#allocation18 + $0x158] sm:$0xff]
    %v1865 = vld [vmem:[#allocation18 + $0x160] sm:$0xff]
    %v1866 = vld [vmem:[#allocation18 + $0x168] sm:$0xff]
    %v1867 = vld [vmem:[#allocation18 + $0x170] sm:$0xff]
    %v1868 = vld [vmem:[#allocation18 + $0x178] sm:$0xff]
    %v1869 = vld [vmem:[#allocation18 + $0x180] sm:$0xff]
    %v1870 = vld [vmem:[#allocation18 + $0x188] sm:$0xff]
    %v1871 = vld [vmem:[#allocation18 + $0x190] sm:$0xff]
    %v1872 = vld [vmem:[#allocation18 + $0x198] sm:$0xff]
    %v1873 = vld [vmem:[#allocation18 + $0x1a0] sm:$0xff]
    %v1874 = vld [vmem:[#allocation18 + $0x1a8] sm:$0xff]
    %v1875 = vld [vmem:[#allocation18 + $0x1b0] sm:$0xff]
    %v1876 = vld [vmem:[#allocation18 + $0x1b8] sm:$0xff]
    %v1877 = vld [vmem:[#allocation18 + $0x1c0] sm:$0xff]
    %v1878 = vld [vmem:[#allocation18 + $0x1c8] sm:$0xff]
    %v1879 = vld [vmem:[#allocation18 + $0x1d0] sm:$0xff]
    %v1880 = vld [vmem:[#allocation18 + $0x1d8] sm:$0xff]
    %v1881 = vld [vmem:[#allocation18 + $0x1e0] sm:$0xff]
    %v1882 = vld [vmem:[#allocation18 + $0x1e8] sm:$0xff]
    %v1883 = vld [vmem:[#allocation18 + $0x1f0] sm:$0xff]
    %v1884 = vld [vmem:[#allocation18 + $0x1f8] sm:$0xff]
    %v1885 = vld [vmem:[#allocation18 + $0x200] sm:$0xff]
    %v1886 = vld [vmem:[#allocation18 + $0x208] sm:$0xff]
    %v1887 = vld [vmem:[#allocation18 + $0x210] sm:$0xff]
    %v1888 = vld [vmem:[#allocation18 + $0x218] sm:$0xff]
    %v1889 = vld [vmem:[#allocation18 + $0x220] sm:$0xff]
    %v1890 = vld [vmem:[#allocation18 + $0x228] sm:$0xff]
    %v1891 = vld [vmem:[#allocation18 + $0x230] sm:$0xff]
    %v1892 = vld [vmem:[#allocation18 + $0x238] sm:$0xff]
    %v1893 = vld [vmem:[#allocation18 + $0x240] sm:$0xff]
    %v1894 = vld [vmem:[#allocation18 + $0x248] sm:$0xff]
    %v1895 = vld [vmem:[#allocation18 + $0x250] sm:$0xff]
    %v1896 = vld [vmem:[#allocation18 + $0x258] sm:$0xff]
    %v1897 = vld [vmem:[#allocation18 + $0x260] sm:$0xff]
    %v1898 = vld [vmem:[#allocation18 + $0x268] sm:$0xff]
    %v1899 = vld [vmem:[#allocation18 + $0x270] sm:$0xff]
    %v1900 = vld [vmem:[#allocation18 + $0x278] sm:$0xff]
    %v1901 = vld [vmem:[#allocation18 + $0x280] sm:$0xff]
    %v1902 = vld [vmem:[#allocation18 + $0x288] sm:$0xff]
    %v1903 = vld [vmem:[#allocation18 + $0x290] sm:$0xff]
    %v1904 = vld [vmem:[#allocation18 + $0x298] sm:$0xff]
    %v1905 = vld [vmem:[#allocation18 + $0x2a0] sm:$0xff]
    %v1906 = vld [vmem:[#allocation18 + $0x2a8] sm:$0xff]
    %v1907 = vld [vmem:[#allocation18 + $0x2b0] sm:$0xff]
    %v1908 = vld [vmem:[#allocation18 + $0x2b8] sm:$0xff]
    %v1909 = vld [vmem:[#allocation18 + $0x2c0] sm:$0xff]
    %v1910 = vld [vmem:[#allocation18 + $0x2c8] sm:$0xff]
    %v1911 = vld [vmem:[#allocation18 + $0x2d0] sm:$0xff]
    %v1912 = vld [vmem:[#allocation18 + $0x2d8] sm:$0xff]
    %v1913 = vld [vmem:[#allocation18 + $0x2e0] sm:$0xff]
    %v1914 = vld [vmem:[#allocation18 + $0x2e8] sm:$0xff]
    %v1915 = vld [vmem:[#allocation18 + $0x2f0] sm:$0xff]
    %v1916 = vld [vmem:[#allocation18 + $0x2f8] sm:$0xff]
    %v1917 = vld [vmem:[#allocation18 + $0x300] sm:$0xff]
    %v1918 = vld [vmem:[#allocation18 + $0x308] sm:$0xff]
    %v1919 = vld [vmem:[#allocation18 + $0x310] sm:$0xff]
    %v1920 = vld [vmem:[#allocation18 + $0x318] sm:$0xff]
    %v1921 = vld [vmem:[#allocation18 + $0x320] sm:$0xff]
    %v1922 = vld [vmem:[#allocation18 + $0x328] sm:$0xff]
    %v1923 = vld [vmem:[#allocation18 + $0x330] sm:$0xff]
    %v1924 = vld [vmem:[#allocation18 + $0x338] sm:$0xff]
    %v1925 = vld [vmem:[#allocation18 + $0x340] sm:$0xff]
    %v1926 = vld [vmem:[#allocation18 + $0x348] sm:$0xff]
    %v1927 = vld [vmem:[#allocation18 + $0x350] sm:$0xff]
    %v1928 = vld [vmem:[#allocation18 + $0x358] sm:$0xff]
    %v1929 = vld [vmem:[#allocation18 + $0x360] sm:$0xff]
    %v1930 = vld [vmem:[#allocation18 + $0x368] sm:$0xff]
    %v1931 = vld [vmem:[#allocation18 + $0x370] sm:$0xff]
    %v1932 = vld [vmem:[#allocation18 + $0x378] sm:$0xff]
    %v1933 = vld [vmem:[#allocation18 + $0x380] sm:$0xff]
    %v1934 = vld [vmem:[#allocation18 + $0x388] sm:$0xff]
    %v1935 = vld [vmem:[#allocation18 + $0x390] sm:$0xff]
    %v1936 = vld [vmem:[#allocation18 + $0x398] sm:$0xff]
    %v1937 = vld [vmem:[#allocation18 + $0x3a0] sm:$0xff]
    %v1938 = vld [vmem:[#allocation18 + $0x3a8] sm:$0xff]
    %v1939 = vld [vmem:[#allocation18 + $0x3b0] sm:$0xff]
    %v1940 = vld [vmem:[#allocation18 + $0x3b8] sm:$0xff]
    %v1941 = vld [vmem:[#allocation18 + $0x3c0] sm:$0xff]
    %v1942 = vld [vmem:[#allocation18 + $0x3c8] sm:$0xff]
    %v1943 = vld [vmem:[#allocation18 + $0x3d0] sm:$0xff]
    %v1944 = vld [vmem:[#allocation18 + $0x3d8] sm:$0xff]
    %v1945 = vld [vmem:[#allocation18 + $0x3e0] sm:$0xff]
    %v1946 = vld [vmem:[#allocation18 + $0x3e8] sm:$0xff]
    %v1947 = vld [vmem:[#allocation18 + $0x3f0] sm:$0xff]
    %v1948 = vld [vmem:[#allocation18 + $0x3f8] sm:$0xff]
    %v1949 = vld [vmem:[%s9] sm:$0x1]
    %v1951 = vlaneseq
    %v1952 = vshrl.u32 %v1951, 7
    %v1953 = vsub.s32 0, %v1952
    %v1954 = vrot.slane %v1949, %v1953
    %1956 = vmatprep.subr.mxu0 0.0
    %1957 = vmatpush1.msra.mxu0 %v1836
    %1958 = vmatprep.subr.mxu0 0.0
    %1959 = vmatpush1.msra.mxu0 %v1835
    %1960 = vmatprep.subr.mxu0 0.0
    %1961 = vmatpush1.msra.mxu0 %v1834
    %1962 = vmatprep.subr.mxu0 0.0
    %1963 = vmatpush1.msra.mxu0 %v1833
    %1964 = vmatprep.subr.mxu0 0.0
    %1965 = vmatpush1.msra.mxu0 %v1832
    %1966 = vmatprep.subr.mxu0 0.0
    %1967 = vmatpush1.msra.mxu0 %v1831
    %1968 = vmatprep.subr.mxu0 0.0
    %1969 = vmatpush1.msra.mxu0 %v1830
    %1970 = vmatprep.subr.mxu0 0.0
    %1971 = vmatpush1.msra.mxu0 %v1829
    %1972 = vmatprep.subr.mxu0 0.0
    %1973 = vmatpush1.msra.mxu0 %v1828
    %1974 = vmatprep.subr.mxu0 0.0
    %1975 = vmatpush1.msra.mxu0 %v1827
    %1976 = vmatprep.subr.mxu0 0.0
    %1977 = vmatpush1.msra.mxu0 %v1826
    %1978 = vmatprep.subr.mxu0 0.0
    %1979 = vmatpush1.msra.mxu0 %v1825
    %1980 = vmatprep.subr.mxu0 0.0
    %1981 = vmatpush1.msra.mxu0 %v1824
    %1982 = vmatprep.subr.mxu0 0.0
    %1983 = vmatpush1.msra.mxu0 %v1823
    %1984 = vmatprep.subr.mxu0 0.0
    %1985 = vmatpush1.msra.mxu0 %v1822
    %1986 = vmatprep.subr.mxu0 0.0
    %1987 = vmatpush1.msra.mxu0 %v1821
    %1988 = vmatprep.subr.mxu0 0.0
    %1989 = vmatpush2.msra.mxu0 %v1852
    %1990 = vmatprep.subr.mxu0 0.0
    %1991 = vmatpush2.msra.mxu0 %v1851
    %1992 = vmatprep.subr.mxu0 0.0
    %1993 = vmatpush2.msra.mxu0 %v1850
    %1994 = vmatprep.subr.mxu0 0.0
    %1995 = vmatpush2.msra.mxu0 %v1849
    %1996 = vmatprep.subr.mxu0 0.0
    %1997 = vmatpush2.msra.mxu0 %v1848
    %1998 = vmatprep.subr.mxu0 0.0
    %1999 = vmatpush2.msra.mxu0 %v1847
    %2000 = vmatprep.subr.mxu0 0.0
    %2001 = vmatpush2.msra.mxu0 %v1846
    %2002 = vmatprep.subr.mxu0 0.0
    %2003 = vmatpush2.msra.mxu0 %v1845
    %2004 = vmatprep.subr.mxu0 0.0
    %2005 = vmatpush2.msra.mxu0 %v1844
    %2006 = vmatprep.subr.mxu0 0.0
    %2007 = vmatpush2.msra.mxu0 %v1843
    %2008 = vmatprep.subr.mxu0 0.0
    %2009 = vmatpush2.msra.mxu0 %v1842
    %2010 = vmatprep.subr.mxu0 0.0
    %2011 = vmatpush2.msra.mxu0 %v1841
    %2012 = vmatprep.subr.mxu0 0.0
    %2013 = vmatpush2.msra.mxu0 %v1840
    %2014 = vmatprep.subr.mxu0 0.0
    %2015 = vmatpush2.msra.mxu0 %v1839
    %2016 = vmatprep.subr.mxu0 0.0
    %2017 = vmatpush2.msra.mxu0 %v1838
    %2018 = vmatprep.subr.mxu0 0.0
    %2019 = vmatpush2.msra.mxu0 %v1837
    %2020 = vmatprep.mubr.f32.mxu0 %v1790
    %2021 = vmatmul.mubr.f32.gmra.mxu0 %v1789
    %v2022 = vpop.f32.mrf.mxu0
    %v2023 = vadd.f32 %v1954, %v2022
    %v2024 = vpop.f32.mrf.mxu0
    %2025 = vmatprep.mubr.f32.mxu0 %v1798
    %2026 = vmatmul.mubr.f32.gmra.mxu0 %v1797
    %v2027 = vpop.f32.mrf.mxu0
    %v2028 = vadd.f32 %v1954, %v2027
    %v2029 = vpop.f32.mrf.mxu0
    %2030 = vmatprep.mubr.f32.mxu0 %v1806
    %2031 = vmatmul.mubr.f32.gmra.mxu0 %v1805
    %v2032 = vpop.f32.mrf.mxu0
    %v2033 = vadd.f32 %v1954, %v2032
    %v2034 = vpop.f32.mrf.mxu0
    %2035 = vmatprep.mubr.f32.mxu0 %v1814
    %2036 = vmatmul.mubr.f32.gmra.mxu0 %v1813
    %v2037 = vpop.f32.mrf.mxu0
    %v2038 = vadd.f32 %v1954, %v2037
    %v2039 = vpop.f32.mrf.mxu0
    %2040 = vdwg.mxu0
    %2041 = vmatprep.subr.mxu0 0.0
    %2042 = vmatpush1.msra.mxu0 %v1868
    %2043 = vmatprep.subr.mxu0 0.0
    %2044 = vmatpush1.msra.mxu0 %v1867
    %2045 = vmatprep.subr.mxu0 0.0
    %2046 = vmatpush1.msra.mxu0 %v1866
    %2047 = vmatprep.subr.mxu0 0.0
    %2048 = vmatpush1.msra.mxu0 %v1865
    %2049 = vmatprep.subr.mxu0 0.0
    %2050 = vmatpush1.msra.mxu0 %v1864
    %2051 = vmatprep.subr.mxu0 0.0
    %2052 = vmatpush1.msra.mxu0 %v1863
    %2053 = vmatprep.subr.mxu0 0.0
    %2054 = vmatpush1.msra.mxu0 %v1862
    %2055 = vmatprep.subr.mxu0 0.0
    %2056 = vmatpush1.msra.mxu0 %v1861
    %2057 = vmatprep.subr.mxu0 0.0
    %2058 = vmatpush1.msra.mxu0 %v1860
    %2059 = vmatprep.subr.mxu0 0.0
    %2060 = vmatpush1.msra.mxu0 %v1859
    %2061 = vmatprep.subr.mxu0 0.0
    %2062 = vmatpush1.msra.mxu0 %v1858
    %2063 = vmatprep.subr.mxu0 0.0
    %2064 = vmatpush1.msra.mxu0 %v1857
    %2065 = vmatprep.subr.mxu0 0.0
    %2066 = vmatpush1.msra.mxu0 %v1856
    %2067 = vmatprep.subr.mxu0 0.0
    %2068 = vmatpush1.msra.mxu0 %v1855
    %2069 = vmatprep.subr.mxu0 0.0
    %2070 = vmatpush1.msra.mxu0 %v1854
    %2071 = vmatprep.subr.mxu0 0.0
    %2072 = vmatpush1.msra.mxu0 %v1853
    %2073 = vmatprep.subr.mxu0 0.0
    %2074 = vmatpush2.msra.mxu0 %v1884
    %2075 = vmatprep.subr.mxu0 0.0
    %2076 = vmatpush2.msra.mxu0 %v1883
    %2077 = vmatprep.subr.mxu0 0.0
    %2078 = vmatpush2.msra.mxu0 %v1882
    %2079 = vmatprep.subr.mxu0 0.0
    %2080 = vmatpush2.msra.mxu0 %v1881
    %2081 = vmatprep.subr.mxu0 0.0
    %2082 = vmatpush2.msra.mxu0 %v1880
    %2083 = vmatprep.subr.mxu0 0.0
    %2084 = vmatpush2.msra.mxu0 %v1879
    %2085 = vmatprep.subr.mxu0 0.0
    %2086 = vmatpush2.msra.mxu0 %v1878
    %2087 = vmatprep.subr.mxu0 0.0
    %2088 = vmatpush2.msra.mxu0 %v1877
    %2089 = vmatprep.subr.mxu0 0.0
    %2090 = vmatpush2.msra.mxu0 %v1876
    %2091 = vmatprep.subr.mxu0 0.0
    %2092 = vmatpush2.msra.mxu0 %v1875
    %2093 = vmatprep.subr.mxu0 0.0
    %2094 = vmatpush2.msra.mxu0 %v1874
    %2095 = vmatprep.subr.mxu0 0.0
    %2096 = vmatpush2.msra.mxu0 %v1873
    %2097 = vmatprep.subr.mxu0 0.0
    %2098 = vmatpush2.msra.mxu0 %v1872
    %2099 = vmatprep.subr.mxu0 0.0
    %2100 = vmatpush2.msra.mxu0 %v1871
    %2101 = vmatprep.subr.mxu0 0.0
    %2102 = vmatpush2.msra.mxu0 %v1870
    %2103 = vmatprep.subr.mxu0 0.0
    %2104 = vmatpush2.msra.mxu0 %v1869
    %2105 = vmatprep.mubr.f32.mxu0 %v1792
    %2106 = vmatmul.mubr.f32.gmra.mxu0 %v1791
    %v2107 = vpop.f32.mrf.mxu0
    %v2108 = vadd.f32 %v2023, %v2107
    %v2109 = vpop.f32.mrf.mxu0
    %2110 = vmatprep.mubr.f32.mxu0 %v1800
    %2111 = vmatmul.mubr.f32.gmra.mxu0 %v1799
    %v2112 = vpop.f32.mrf.mxu0
    %v2113 = vadd.f32 %v2028, %v2112
    %v2114 = vpop.f32.mrf.mxu0
    %2115 = vmatprep.mubr.f32.mxu0 %v1808
    %2116 = vmatmul.mubr.f32.gmra.mxu0 %v1807
    %v2117 = vpop.f32.mrf.mxu0
    %v2118 = vadd.f32 %v2033, %v2117
    %v2119 = vpop.f32.mrf.mxu0
    %2120 = vmatprep.mubr.f32.mxu0 %v1816
    %2121 = vmatmul.mubr.f32.gmra.mxu0 %v1815
    %v2122 = vpop.f32.mrf.mxu0
    %v2123 = vadd.f32 %v2038, %v2122
    %v2124 = vpop.f32.mrf.mxu0
    %2125 = vdwg.mxu0
    %2126 = vmatprep.subr.mxu0 0.0
    %2127 = vmatpush1.msra.mxu0 %v1900
    %2128 = vmatprep.subr.mxu0 0.0
    %2129 = vmatpush1.msra.mxu0 %v1899
    %2130 = vmatprep.subr.mxu0 0.0
    %2131 = vmatpush1.msra.mxu0 %v1898
    %2132 = vmatprep.subr.mxu0 0.0
    %2133 = vmatpush1.msra.mxu0 %v1897
    %2134 = vmatprep.subr.mxu0 0.0
    %2135 = vmatpush1.msra.mxu0 %v1896
    %2136 = vmatprep.subr.mxu0 0.0
    %2137 = vmatpush1.msra.mxu0 %v1895
    %2138 = vmatprep.subr.mxu0 0.0
    %2139 = vmatpush1.msra.mxu0 %v1894
    %2140 = vmatprep.subr.mxu0 0.0
    %2141 = vmatpush1.msra.mxu0 %v1893
    %2142 = vmatprep.subr.mxu0 0.0
    %2143 = vmatpush1.msra.mxu0 %v1892
    %2144 = vmatprep.subr.mxu0 0.0
    %2145 = vmatpush1.msra.mxu0 %v1891
    %2146 = vmatprep.subr.mxu0 0.0
    %2147 = vmatpush1.msra.mxu0 %v1890
    %2148 = vmatprep.subr.mxu0 0.0
    %2149 = vmatpush1.msra.mxu0 %v1889
    %2150 = vmatprep.subr.mxu0 0.0
    %2151 = vmatpush1.msra.mxu0 %v1888
    %2152 = vmatprep.subr.mxu0 0.0
    %2153 = vmatpush1.msra.mxu0 %v1887
    %2154 = vmatprep.subr.mxu0 0.0
    %2155 = vmatpush1.msra.mxu0 %v1886
    %2156 = vmatprep.subr.mxu0 0.0
    %2157 = vmatpush1.msra.mxu0 %v1885
    %2158 = vmatprep.subr.mxu0 0.0
    %2159 = vmatpush2.msra.mxu0 %v1916
    %2160 = vmatprep.subr.mxu0 0.0
    %2161 = vmatpush2.msra.mxu0 %v1915
    %2162 = vmatprep.subr.mxu0 0.0
    %2163 = vmatpush2.msra.mxu0 %v1914
    %2164 = vmatprep.subr.mxu0 0.0
    %2165 = vmatpush2.msra.mxu0 %v1913
    %2166 = vmatprep.subr.mxu0 0.0
    %2167 = vmatpush2.msra.mxu0 %v1912
    %2168 = vmatprep.subr.mxu0 0.0
    %2169 = vmatpush2.msra.mxu0 %v1911
    %2170 = vmatprep.subr.mxu0 0.0
    %2171 = vmatpush2.msra.mxu0 %v1910
    %2172 = vmatprep.subr.mxu0 0.0
    %2173 = vmatpush2.msra.mxu0 %v1909
    %2174 = vmatprep.subr.mxu0 0.0
    %2175 = vmatpush2.msra.mxu0 %v1908
    %2176 = vmatprep.subr.mxu0 0.0
    %2177 = vmatpush2.msra.mxu0 %v1907
    %2178 = vmatprep.subr.mxu0 0.0
    %2179 = vmatpush2.msra.mxu0 %v1906
    %2180 = vmatprep.subr.mxu0 0.0
    %2181 = vmatpush2.msra.mxu0 %v1905
    %2182 = vmatprep.subr.mxu0 0.0
    %2183 = vmatpush2.msra.mxu0 %v1904
    %2184 = vmatprep.subr.mxu0 0.0
    %2185 = vmatpush2.msra.mxu0 %v1903
    %2186 = vmatprep.subr.mxu0 0.0
    %2187 = vmatpush2.msra.mxu0 %v1902
    %2188 = vmatprep.subr.mxu0 0.0
    %2189 = vmatpush2.msra.mxu0 %v1901
    %2190 = vmatprep.mubr.f32.mxu0 %v1794
    %2191 = vmatmul.mubr.f32.gmra.mxu0 %v1793
    %v2192 = vpop.f32.mrf.mxu0
    %v2193 = vadd.f32 %v2108, %v2192
    %v2194 = vpop.f32.mrf.mxu0
    %2195 = vmatprep.mubr.f32.mxu0 %v1802
    %2196 = vmatmul.mubr.f32.gmra.mxu0 %v1801
    %v2197 = vpop.f32.mrf.mxu0
    %v2198 = vadd.f32 %v2113, %v2197
    %v2199 = vpop.f32.mrf.mxu0
    %2200 = vmatprep.mubr.f32.mxu0 %v1810
    %2201 = vmatmul.mubr.f32.gmra.mxu0 %v1809
    %v2202 = vpop.f32.mrf.mxu0
    %v2203 = vadd.f32 %v2118, %v2202
    %v2204 = vpop.f32.mrf.mxu0
    %2205 = vmatprep.mubr.f32.mxu0 %v1818
    %2206 = vmatmul.mubr.f32.gmra.mxu0 %v1817
    %v2207 = vpop.f32.mrf.mxu0
    %v2208 = vadd.f32 %v2123, %v2207
    %v2209 = vpop.f32.mrf.mxu0
    %2210 = vdwg.mxu0
    %2211 = vmatprep.subr.mxu0 0.0
    %2212 = vmatpush1.msra.mxu0 %v1932
    %2213 = vmatprep.subr.mxu0 0.0
    %2214 = vmatpush1.msra.mxu0 %v1931
    %2215 = vmatprep.subr.mxu0 0.0
    %2216 = vmatpush1.msra.mxu0 %v1930
    %2217 = vmatprep.subr.mxu0 0.0
    %2218 = vmatpush1.msra.mxu0 %v1929
    %2219 = vmatprep.subr.mxu0 0.0
    %2220 = vmatpush1.msra.mxu0 %v1928
    %2221 = vmatprep.subr.mxu0 0.0
    %2222 = vmatpush1.msra.mxu0 %v1927
    %2223 = vmatprep.subr.mxu0 0.0
    %2224 = vmatpush1.msra.mxu0 %v1926
    %2225 = vmatprep.subr.mxu0 0.0
    %2226 = vmatpush1.msra.mxu0 %v1925
    %2227 = vmatprep.subr.mxu0 0.0
    %2228 = vmatpush1.msra.mxu0 %v1924
    %2229 = vmatprep.subr.mxu0 0.0
    %2230 = vmatpush1.msra.mxu0 %v1923
    %2231 = vmatprep.subr.mxu0 0.0
    %2232 = vmatpush1.msra.mxu0 %v1922
    %2233 = vmatprep.subr.mxu0 0.0
    %2234 = vmatpush1.msra.mxu0 %v1921
    %2235 = vmatprep.subr.mxu0 0.0
    %2236 = vmatpush1.msra.mxu0 %v1920
    %2237 = vmatprep.subr.mxu0 0.0
    %2238 = vmatpush1.msra.mxu0 %v1919
    %2239 = vmatprep.subr.mxu0 0.0
    %2240 = vmatpush1.msra.mxu0 %v1918
    %2241 = vmatprep.subr.mxu0 0.0
    %2242 = vmatpush1.msra.mxu0 %v1917
    %2243 = vmatprep.subr.mxu0 0.0
    %2244 = vmatpush2.msra.mxu0 %v1948
    %2245 = vmatprep.subr.mxu0 0.0
    %2246 = vmatpush2.msra.mxu0 %v1947
    %2247 = vmatprep.subr.mxu0 0.0
    %2248 = vmatpush2.msra.mxu0 %v1946
    %2249 = vmatprep.subr.mxu0 0.0
    %2250 = vmatpush2.msra.mxu0 %v1945
    %2251 = vmatprep.subr.mxu0 0.0
    %2252 = vmatpush2.msra.mxu0 %v1944
    %2253 = vmatprep.subr.mxu0 0.0
    %2254 = vmatpush2.msra.mxu0 %v1943
    %2255 = vmatprep.subr.mxu0 0.0
    %2256 = vmatpush2.msra.mxu0 %v1942
    %2257 = vmatprep.subr.mxu0 0.0
    %2258 = vmatpush2.msra.mxu0 %v1941
    %2259 = vmatprep.subr.mxu0 0.0
    %2260 = vmatpush2.msra.mxu0 %v1940
    %2261 = vmatprep.subr.mxu0 0.0
    %2262 = vmatpush2.msra.mxu0 %v1939
    %2263 = vmatprep.subr.mxu0 0.0
    %2264 = vmatpush2.msra.mxu0 %v1938
    %2265 = vmatprep.subr.mxu0 0.0
    %2266 = vmatpush2.msra.mxu0 %v1937
    %2267 = vmatprep.subr.mxu0 0.0
    %2268 = vmatpush2.msra.mxu0 %v1936
    %2269 = vmatprep.subr.mxu0 0.0
    %2270 = vmatpush2.msra.mxu0 %v1935
    %2271 = vmatprep.subr.mxu0 0.0
    %2272 = vmatpush2.msra.mxu0 %v1934
    %2273 = vmatprep.subr.mxu0 0.0
    %2274 = vmatpush2.msra.mxu0 %v1933
    %2275 = vmatprep.mubr.f32.mxu0 %v1796
    %2276 = vmatmul.mubr.f32.gmra.mxu0 %v1795
    %v2277 = vpop.f32.mrf.mxu0
    %v2278 = vadd.f32 %v2193, %v2277
    %v2279 = vpop.f32.mrf.mxu0
    %2280 = vmatprep.mubr.f32.mxu0 %v1804
    %2281 = vmatmul.mubr.f32.gmra.mxu0 %v1803
    %v2282 = vpop.f32.mrf.mxu0
    %v2283 = vadd.f32 %v2198, %v2282
    %v2284 = vpop.f32.mrf.mxu0
    %2285 = vmatprep.mubr.f32.mxu0 %v1812
    %2286 = vmatmul.mubr.f32.gmra.mxu0 %v1811
    %v2287 = vpop.f32.mrf.mxu0
    %v2288 = vadd.f32 %v2203, %v2287
    %v2289 = vpop.f32.mrf.mxu0
    %2290 = vmatprep.mubr.f32.mxu0 %v1820
    %2291 = vmatmul.mubr.f32.gmra.mxu0 %v1819
    %v2292 = vpop.f32.mrf.mxu0
    %v2293 = vadd.f32 %v2208, %v2292
    %v2294 = vpop.f32.mrf.mxu0
    %2295 = vdwg.mxu0
    %v2296 = vadd.f32 %v2278, %v2283
    %v2297 = vadd.f32 %v2296, %v2288
    %v2298 = vadd.f32 %v2297, %v2293
    %v2299 = vrot.slane %v2298, 4
    %v2300 = vadd.f32 %v2298, %v2299
    %v2301 = vrot.slane %v2300, 2
    %v2302 = vadd.f32 %v2300, %v2301
    %v2303 = vrot.slane %v2302, 1
    %v2304 = vadd.f32 %v2302, %v2303
    %v2305 = vrcp.pop 32.0
    %v2306 = vmul.f32 %v2304, %v2305
    %v2307 = vsub.f32 %v2278, %v2306
    %v2308 = vsub.f32 %v2283, %v2306
    %v2309 = vsub.f32 %v2288, %v2306
    %v2310 = vsub.f32 %v2293, %v2306
    %v2311 = vmul.f32 %v2307, %v2307
    %v2312 = vmul.f32 %v2308, %v2308
    %v2313 = vmul.f32 %v2309, %v2309
    %v2314 = vmul.f32 %v2310, %v2310
    %v2315 = vadd.f32 %v2311, %v2312
    %v2316 = vadd.f32 %v2315, %v2313
    %v2317 = vadd.f32 %v2316, %v2314
    %v2318 = vrot.slane %v2317, 4
    %v2319 = vadd.f32 %v2317, %v2318
    %v2320 = vrot.slane %v2319, 2
    %v2321 = vadd.f32 %v2319, %v2320
    %v2322 = vrot.slane %v2321, 1
    %v2323 = vadd.f32 %v2321, %v2322
    %v2324 = vmul.f32 %v2323, %v2305
    %v2325 = vadd.f32 %v2324, 1e-05
    %v2326 = vrsqrt.pop %v2325
    %v2327 = vmul.f32 %v2307, %v2326
    %v2328 = vmul.f32 %v2308, %v2326
    %v2329 = vmul.f32 %v2309, %v2326
    %v2330 = vmul.f32 %v2310, %v2326
    %v2331 = vld [vmem:[%s10] sm:$0x1]
    %v2333 = vlaneseq
    %v2334 = vshrl.u32 %v2333, 7
    %v2335 = vsub.s32 0, %v2334
    %v2336 = vrot.slane %v2331, %v2335
    %v2338 = vmul.f32 %v2327, %v2336
    %v2339 = vmul.f32 %v2328, %v2336
    %v2340 = vmul.f32 %v2329, %v2336
    %v2341 = vmul.f32 %v2330, %v2336
    %v2342 = vld [vmem:[%s11] sm:$0x1]
    %v2344 = vlaneseq
    %v2345 = vshrl.u32 %v2344, 7
    %v2346 = vsub.s32 0, %v2345
    %v2347 = vrot.slane %v2342, %v2346
    %v2349 = vadd.f32 %v2338, %v2347
    %v2350 = vadd.f32 %v2339, %v2347
    %v2351 = vadd.f32 %v2340, %v2347
    %v2352 = vadd.f32 %v2341, %v2347
    %v2353 = vmax.f32 %v2349, 0.0
    %v2354 = vmax.f32 %v2350, 0.0
    %v2355 = vmax.f32 %v2351, 0.0
    %v2356 = vmax.f32 %v2352, 0.0
    %v2357 = vpack.c.bf16 %v2354, %v2353
    %v2358 = vpack.c.bf16 %v2356, %v2355
    %v2361 = vunpack.c.l.b16 %v2357
    %v2362 = vunpack.c.h.b16 %v2357
    %v2363 = vunpack.c.l.b16 %v2358
    %v2364 = vunpack.c.h.b16 %v2358
    %v2365 = vpack.c.b16 %v2361, %v2361
    %v2366 = vpack.c.b16 %v2362, %v2362
    %v2367 = vpack.c.b16 %v2363, %v2363
    %v2368 = vpack.c.b16 %v2364, %v2364
    %2373 = vst [vmem:[#allocation19] sm:$0xf] %v2365
    %2374 = vst [vmem:[#allocation19 + $0x4] sm:$0xf] %v2366
    %2375 = vst [vmem:[#allocation19 + $0x8] sm:$0xf] %v2367
    %2376 = vst [vmem:[#allocation19 + $0xc] sm:$0xf] %v2368
    // Predicated region
    $region86: #{tpu_custom_call.1} parent=1 // pred_check
      _
    $region87: #{tpu_custom_call.1} parent=1 // pred_check_branch
      %2378 = sbr.rel (0) target = $region89
    $region88: #{tpu_custom_call.1} parent=1 // pred_region
      %s2380 = ssub.s32 256, 256
      %2381 = vsyncadd [#allocation5], %s2380
      %s2382 = sshll.u32 [#allocation19], 4
      %s2383 = int_to_ptr.vmem [resolvable:$true] %s2382
      %2388 = dma.vmem_to_hbm [thread:$0]  %s2383, 256, %s12, [#allocation5], 64, 64, 4
    $region89: #{tpu_custom_call.1} parent=1 // pred_fallthru
      _
    // Predicated region
    $region90: #{tpu_custom_call.1} parent=1 // pred_check
      _
    $region91: #{tpu_custom_call.1} parent=1 // pred_check_branch
      %2390 = sbr.rel (0) target = $region93
    $region92: #{tpu_custom_call.1} parent=1 // pred_region
      %2391 = dma.done [#allocation5], 256
    $region93: #{tpu_custom_call.1} parent=1 // pred_fallthru
      _
    %2392 = vsyncpa [#allocation4], 1
    %2393 = vsyncpa [#allocation17], 1
    %2394 = vsyncpa [#allocation5], 1
    %2395 = vsyncpa [#allocation6], 1
    %2396 = vsyncpa [#allocation7], 1
    %2397 = vsyncpa [#allocation10], 1
    %2398 = vsyncpa [#allocation13], 1

</llo_original>
